<compile_context>
chip_gen: v5e
topology: v5e:2x2
jax: 0.10.0
libtpu: 0.0.40
codegen_flags: <defaults>
</compile_context>

<pallas_src>
import functools
import string

import jax
import jax.numpy as jnp
from jax.experimental import pallas as pl
from jax.experimental.pallas import tpu as pltpu


def lstm_kernel(x_ref, h0_ref, c0_ref,
                wih0_ref, whh0_ref, b0_ref,
                w1_ref, b1_ref,
                wout_ref, bout_ref,
                out_ref, hT_ref, cT_ref,
                gx_ref, h1s_ref,
                *, hidden_size):
    H = hidden_size
    T = x_ref.shape[0]

    # Hoisted: input-side gate pre-activations for layer 0, all T timesteps in
    # one batched matmul (uses T MXU rows instead of 1, off the serial path).
    gx_ref[...] = (jnp.dot(x_ref[...], wih0_ref[...],
                           preferred_element_type=jnp.float32) + b0_ref[...])

    whh0 = whh0_ref[...]
    w1 = w1_ref[...]
    b1 = b1_ref[...]

    def gates_to_hc(gates, c_prev):
        # PyTorch gate order: i, f, g, o
        i_g = jax.nn.sigmoid(gates[:, 0 * H:1 * H])
        f_g = jax.nn.sigmoid(gates[:, 1 * H:2 * H])
        g_g = jnp.tanh(gates[:, 2 * H:3 * H])
        o_g = jax.nn.sigmoid(gates[:, 3 * H:4 * H])
        c_new = f_g * c_prev + i_g * g_g
        h_new = o_g * jnp.tanh(c_new)
        return h_new, c_new

    def step(t, carry):
        h0p, c0p, h1p, c1p = carry
        # layer 0: only the recurrent matmul remains inside the loop.
        g0 = gx_ref[pl.ds(t, 1), :] + jnp.dot(
            h0p, whh0, preferred_element_type=jnp.float32)
        h0n, c0n = gates_to_hc(g0, c0p)
        # layer 1: single fused matmul over the concatenated [h0_new, h1_prev].
        g1 = jnp.dot(jnp.concatenate([h0n, h1p], axis=1), w1,
                     preferred_element_type=jnp.float32) + b1
        h1n, c1n = gates_to_hc(g1, c1p)
        h1s_ref[pl.ds(t, 1), :] = h1n
        return (h0n, c0n, h1n, c1n)

    init = (h0_ref[0:1, :], c0_ref[0:1, :], h0_ref[1:2, :], c0_ref[1:2, :])
    h0f, c0f, h1f, c1f = jax.lax.fori_loop(0, T, step, init, unroll=True)

    # Final states written once (state lived in vregs during the recurrence).
    hT_ref[0:1, :] = h0f
    cT_ref[0:1, :] = c0f
    hT_ref[1:2, :] = h1f
    cT_ref[1:2, :] = c1f

    # Deferred output projection + log-softmax, batched over all T rows.
    # Temperature is already folded into wout/bout; padded logit columns carry
    # a huge negative bias so they contribute 0 to the softmax denominator.
    # TODO(synk): nn.Dropout(0.1) omitted — eval-mode identity (rnn.eval() in sampling).
    logits = (jnp.dot(h1s_ref[...], wout_ref[...],
                      preferred_element_type=jnp.float32) + bout_ref[...])
    z = logits - jnp.max(logits, axis=-1, keepdims=True)
    out_ref[...] = z - jnp.log(jnp.sum(jnp.exp(z), axis=-1, keepdims=True))


def custom_lstm_forward(x, h0, c0, params, *, temperature, sample=True):
    """Runs the CustomLSTM forward pass for a (T, input_size) sequence, batch=1."""
    T, _ = x.shape
    L, H = h0.shape
    O = params["w_out"].shape[1]
    O_pad = ((O + 127) // 128) * 128          # lane-dense output slab

    # Fuse layer-1 weights so the in-loop layer-1 cell needs one matmul.
    w1 = jnp.concatenate([params["w_ih1"], params["w_hh1"]], axis=0)   # (2H, 4H)

    # Fold temperature into the projection; pad output dim to 128 lanes.
    inv_t = (1.0 / float(temperature)) if sample else 1.0
    w_out = params["w_out"] * inv_t
    b_out = params["b_out"] * inv_t
    if O_pad != O:
        w_out = jnp.pad(w_out, ((0, 0), (0, O_pad - O)))
        b_out = jnp.pad(b_out, ((0, 0), (0, O_pad - O)), constant_values=-1e30)

    kernel = functools.partial(lstm_kernel, hidden_size=H)
    vmem = pl.BlockSpec(memory_space=pltpu.MemorySpace.VMEM)

    out_shapes = (
        jax.ShapeDtypeStruct((T, O_pad), jnp.float32),   # log-softmax (padded)
        jax.ShapeDtypeStruct((L, H), jnp.float32),       # final h
        jax.ShapeDtypeStruct((L, H), jnp.float32),       # final c
    )

    out_pad, hT, cT = pl.pallas_call(
        kernel,
        out_shape=out_shapes,
        in_specs=[vmem] * 10,
        out_specs=(vmem, vmem, vmem),
        scratch_shapes=[
            pltpu.VMEM((T, 4 * H), jnp.float32),   # precomputed layer-0 input gates
            pltpu.VMEM((T, H), jnp.float32),       # layer-1 hidden states
        ],
    )(x, h0, c0,
      params["w_ih0"], params["w_hh0"], params["b0"],
      w1, params["b1"],
      w_out, b_out)

    return out_pad[:, :O], hT, cT


# ------------------------ pure-JAX reference (for checking) ------------------------
def reference_forward(x, h0, c0, params, *, temperature, sample=True):
    T = x.shape[0]
    L, H = h0.shape
    h = [h0[l:l + 1, :] for l in range(L)]
    c = [c0[l:l + 1, :] for l in range(L)]
    outs = []
    for t in range(T):
        inp = x[t:t + 1, :]
        for l, (wih, whh, b) in enumerate([
            (params["w_ih0"], params["w_hh0"], params["b0"]),
            (params["w_ih1"], params["w_hh1"], params["b1"]),
        ]):
            gates = inp @ wih + h[l] @ whh + b
            i_g = jax.nn.sigmoid(gates[:, 0 * H:1 * H])
            f_g = jax.nn.sigmoid(gates[:, 1 * H:2 * H])
            g_g = jnp.tanh(gates[:, 2 * H:3 * H])
            o_g = jax.nn.sigmoid(gates[:, 3 * H:4 * H])
            c[l] = f_g * c[l] + i_g * g_g
            h[l] = o_g * jnp.tanh(c[l])
            inp = h[l]
        logits = inp @ params["w_out"] + params["b_out"]
        if sample:
            logits = logits / temperature
        outs.append(jax.nn.log_softmax(logits, axis=-1))
    return (jnp.concatenate(outs, axis=0),
            jnp.concatenate(h, axis=0),
            jnp.concatenate(c, axis=0))


# --------------------------------- parameter init ----------------------------------
def init_params(key, input_size, hidden_size, output_size):
    H = hidden_size
    k = 1.0 / jnp.sqrt(jnp.float32(H))
    ks = jax.random.split(key, 10)

    def u(kk, shape):
        return jax.random.uniform(kk, shape, jnp.float32, -k, k)

    # Stored transposed vs. PyTorch ((4H, in) -> (in, 4H)); biases b_ih + b_hh folded.
    return {
        "w_ih0": u(ks[0], (input_size, 4 * H)),
        "w_hh0": u(ks[1], (H, 4 * H)),
        "b0":    u(ks[2], (1, 4 * H)) + u(ks[3], (1, 4 * H)),
        "w_ih1": u(ks[4], (H, 4 * H)),
        "w_hh1": u(ks[5], (H, 4 * H)),
        "b1":    u(ks[6], (1, 4 * H)) + u(ks[7], (1, 4 * H)),
        "w_out": u(ks[8], (H, output_size)),
        "b_out": u(ks[9], (1, output_size)),
    }


if __name__ == "__main__":
    all_letters = string.ascii_letters + "0123456789 .,:!?'[]()/+-="
    n_letters = len(all_letters) + 1          # 78, as in the PyTorch module
    hidden_size = 128                          # small (module uses 200); lane-aligned
    n_layers = 2
    seq_len = 8
    temperature = 0.4

    key = jax.random.PRNGKey(0)
    kx, kp = jax.random.split(key)

    # One-hot input like inputTensor(): (T, 1, n_letters) with batch dim squeezed.
    idx = jax.random.randint(kx, (seq_len,), 0, n_letters)
    x = jax.nn.one_hot(idx, n_letters, dtype=jnp.float32)       # (T, n_letters)

    # initHidden(): zeros (n_layers, 1, hidden) -> squeeze batch -> (n_layers, hidden)
    h0 = jnp.zeros((n_layers, hidden_size), jnp.float32)
    c0 = jnp.zeros((n_layers, hidden_size), jnp.float32)

    params = init_params(kp, n_letters, hidden_size, n_letters)

    out, hT, cT = custom_lstm_forward(x, h0, c0, params,
                                      temperature=temperature, sample=True)
    jax.block_until_ready((out, hT, cT))

    ref_out, ref_h, ref_c = reference_forward(x, h0, c0, params,
                                              temperature=temperature, sample=True)
    assert jnp.allclose(out, ref_out, atol=2e-3, rtol=2e-3)
    assert jnp.allclose(hT, ref_h, atol=2e-3, rtol=2e-3)
    assert jnp.allclose(cT, ref_c, atol=2e-3, rtol=2e-3)

    print("KERNEL_OK")
</pallas_src>

<mosaic_0001>
module attributes {stable_mosaic.version = 11 : i64} {
  func.func @lstm_kernel(%arg0: memref<8x78xf32, #tpu.memory_space<vmem>>, %arg1: memref<2x128xf32, #tpu.memory_space<vmem>>, %arg2: memref<2x128xf32, #tpu.memory_space<vmem>>, %arg3: memref<78x512xf32, #tpu.memory_space<vmem>>, %arg4: memref<128x512xf32, #tpu.memory_space<vmem>>, %arg5: memref<1x512xf32, #tpu.memory_space<vmem>>, %arg6: memref<256x512xf32, #tpu.memory_space<vmem>>, %arg7: memref<1x512xf32, #tpu.memory_space<vmem>>, %arg8: memref<128x128xf32, #tpu.memory_space<vmem>>, %arg9: memref<1x128xf32, #tpu.memory_space<vmem>>, %arg10: memref<8x128xf32, #tpu.memory_space<vmem>>, %arg11: memref<2x128xf32, #tpu.memory_space<vmem>>, %arg12: memref<2x128xf32, #tpu.memory_space<vmem>>, %arg13: memref<8x512xf32, #tpu.memory_space<vmem>>, %arg14: memref<8x128xf32, #tpu.memory_space<vmem>>) attributes {dimension_semantics = [], scalar_prefetch = 0 : i64, scratch_operands = 2 : i64, tpu.core_type = #tpu.core_type<tc>} {
    %c0 = arith.constant 0 : index
    %c0_0 = arith.constant 0 : index
    %0 = vector.load %arg0[%c0, %c0_0] : memref<8x78xf32, #tpu.memory_space<vmem>>, vector<8x78xf32>
    %c0_1 = arith.constant 0 : index
    %c0_2 = arith.constant 0 : index
    %1 = vector.load %arg3[%c0_1, %c0_2] : memref<78x512xf32, #tpu.memory_space<vmem>>, vector<78x512xf32>
    %cst = arith.constant dense<0.000000e+00> : vector<8x512xf32>
    %2 = tpu.matmul %0, %1, %cst {dimension_numbers = #tpu.dot_dimension_numbers<[1], [0], [0], [1], [0, 0, 1, 1], [], []>} : vector<8x78xf32>, vector<78x512xf32>, vector<8x512xf32> -> vector<8x512xf32>
    %c0_3 = arith.constant 0 : index
    %c0_4 = arith.constant 0 : index
    %3 = vector.load %arg5[%c0_3, %c0_4] : memref<1x512xf32, #tpu.memory_space<vmem>>, vector<1x512xf32>
    %4 = vector.broadcast %3 : vector<1x512xf32> to vector<8x512xf32>
    %5 = arith.addf %2, %4 : vector<8x512xf32>
    %c0_5 = arith.constant 0 : index
    %c0_6 = arith.constant 0 : index
    %6 = vector.load %arg13[%c0_5, %c0_6] : memref<8x512xf32, #tpu.memory_space<vmem>>, vector<8x512xf32>
    tpu.vector_store %arg13[%c0_5, %c0_6], %5 {strides = array<i32>} : memref<8x512xf32, #tpu.memory_space<vmem>>, vector<8x512xf32>,
    %c0_7 = arith.constant 0 : index
    %c0_8 = arith.constant 0 : index
    %7 = vector.load %arg4[%c0_7, %c0_8] : memref<128x512xf32, #tpu.memory_space<vmem>>, vector<128x512xf32>
    %c0_9 = arith.constant 0 : index
    %c0_10 = arith.constant 0 : index
    %8 = vector.load %arg6[%c0_9, %c0_10] : memref<256x512xf32, #tpu.memory_space<vmem>>, vector<256x512xf32>
    %c0_11 = arith.constant 0 : index
    %c0_12 = arith.constant 0 : index
    %9 = vector.load %arg7[%c0_11, %c0_12] : memref<1x512xf32, #tpu.memory_space<vmem>>, vector<1x512xf32>
    %c0_13 = arith.constant 0 : index
    %c0_14 = arith.constant 0 : index
    %10 = vector.load %arg1[%c0_13, %c0_14] : memref<2x128xf32, #tpu.memory_space<vmem>>, vector<1x128xf32>
    %c0_15 = arith.constant 0 : index
    %c0_16 = arith.constant 0 : index
    %11 = vector.load %arg2[%c0_15, %c0_16] : memref<2x128xf32, #tpu.memory_space<vmem>>, vector<1x128xf32>
    %c1 = arith.constant 1 : index
    %c0_17 = arith.constant 0 : index
    %12 = vector.load %arg1[%c1, %c0_17] : memref<2x128xf32, #tpu.memory_space<vmem>>, vector<1x128xf32>
    %c1_18 = arith.constant 1 : index
    %c0_19 = arith.constant 0 : index
    %13 = vector.load %arg2[%c1_18, %c0_19] : memref<2x128xf32, #tpu.memory_space<vmem>>, vector<1x128xf32>
    %c0_i32 = arith.constant 0 : i32
    %14 = arith.index_cast %c0_i32 : i32 to index
    %c0_20 = arith.constant 0 : index
    %15 = vector.load %arg13[%14, %c0_20] : memref<8x512xf32, #tpu.memory_space<vmem>>, vector<1x512xf32>
    %cst_21 = arith.constant dense<0.000000e+00> : vector<1x512xf32>
    %16 = tpu.matmul %10, %7, %cst_21 {dimension_numbers = #tpu.dot_dimension_numbers<[1], [0], [0], [1], [0, 0, 1, 1], [], []>} : vector<1x128xf32>, vector<128x512xf32>, vector<1x512xf32> -> vector<1x512xf32>
    %17 = arith.addf %15, %16 : vector<1x512xf32>
    %18 = vector.extract_strided_slice %17 {offsets = [0, 0], sizes = [1, 128], strides = [1, 1]} : vector<1x512xf32> to vector<1x128xf32>
    %19 = arith.negf %18 : vector<1x128xf32>
    %20 = math.exp %19 : vector<1x128xf32>
    %cst_22 = arith.constant 1.000000e+00 : f32
    %21 = vector.broadcast %cst_22 : f32 to vector<1x128xf32>
    %22 = arith.addf %21, %20 : vector<1x128xf32>
    %23 = arith.divf %21, %22 : vector<1x128xf32>
    %24 = vector.extract_strided_slice %17 {offsets = [0, 128], sizes = [1, 128], strides = [1, 1]} : vector<1x512xf32> to vector<1x128xf32>
    %25 = arith.negf %24 : vector<1x128xf32>
    %26 = math.exp %25 : vector<1x128xf32>
    %cst_23 = arith.constant 1.000000e+00 : f32
    %27 = vector.broadcast %cst_23 : f32 to vector<1x128xf32>
    %28 = arith.addf %27, %26 : vector<1x128xf32>
    %29 = arith.divf %27, %28 : vector<1x128xf32>
    %30 = vector.extract_strided_slice %17 {offsets = [0, 256], sizes = [1, 128], strides = [1, 1]} : vector<1x512xf32> to vector<1x128xf32>
    %31 = math.tanh %30 : vector<1x128xf32>
    %32 = vector.extract_strided_slice %17 {offsets = [0, 384], sizes = [1, 128], strides = [1, 1]} : vector<1x512xf32> to vector<1x128xf32>
    %33 = arith.negf %32 : vector<1x128xf32>
    %34 = math.exp %33 : vector<1x128xf32>
    %cst_24 = arith.constant 1.000000e+00 : f32
    %35 = vector.broadcast %cst_24 : f32 to vector<1x128xf32>
    %36 = arith.addf %35, %34 : vector<1x128xf32>
    %37 = arith.divf %35, %36 : vector<1x128xf32>
    %38 = arith.mulf %29, %11 : vector<1x128xf32>
    %39 = arith.mulf %23, %31 : vector<1x128xf32>
    %40 = arith.addf %38, %39 : vector<1x128xf32>
    %41 = math.tanh %40 : vector<1x128xf32>
    %42 = arith.mulf %37, %41 : vector<1x128xf32>
    %43 = tpu.concatenate %42, %12 in 1 : vector<1x128xf32>, vector<1x128xf32> -> vector<1x256xf32>
    %cst_25 = arith.constant dense<0.000000e+00> : vector<1x512xf32>
    %44 = tpu.matmul %43, %8, %cst_25 {dimension_numbers = #tpu.dot_dimension_numbers<[1], [0], [0], [1], [0, 0, 1, 1], [], []>} : vector<1x256xf32>, vector<256x512xf32>, vector<1x512xf32> -> vector<1x512xf32>
    %45 = arith.addf %44, %9 : vector<1x512xf32>
    %46 = vector.extract_strided_slice %45 {offsets = [0, 0], sizes = [1, 128], strides = [1, 1]} : vector<1x512xf32> to vector<1x128xf32>
    %47 = arith.negf %46 : vector<1x128xf32>
    %48 = math.exp %47 : vector<1x128xf32>
    %cst_26 = arith.constant 1.000000e+00 : f32
    %49 = vector.broadcast %cst_26 : f32 to vector<1x128xf32>
    %50 = arith.addf %49, %48 : vector<1x128xf32>
    %51 = arith.divf %49, %50 : vector<1x128xf32>
    %52 = vector.extract_strided_slice %45 {offsets = [0, 128], sizes = [1, 128], strides = [1, 1]} : vector<1x512xf32> to vector<1x128xf32>
    %53 = arith.negf %52 : vector<1x128xf32>
    %54 = math.exp %53 : vector<1x128xf32>
    %cst_27 = arith.constant 1.000000e+00 : f32
    %55 = vector.broadcast %cst_27 : f32 to vector<1x128xf32>
    %56 = arith.addf %55, %54 : vector<1x128xf32>
    %57 = arith.divf %55, %56 : vector<1x128xf32>
    %58 = vector.extract_strided_slice %45 {offsets = [0, 256], sizes = [1, 128], strides = [1, 1]} : vector<1x512xf32> to vector<1x128xf32>
    %59 = math.tanh %58 : vector<1x128xf32>
    %60 = vector.extract_strided_slice %45 {offsets = [0, 384], sizes = [1, 128], strides = [1, 1]} : vector<1x512xf32> to vector<1x128xf32>
    %61 = arith.negf %60 : vector<1x128xf32>
    %62 = math.exp %61 : vector<1x128xf32>
    %cst_28 = arith.constant 1.000000e+00 : f32
    %63 = vector.broadcast %cst_28 : f32 to vector<1x128xf32>
    %64 = arith.addf %63, %62 : vector<1x128xf32>
    %65 = arith.divf %63, %64 : vector<1x128xf32>
    %66 = arith.mulf %57, %13 : vector<1x128xf32>
    %67 = arith.mulf %51, %59 : vector<1x128xf32>
    %68 = arith.addf %66, %67 : vector<1x128xf32>
    %69 = math.tanh %68 : vector<1x128xf32>
    %70 = arith.mulf %65, %69 : vector<1x128xf32>
    %71 = arith.index_cast %c0_i32 : i32 to index
    %c0_29 = arith.constant 0 : index
    %72 = vector.load %arg14[%71, %c0_29] : memref<8x128xf32, #tpu.memory_space<vmem>>, vector<1x128xf32>
    tpu.vector_store %arg14[%71, %c0_29], %70 {strides = array<i32>} : memref<8x128xf32, #tpu.memory_space<vmem>>, vector<1x128xf32>,
    %c1_i32 = arith.constant 1 : i32
    %73 = arith.index_cast %c1_i32 : i32 to index
    %c0_30 = arith.constant 0 : index
    %74 = vector.load %arg13[%73, %c0_30] : memref<8x512xf32, #tpu.memory_space<vmem>>, vector<1x512xf32>
    %cst_31 = arith.constant dense<0.000000e+00> : vector<1x512xf32>
    %75 = tpu.matmul %42, %7, %cst_31 {dimension_numbers = #tpu.dot_dimension_numbers<[1], [0], [0], [1], [0, 0, 1, 1], [], []>} : vector<1x128xf32>, vector<128x512xf32>, vector<1x512xf32> -> vector<1x512xf32>
    %76 = arith.addf %74, %75 : vector<1x512xf32>
    %77 = vector.extract_strided_slice %76 {offsets = [0, 0], sizes = [1, 128], strides = [1, 1]} : vector<1x512xf32> to vector<1x128xf32>
    %78 = arith.negf %77 : vector<1x128xf32>
    %79 = math.exp %78 : vector<1x128xf32>
    %cst_32 = arith.constant 1.000000e+00 : f32
    %80 = vector.broadcast %cst_32 : f32 to vector<1x128xf32>
    %81 = arith.addf %80, %79 : vector<1x128xf32>
    %82 = arith.divf %80, %81 : vector<1x128xf32>
    %83 = vector.extract_strided_slice %76 {offsets = [0, 128], sizes = [1, 128], strides = [1, 1]} : vector<1x512xf32> to vector<1x128xf32>
    %84 = arith.negf %83 : vector<1x128xf32>
    %85 = math.exp %84 : vector<1x128xf32>
    %cst_33 = arith.constant 1.000000e+00 : f32
    %86 = vector.broadcast %cst_33 : f32 to vector<1x128xf32>
    %87 = arith.addf %86, %85 : vector<1x128xf32>
    %88 = arith.divf %86, %87 : vector<1x128xf32>
    %89 = vector.extract_strided_slice %76 {offsets = [0, 256], sizes = [1, 128], strides = [1, 1]} : vector<1x512xf32> to vector<1x128xf32>
    %90 = math.tanh %89 : vector<1x128xf32>
    %91 = vector.extract_strided_slice %76 {offsets = [0, 384], sizes = [1, 128], strides = [1, 1]} : vector<1x512xf32> to vector<1x128xf32>
    %92 = arith.negf %91 : vector<1x128xf32>
    %93 = math.exp %92 : vector<1x128xf32>
    %cst_34 = arith.constant 1.000000e+00 : f32
    %94 = vector.broadcast %cst_34 : f32 to vector<1x128xf32>
    %95 = arith.addf %94, %93 : vector<1x128xf32>
    %96 = arith.divf %94, %95 : vector<1x128xf32>
    %97 = arith.mulf %88, %40 : vector<1x128xf32>
    %98 = arith.mulf %82, %90 : vector<1x128xf32>
    %99 = arith.addf %97, %98 : vector<1x128xf32>
    %100 = math.tanh %99 : vector<1x128xf32>
    %101 = arith.mulf %96, %100 : vector<1x128xf32>
    %102 = tpu.concatenate %101, %70 in 1 : vector<1x128xf32>, vector<1x128xf32> -> vector<1x256xf32>
    %cst_35 = arith.constant dense<0.000000e+00> : vector<1x512xf32>
    %103 = tpu.matmul %102, %8, %cst_35 {dimension_numbers = #tpu.dot_dimension_numbers<[1], [0], [0], [1], [0, 0, 1, 1], [], []>} : vector<1x256xf32>, vector<256x512xf32>, vector<1x512xf32> -> vector<1x512xf32>
    %104 = arith.addf %103, %9 : vector<1x512xf32>
    %105 = vector.extract_strided_slice %104 {offsets = [0, 0], sizes = [1, 128], strides = [1, 1]} : vector<1x512xf32> to vector<1x128xf32>
    %106 = arith.negf %105 : vector<1x128xf32>
    %107 = math.exp %106 : vector<1x128xf32>
    %cst_36 = arith.constant 1.000000e+00 : f32
    %108 = vector.broadcast %cst_36 : f32 to vector<1x128xf32>
    %109 = arith.addf %108, %107 : vector<1x128xf32>
    %110 = arith.divf %108, %109 : vector<1x128xf32>
    %111 = vector.extract_strided_slice %104 {offsets = [0, 128], sizes = [1, 128], strides = [1, 1]} : vector<1x512xf32> to vector<1x128xf32>
    %112 = arith.negf %111 : vector<1x128xf32>
    %113 = math.exp %112 : vector<1x128xf32>
    %cst_37 = arith.constant 1.000000e+00 : f32
    %114 = vector.broadcast %cst_37 : f32 to vector<1x128xf32>
    %115 = arith.addf %114, %113 : vector<1x128xf32>
    %116 = arith.divf %114, %115 : vector<1x128xf32>
    %117 = vector.extract_strided_slice %104 {offsets = [0, 256], sizes = [1, 128], strides = [1, 1]} : vector<1x512xf32> to vector<1x128xf32>
    %118 = math.tanh %117 : vector<1x128xf32>
    %119 = vector.extract_strided_slice %104 {offsets = [0, 384], sizes = [1, 128], strides = [1, 1]} : vector<1x512xf32> to vector<1x128xf32>
    %120 = arith.negf %119 : vector<1x128xf32>
    %121 = math.exp %120 : vector<1x128xf32>
    %cst_38 = arith.constant 1.000000e+00 : f32
    %122 = vector.broadcast %cst_38 : f32 to vector<1x128xf32>
    %123 = arith.addf %122, %121 : vector<1x128xf32>
    %124 = arith.divf %122, %123 : vector<1x128xf32>
    %125 = arith.mulf %116, %68 : vector<1x128xf32>
    %126 = arith.mulf %110, %118 : vector<1x128xf32>
    %127 = arith.addf %125, %126 : vector<1x128xf32>
    %128 = math.tanh %127 : vector<1x128xf32>
    %129 = arith.mulf %124, %128 : vector<1x128xf32>
    %130 = arith.index_cast %c1_i32 : i32 to index
    %c0_39 = arith.constant 0 : index
    %131 = vector.load %arg14[%130, %c0_39] : memref<8x128xf32, #tpu.memory_space<vmem>>, vector<1x128xf32>
    tpu.vector_store %arg14[%130, %c0_39], %129 {strides = array<i32>} : memref<8x128xf32, #tpu.memory_space<vmem>>, vector<1x128xf32>,
    %c2_i32 = arith.constant 2 : i32
    %132 = arith.index_cast %c2_i32 : i32 to index
    %c0_40 = arith.constant 0 : index
    %133 = vector.load %arg13[%132, %c0_40] : memref<8x512xf32, #tpu.memory_space<vmem>>, vector<1x512xf32>
    %cst_41 = arith.constant dense<0.000000e+00> : vector<1x512xf32>
    %134 = tpu.matmul %101, %7, %cst_41 {dimension_numbers = #tpu.dot_dimension_numbers<[1], [0], [0], [1], [0, 0, 1, 1], [], []>} : vector<1x128xf32>, vector<128x512xf32>, vector<1x512xf32> -> vector<1x512xf32>
    %135 = arith.addf %133, %134 : vector<1x512xf32>
    %136 = vector.extract_strided_slice %135 {offsets = [0, 0], sizes = [1, 128], strides = [1, 1]} : vector<1x512xf32> to vector<1x128xf32>
    %137 = arith.negf %136 : vector<1x128xf32>
    %138 = math.exp %137 : vector<1x128xf32>
    %cst_42 = arith.constant 1.000000e+00 : f32
    %139 = vector.broadcast %cst_42 : f32 to vector<1x128xf32>
    %140 = arith.addf %139, %138 : vector<1x128xf32>
    %141 = arith.divf %139, %140 : vector<1x128xf32>
    %142 = vector.extract_strided_slice %135 {offsets = [0, 128], sizes = [1, 128], strides = [1, 1]} : vector<1x512xf32> to vector<1x128xf32>
    %143 = arith.negf %142 : vector<1x128xf32>
    %144 = math.exp %143 : vector<1x128xf32>
    %cst_43 = arith.constant 1.000000e+00 : f32
    %145 = vector.broadcast %cst_43 : f32 to vector<1x128xf32>
    %146 = arith.addf %145, %144 : vector<1x128xf32>
    %147 = arith.divf %145, %146 : vector<1x128xf32>
    %148 = vector.extract_strided_slice %135 {offsets = [0, 256], sizes = [1, 128], strides = [1, 1]} : vector<1x512xf32> to vector<1x128xf32>
    %149 = math.tanh %148 : vector<1x128xf32>
    %150 = vector.extract_strided_slice %135 {offsets = [0, 384], sizes = [1, 128], strides = [1, 1]} : vector<1x512xf32> to vector<1x128xf32>
    %151 = arith.negf %150 : vector<1x128xf32>
    %152 = math.exp %151 : vector<1x128xf32>
    %cst_44 = arith.constant 1.000000e+00 : f32
    %153 = vector.broadcast %cst_44 : f32 to vector<1x128xf32>
    %154 = arith.addf %153, %152 : vector<1x128xf32>
    %155 = arith.divf %153, %154 : vector<1x128xf32>
    %156 = arith.mulf %147, %99 : vector<1x128xf32>
    %157 = arith.mulf %141, %149 : vector<1x128xf32>
    %158 = arith.addf %156, %157 : vector<1x128xf32>
    %159 = math.tanh %158 : vector<1x128xf32>
    %160 = arith.mulf %155, %159 : vector<1x128xf32>
    %161 = tpu.concatenate %160, %129 in 1 : vector<1x128xf32>, vector<1x128xf32> -> vector<1x256xf32>
    %cst_45 = arith.constant dense<0.000000e+00> : vector<1x512xf32>
    %162 = tpu.matmul %161, %8, %cst_45 {dimension_numbers = #tpu.dot_dimension_numbers<[1], [0], [0], [1], [0, 0, 1, 1], [], []>} : vector<1x256xf32>, vector<256x512xf32>, vector<1x512xf32> -> vector<1x512xf32>
    %163 = arith.addf %162, %9 : vector<1x512xf32>
    %164 = vector.extract_strided_slice %163 {offsets = [0, 0], sizes = [1, 128], strides = [1, 1]} : vector<1x512xf32> to vector<1x128xf32>
    %165 = arith.negf %164 : vector<1x128xf32>
    %166 = math.exp %165 : vector<1x128xf32>
    %cst_46 = arith.constant 1.000000e+00 : f32
    %167 = vector.broadcast %cst_46 : f32 to vector<1x128xf32>
    %168 = arith.addf %167, %166 : vector<1x128xf32>
    %169 = arith.divf %167, %168 : vector<1x128xf32>
    %170 = vector.extract_strided_slice %163 {offsets = [0, 128], sizes = [1, 128], strides = [1, 1]} : vector<1x512xf32> to vector<1x128xf32>
    %171 = arith.negf %170 : vector<1x128xf32>
    %172 = math.exp %171 : vector<1x128xf32>
    %cst_47 = arith.constant 1.000000e+00 : f32
    %173 = vector.broadcast %cst_47 : f32 to vector<1x128xf32>
    %174 = arith.addf %173, %172 : vector<1x128xf32>
    %175 = arith.divf %173, %174 : vector<1x128xf32>
    %176 = vector.extract_strided_slice %163 {offsets = [0, 256], sizes = [1, 128], strides = [1, 1]} : vector<1x512xf32> to vector<1x128xf32>
    %177 = math.tanh %176 : vector<1x128xf32>
    %178 = vector.extract_strided_slice %163 {offsets = [0, 384], sizes = [1, 128], strides = [1, 1]} : vector<1x512xf32> to vector<1x128xf32>
    %179 = arith.negf %178 : vector<1x128xf32>
    %180 = math.exp %179 : vector<1x128xf32>
    %cst_48 = arith.constant 1.000000e+00 : f32
    %181 = vector.broadcast %cst_48 : f32 to vector<1x128xf32>
    %182 = arith.addf %181, %180 : vector<1x128xf32>
    %183 = arith.divf %181, %182 : vector<1x128xf32>
    %184 = arith.mulf %175, %127 : vector<1x128xf32>
    %185 = arith.mulf %169, %177 : vector<1x128xf32>
    %186 = arith.addf %184, %185 : vector<1x128xf32>
    %187 = math.tanh %186 : vector<1x128xf32>
    %188 = arith.mulf %183, %187 : vector<1x128xf32>
    %189 = arith.index_cast %c2_i32 : i32 to index
    %c0_49 = arith.constant 0 : index
    %190 = vector.load %arg14[%189, %c0_49] : memref<8x128xf32, #tpu.memory_space<vmem>>, vector<1x128xf32>
    tpu.vector_store %arg14[%189, %c0_49], %188 {strides = array<i32>} : memref<8x128xf32, #tpu.memory_space<vmem>>, vector<1x128xf32>,
    %c3_i32 = arith.constant 3 : i32
    %191 = arith.index_cast %c3_i32 : i32 to index
    %c0_50 = arith.constant 0 : index
    %192 = vector.load %arg13[%191, %c0_50] : memref<8x512xf32, #tpu.memory_space<vmem>>, vector<1x512xf32>
    %cst_51 = arith.constant dense<0.000000e+00> : vector<1x512xf32>
    %193 = tpu.matmul %160, %7, %cst_51 {dimension_numbers = #tpu.dot_dimension_numbers<[1], [0], [0], [1], [0, 0, 1, 1], [], []>} : vector<1x128xf32>, vector<128x512xf32>, vector<1x512xf32> -> vector<1x512xf32>
    %194 = arith.addf %192, %193 : vector<1x512xf32>
    %195 = vector.extract_strided_slice %194 {offsets = [0, 0], sizes = [1, 128], strides = [1, 1]} : vector<1x512xf32> to vector<1x128xf32>
    %196 = arith.negf %195 : vector<1x128xf32>
    %197 = math.exp %196 : vector<1x128xf32>
    %cst_52 = arith.constant 1.000000e+00 : f32
    %198 = vector.broadcast %cst_52 : f32 to vector<1x128xf32>
    %199 = arith.addf %198, %197 : vector<1x128xf32>
    %200 = arith.divf %198, %199 : vector<1x128xf32>
    %201 = vector.extract_strided_slice %194 {offsets = [0, 128], sizes = [1, 128], strides = [1, 1]} : vector<1x512xf32> to vector<1x128xf32>
    %202 = arith.negf %201 : vector<1x128xf32>
    %203 = math.exp %202 : vector<1x128xf32>
    %cst_53 = arith.constant 1.000000e+00 : f32
    %204 = vector.broadcast %cst_53 : f32 to vector<1x128xf32>
    %205 = arith.addf %204, %203 : vector<1x128xf32>
    %206 = arith.divf %204, %205 : vector<1x128xf32>
    %207 = vector.extract_strided_slice %194 {offsets = [0, 256], sizes = [1, 128], strides = [1, 1]} : vector<1x512xf32> to vector<1x128xf32>
    %208 = math.tanh %207 : vector<1x128xf32>
    %209 = vector.extract_strided_slice %194 {offsets = [0, 384], sizes = [1, 128], strides = [1, 1]} : vector<1x512xf32> to vector<1x128xf32>
    %210 = arith.negf %209 : vector<1x128xf32>
    %211 = math.exp %210 : vector<1x128xf32>
    %cst_54 = arith.constant 1.000000e+00 : f32
    %212 = vector.broadcast %cst_54 : f32 to vector<1x128xf32>
    %213 = arith.addf %212, %211 : vector<1x128xf32>
    %214 = arith.divf %212, %213 : vector<1x128xf32>
    %215 = arith.mulf %206, %158 : vector<1x128xf32>
    %216 = arith.mulf %200, %208 : vector<1x128xf32>
    %217 = arith.addf %215, %216 : vector<1x128xf32>
    %218 = math.tanh %217 : vector<1x128xf32>
    %219 = arith.mulf %214, %218 : vector<1x128xf32>
    %220 = tpu.concatenate %219, %188 in 1 : vector<1x128xf32>, vector<1x128xf32> -> vector<1x256xf32>
    %cst_55 = arith.constant dense<0.000000e+00> : vector<1x512xf32>
    %221 = tpu.matmul %220, %8, %cst_55 {dimension_numbers = #tpu.dot_dimension_numbers<[1], [0], [0], [1], [0, 0, 1, 1], [], []>} : vector<1x256xf32>, vector<256x512xf32>, vector<1x512xf32> -> vector<1x512xf32>
    %222 = arith.addf %221, %9 : vector<1x512xf32>
    %223 = vector.extract_strided_slice %222 {offsets = [0, 0], sizes = [1, 128], strides = [1, 1]} : vector<1x512xf32> to vector<1x128xf32>
    %224 = arith.negf %223 : vector<1x128xf32>
    %225 = math.exp %224 : vector<1x128xf32>
    %cst_56 = arith.constant 1.000000e+00 : f32
    %226 = vector.broadcast %cst_56 : f32 to vector<1x128xf32>
    %227 = arith.addf %226, %225 : vector<1x128xf32>
    %228 = arith.divf %226, %227 : vector<1x128xf32>
    %229 = vector.extract_strided_slice %222 {offsets = [0, 128], sizes = [1, 128], strides = [1, 1]} : vector<1x512xf32> to vector<1x128xf32>
    %230 = arith.negf %229 : vector<1x128xf32>
    %231 = math.exp %230 : vector<1x128xf32>
    %cst_57 = arith.constant 1.000000e+00 : f32
    %232 = vector.broadcast %cst_57 : f32 to vector<1x128xf32>
    %233 = arith.addf %232, %231 : vector<1x128xf32>
    %234 = arith.divf %232, %233 : vector<1x128xf32>
    %235 = vector.extract_strided_slice %222 {offsets = [0, 256], sizes = [1, 128], strides = [1, 1]} : vector<1x512xf32> to vector<1x128xf32>
    %236 = math.tanh %235 : vector<1x128xf32>
    %237 = vector.extract_strided_slice %222 {offsets = [0, 384], sizes = [1, 128], strides = [1, 1]} : vector<1x512xf32> to vector<1x128xf32>
    %238 = arith.negf %237 : vector<1x128xf32>
    %239 = math.exp %238 : vector<1x128xf32>
    %cst_58 = arith.constant 1.000000e+00 : f32
    %240 = vector.broadcast %cst_58 : f32 to vector<1x128xf32>
    %241 = arith.addf %240, %239 : vector<1x128xf32>
    %242 = arith.divf %240, %241 : vector<1x128xf32>
    %243 = arith.mulf %234, %186 : vector<1x128xf32>
    %244 = arith.mulf %228, %236 : vector<1x128xf32>
    %245 = arith.addf %243, %244 : vector<1x128xf32>
    %246 = math.tanh %245 : vector<1x128xf32>
    %247 = arith.mulf %242, %246 : vector<1x128xf32>
    %248 = arith.index_cast %c3_i32 : i32 to index
    %c0_59 = arith.constant 0 : index
    %249 = vector.load %arg14[%248, %c0_59] : memref<8x128xf32, #tpu.memory_space<vmem>>, vector<1x128xf32>
    tpu.vector_store %arg14[%248, %c0_59], %247 {strides = array<i32>} : memref<8x128xf32, #tpu.memory_space<vmem>>, vector<1x128xf32>,
    %c4_i32 = arith.constant 4 : i32
    %250 = arith.index_cast %c4_i32 : i32 to index
    %c0_60 = arith.constant 0 : index
    %251 = vector.load %arg13[%250, %c0_60] : memref<8x512xf32, #tpu.memory_space<vmem>>, vector<1x512xf32>
    %cst_61 = arith.constant dense<0.000000e+00> : vector<1x512xf32>
    %252 = tpu.matmul %219, %7, %cst_61 {dimension_numbers = #tpu.dot_dimension_numbers<[1], [0], [0], [1], [0, 0, 1, 1], [], []>} : vector<1x128xf32>, vector<128x512xf32>, vector<1x512xf32> -> vector<1x512xf32>
    %253 = arith.addf %251, %252 : vector<1x512xf32>
    %254 = vector.extract_strided_slice %253 {offsets = [0, 0], sizes = [1, 128], strides = [1, 1]} : vector<1x512xf32> to vector<1x128xf32>
    %255 = arith.negf %254 : vector<1x128xf32>
    %256 = math.exp %255 : vector<1x128xf32>
    %cst_62 = arith.constant 1.000000e+00 : f32
    %257 = vector.broadcast %cst_62 : f32 to vector<1x128xf32>
    %258 = arith.addf %257, %256 : vector<1x128xf32>
    %259 = arith.divf %257, %258 : vector<1x128xf32>
    %260 = vector.extract_strided_slice %253 {offsets = [0, 128], sizes = [1, 128], strides = [1, 1]} : vector<1x512xf32> to vector<1x128xf32>
    %261 = arith.negf %260 : vector<1x128xf32>
    %262 = math.exp %261 : vector<1x128xf32>
    %cst_63 = arith.constant 1.000000e+00 : f32
    %263 = vector.broadcast %cst_63 : f32 to vector<1x128xf32>
    %264 = arith.addf %263, %262 : vector<1x128xf32>
    %265 = arith.divf %263, %264 : vector<1x128xf32>
    %266 = vector.extract_strided_slice %253 {offsets = [0, 256], sizes = [1, 128], strides = [1, 1]} : vector<1x512xf32> to vector<1x128xf32>
    %267 = math.tanh %266 : vector<1x128xf32>
    %268 = vector.extract_strided_slice %253 {offsets = [0, 384], sizes = [1, 128], strides = [1, 1]} : vector<1x512xf32> to vector<1x128xf32>
    %269 = arith.negf %268 : vector<1x128xf32>
    %270 = math.exp %269 : vector<1x128xf32>
    %cst_64 = arith.constant 1.000000e+00 : f32
    %271 = vector.broadcast %cst_64 : f32 to vector<1x128xf32>
    %272 = arith.addf %271, %270 : vector<1x128xf32>
    %273 = arith.divf %271, %272 : vector<1x128xf32>
    %274 = arith.mulf %265, %217 : vector<1x128xf32>
    %275 = arith.mulf %259, %267 : vector<1x128xf32>
    %276 = arith.addf %274, %275 : vector<1x128xf32>
    %277 = math.tanh %276 : vector<1x128xf32>
    %278 = arith.mulf %273, %277 : vector<1x128xf32>
    %279 = tpu.concatenate %278, %247 in 1 : vector<1x128xf32>, vector<1x128xf32> -> vector<1x256xf32>
    %cst_65 = arith.constant dense<0.000000e+00> : vector<1x512xf32>
    %280 = tpu.matmul %279, %8, %cst_65 {dimension_numbers = #tpu.dot_dimension_numbers<[1], [0], [0], [1], [0, 0, 1, 1], [], []>} : vector<1x256xf32>, vector<256x512xf32>, vector<1x512xf32> -> vector<1x512xf32>
    %281 = arith.addf %280, %9 : vector<1x512xf32>
    %282 = vector.extract_strided_slice %281 {offsets = [0, 0], sizes = [1, 128], strides = [1, 1]} : vector<1x512xf32> to vector<1x128xf32>
    %283 = arith.negf %282 : vector<1x128xf32>
    %284 = math.exp %283 : vector<1x128xf32>
    %cst_66 = arith.constant 1.000000e+00 : f32
    %285 = vector.broadcast %cst_66 : f32 to vector<1x128xf32>
    %286 = arith.addf %285, %284 : vector<1x128xf32>
    %287 = arith.divf %285, %286 : vector<1x128xf32>
    %288 = vector.extract_strided_slice %281 {offsets = [0, 128], sizes = [1, 128], strides = [1, 1]} : vector<1x512xf32> to vector<1x128xf32>
    %289 = arith.negf %288 : vector<1x128xf32>
    %290 = math.exp %289 : vector<1x128xf32>
    %cst_67 = arith.constant 1.000000e+00 : f32
    %291 = vector.broadcast %cst_67 : f32 to vector<1x128xf32>
    %292 = arith.addf %291, %290 : vector<1x128xf32>
    %293 = arith.divf %291, %292 : vector<1x128xf32>
    %294 = vector.extract_strided_slice %281 {offsets = [0, 256], sizes = [1, 128], strides = [1, 1]} : vector<1x512xf32> to vector<1x128xf32>
    %295 = math.tanh %294 : vector<1x128xf32>
    %296 = vector.extract_strided_slice %281 {offsets = [0, 384], sizes = [1, 128], strides = [1, 1]} : vector<1x512xf32> to vector<1x128xf32>
    %297 = arith.negf %296 : vector<1x128xf32>
    %298 = math.exp %297 : vector<1x128xf32>
    %cst_68 = arith.constant 1.000000e+00 : f32
    %299 = vector.broadcast %cst_68 : f32 to vector<1x128xf32>
    %300 = arith.addf %299, %298 : vector<1x128xf32>
    %301 = arith.divf %299, %300 : vector<1x128xf32>
    %302 = arith.mulf %293, %245 : vector<1x128xf32>
    %303 = arith.mulf %287, %295 : vector<1x128xf32>
    %304 = arith.addf %302, %303 : vector<1x128xf32>
    %305 = math.tanh %304 : vector<1x128xf32>
    %306 = arith.mulf %301, %305 : vector<1x128xf32>
    %307 = arith.index_cast %c4_i32 : i32 to index
    %c0_69 = arith.constant 0 : index
    %308 = vector.load %arg14[%307, %c0_69] : memref<8x128xf32, #tpu.memory_space<vmem>>, vector<1x128xf32>
    tpu.vector_store %arg14[%307, %c0_69], %306 {strides = array<i32>} : memref<8x128xf32, #tpu.memory_space<vmem>>, vector<1x128xf32>,
    %c5_i32 = arith.constant 5 : i32
    %309 = arith.index_cast %c5_i32 : i32 to index
    %c0_70 = arith.constant 0 : index
    %310 = vector.load %arg13[%309, %c0_70] : memref<8x512xf32, #tpu.memory_space<vmem>>, vector<1x512xf32>
    %cst_71 = arith.constant dense<0.000000e+00> : vector<1x512xf32>
    %311 = tpu.matmul %278, %7, %cst_71 {dimension_numbers = #tpu.dot_dimension_numbers<[1], [0], [0], [1], [0, 0, 1, 1], [], []>} : vector<1x128xf32>, vector<128x512xf32>, vector<1x512xf32> -> vector<1x512xf32>
    %312 = arith.addf %310, %311 : vector<1x512xf32>
    %313 = vector.extract_strided_slice %312 {offsets = [0, 0], sizes = [1, 128], strides = [1, 1]} : vector<1x512xf32> to vector<1x128xf32>
    %314 = arith.negf %313 : vector<1x128xf32>
    %315 = math.exp %314 : vector<1x128xf32>
    %cst_72 = arith.constant 1.000000e+00 : f32
    %316 = vector.broadcast %cst_72 : f32 to vector<1x128xf32>
    %317 = arith.addf %316, %315 : vector<1x128xf32>
    %318 = arith.divf %316, %317 : vector<1x128xf32>
    %319 = vector.extract_strided_slice %312 {offsets = [0, 128], sizes = [1, 128], strides = [1, 1]} : vector<1x512xf32> to vector<1x128xf32>
    %320 = arith.negf %319 : vector<1x128xf32>
    %321 = math.exp %320 : vector<1x128xf32>
    %cst_73 = arith.constant 1.000000e+00 : f32
    %322 = vector.broadcast %cst_73 : f32 to vector<1x128xf32>
    %323 = arith.addf %322, %321 : vector<1x128xf32>
    %324 = arith.divf %322, %323 : vector<1x128xf32>
    %325 = vector.extract_strided_slice %312 {offsets = [0, 256], sizes = [1, 128], strides = [1, 1]} : vector<1x512xf32> to vector<1x128xf32>
    %326 = math.tanh %325 : vector<1x128xf32>
    %327 = vector.extract_strided_slice %312 {offsets = [0, 384], sizes = [1, 128], strides = [1, 1]} : vector<1x512xf32> to vector<1x128xf32>
    %328 = arith.negf %327 : vector<1x128xf32>
    %329 = math.exp %328 : vector<1x128xf32>
    %cst_74 = arith.constant 1.000000e+00 : f32
    %330 = vector.broadcast %cst_74 : f32 to vector<1x128xf32>
    %331 = arith.addf %330, %329 : vector<1x128xf32>
    %332 = arith.divf %330, %331 : vector<1x128xf32>
    %333 = arith.mulf %324, %276 : vector<1x128xf32>
    %334 = arith.mulf %318, %326 : vector<1x128xf32>
    %335 = arith.addf %333, %334 : vector<1x128xf32>
    %336 = math.tanh %335 : vector<1x128xf32>
    %337 = arith.mulf %332, %336 : vector<1x128xf32>
    %338 = tpu.concatenate %337, %306 in 1 : vector<1x128xf32>, vector<1x128xf32> -> vector<1x256xf32>
    %cst_75 = arith.constant dense<0.000000e+00> : vector<1x512xf32>
    %339 = tpu.matmul %338, %8, %cst_75 {dimension_numbers = #tpu.dot_dimension_numbers<[1], [0], [0], [1], [0, 0, 1, 1], [], []>} : vector<1x256xf32>, vector<256x512xf32>, vector<1x512xf32> -> vector<1x512xf32>
    %340 = arith.addf %339, %9 : vector<1x512xf32>
    %341 = vector.extract_strided_slice %340 {offsets = [0, 0], sizes = [1, 128], strides = [1, 1]} : vector<1x512xf32> to vector<1x128xf32>
    %342 = arith.negf %341 : vector<1x128xf32>
    %343 = math.exp %342 : vector<1x128xf32>
    %cst_76 = arith.constant 1.000000e+00 : f32
    %344 = vector.broadcast %cst_76 : f32 to vector<1x128xf32>
    %345 = arith.addf %344, %343 : vector<1x128xf32>
    %346 = arith.divf %344, %345 : vector<1x128xf32>
    %347 = vector.extract_strided_slice %340 {offsets = [0, 128], sizes = [1, 128], strides = [1, 1]} : vector<1x512xf32> to vector<1x128xf32>
    %348 = arith.negf %347 : vector<1x128xf32>
    %349 = math.exp %348 : vector<1x128xf32>
    %cst_77 = arith.constant 1.000000e+00 : f32
    %350 = vector.broadcast %cst_77 : f32 to vector<1x128xf32>
    %351 = arith.addf %350, %349 : vector<1x128xf32>
    %352 = arith.divf %350, %351 : vector<1x128xf32>
    %353 = vector.extract_strided_slice %340 {offsets = [0, 256], sizes = [1, 128], strides = [1, 1]} : vector<1x512xf32> to vector<1x128xf32>
    %354 = math.tanh %353 : vector<1x128xf32>
    %355 = vector.extract_strided_slice %340 {offsets = [0, 384], sizes = [1, 128], strides = [1, 1]} : vector<1x512xf32> to vector<1x128xf32>
    %356 = arith.negf %355 : vector<1x128xf32>
    %357 = math.exp %356 : vector<1x128xf32>
    %cst_78 = arith.constant 1.000000e+00 : f32
    %358 = vector.broadcast %cst_78 : f32 to vector<1x128xf32>
    %359 = arith.addf %358, %357 : vector<1x128xf32>
    %360 = arith.divf %358, %359 : vector<1x128xf32>
    %361 = arith.mulf %352, %304 : vector<1x128xf32>
    %362 = arith.mulf %346, %354 : vector<1x128xf32>
    %363 = arith.addf %361, %362 : vector<1x128xf32>
    %364 = math.tanh %363 : vector<1x128xf32>
    %365 = arith.mulf %360, %364 : vector<1x128xf32>
    %366 = arith.index_cast %c5_i32 : i32 to index
    %c0_79 = arith.constant 0 : index
    %367 = vector.load %arg14[%366, %c0_79] : memref<8x128xf32, #tpu.memory_space<vmem>>, vector<1x128xf32>
    tpu.vector_store %arg14[%366, %c0_79], %365 {strides = array<i32>} : memref<8x128xf32, #tpu.memory_space<vmem>>, vector<1x128xf32>,
    %c6_i32 = arith.constant 6 : i32
    %368 = arith.index_cast %c6_i32 : i32 to index
    %c0_80 = arith.constant 0 : index
    %369 = vector.load %arg13[%368, %c0_80] : memref<8x512xf32, #tpu.memory_space<vmem>>, vector<1x512xf32>
    %cst_81 = arith.constant dense<0.000000e+00> : vector<1x512xf32>
    %370 = tpu.matmul %337, %7, %cst_81 {dimension_numbers = #tpu.dot_dimension_numbers<[1], [0], [0], [1], [0, 0, 1, 1], [], []>} : vector<1x128xf32>, vector<128x512xf32>, vector<1x512xf32> -> vector<1x512xf32>
    %371 = arith.addf %369, %370 : vector<1x512xf32>
    %372 = vector.extract_strided_slice %371 {offsets = [0, 0], sizes = [1, 128], strides = [1, 1]} : vector<1x512xf32> to vector<1x128xf32>
    %373 = arith.negf %372 : vector<1x128xf32>
    %374 = math.exp %373 : vector<1x128xf32>
    %cst_82 = arith.constant 1.000000e+00 : f32
    %375 = vector.broadcast %cst_82 : f32 to vector<1x128xf32>
    %376 = arith.addf %375, %374 : vector<1x128xf32>
    %377 = arith.divf %375, %376 : vector<1x128xf32>
    %378 = vector.extract_strided_slice %371 {offsets = [0, 128], sizes = [1, 128], strides = [1, 1]} : vector<1x512xf32> to vector<1x128xf32>
    %379 = arith.negf %378 : vector<1x128xf32>
    %380 = math.exp %379 : vector<1x128xf32>
    %cst_83 = arith.constant 1.000000e+00 : f32
    %381 = vector.broadcast %cst_83 : f32 to vector<1x128xf32>
    %382 = arith.addf %381, %380 : vector<1x128xf32>
    %383 = arith.divf %381, %382 : vector<1x128xf32>
    %384 = vector.extract_strided_slice %371 {offsets = [0, 256], sizes = [1, 128], strides = [1, 1]} : vector<1x512xf32> to vector<1x128xf32>
    %385 = math.tanh %384 : vector<1x128xf32>
    %386 = vector.extract_strided_slice %371 {offsets = [0, 384], sizes = [1, 128], strides = [1, 1]} : vector<1x512xf32> to vector<1x128xf32>
    %387 = arith.negf %386 : vector<1x128xf32>
    %388 = math.exp %387 : vector<1x128xf32>
    %cst_84 = arith.constant 1.000000e+00 : f32
    %389 = vector.broadcast %cst_84 : f32 to vector<1x128xf32>
    %390 = arith.addf %389, %388 : vector<1x128xf32>
    %391 = arith.divf %389, %390 : vector<1x128xf32>
    %392 = arith.mulf %383, %335 : vector<1x128xf32>
    %393 = arith.mulf %377, %385 : vector<1x128xf32>
    %394 = arith.addf %392, %393 : vector<1x128xf32>
    %395 = math.tanh %394 : vector<1x128xf32>
    %396 = arith.mulf %391, %395 : vector<1x128xf32>
    %397 = tpu.concatenate %396, %365 in 1 : vector<1x128xf32>, vector<1x128xf32> -> vector<1x256xf32>
    %cst_85 = arith.constant dense<0.000000e+00> : vector<1x512xf32>
    %398 = tpu.matmul %397, %8, %cst_85 {dimension_numbers = #tpu.dot_dimension_numbers<[1], [0], [0], [1], [0, 0, 1, 1], [], []>} : vector<1x256xf32>, vector<256x512xf32>, vector<1x512xf32> -> vector<1x512xf32>
    %399 = arith.addf %398, %9 : vector<1x512xf32>
    %400 = vector.extract_strided_slice %399 {offsets = [0, 0], sizes = [1, 128], strides = [1, 1]} : vector<1x512xf32> to vector<1x128xf32>
    %401 = arith.negf %400 : vector<1x128xf32>
    %402 = math.exp %401 : vector<1x128xf32>
    %cst_86 = arith.constant 1.000000e+00 : f32
    %403 = vector.broadcast %cst_86 : f32 to vector<1x128xf32>
    %404 = arith.addf %403, %402 : vector<1x128xf32>
    %405 = arith.divf %403, %404 : vector<1x128xf32>
    %406 = vector.extract_strided_slice %399 {offsets = [0, 128], sizes = [1, 128], strides = [1, 1]} : vector<1x512xf32> to vector<1x128xf32>
    %407 = arith.negf %406 : vector<1x128xf32>
    %408 = math.exp %407 : vector<1x128xf32>
    %cst_87 = arith.constant 1.000000e+00 : f32
    %409 = vector.broadcast %cst_87 : f32 to vector<1x128xf32>
    %410 = arith.addf %409, %408 : vector<1x128xf32>
    %411 = arith.divf %409, %410 : vector<1x128xf32>
    %412 = vector.extract_strided_slice %399 {offsets = [0, 256], sizes = [1, 128], strides = [1, 1]} : vector<1x512xf32> to vector<1x128xf32>
    %413 = math.tanh %412 : vector<1x128xf32>
    %414 = vector.extract_strided_slice %399 {offsets = [0, 384], sizes = [1, 128], strides = [1, 1]} : vector<1x512xf32> to vector<1x128xf32>
    %415 = arith.negf %414 : vector<1x128xf32>
    %416 = math.exp %415 : vector<1x128xf32>
    %cst_88 = arith.constant 1.000000e+00 : f32
    %417 = vector.broadcast %cst_88 : f32 to vector<1x128xf32>
    %418 = arith.addf %417, %416 : vector<1x128xf32>
    %419 = arith.divf %417, %418 : vector<1x128xf32>
    %420 = arith.mulf %411, %363 : vector<1x128xf32>
    %421 = arith.mulf %405, %413 : vector<1x128xf32>
    %422 = arith.addf %420, %421 : vector<1x128xf32>
    %423 = math.tanh %422 : vector<1x128xf32>
    %424 = arith.mulf %419, %423 : vector<1x128xf32>
    %425 = arith.index_cast %c6_i32 : i32 to index
    %c0_89 = arith.constant 0 : index
    %426 = vector.load %arg14[%425, %c0_89] : memref<8x128xf32, #tpu.memory_space<vmem>>, vector<1x128xf32>
    tpu.vector_store %arg14[%425, %c0_89], %424 {strides = array<i32>} : memref<8x128xf32, #tpu.memory_space<vmem>>, vector<1x128xf32>,
    %c7_i32 = arith.constant 7 : i32
    %427 = arith.index_cast %c7_i32 : i32 to index
    %c0_90 = arith.constant 0 : index
    %428 = vector.load %arg13[%427, %c0_90] : memref<8x512xf32, #tpu.memory_space<vmem>>, vector<1x512xf32>
    %cst_91 = arith.constant dense<0.000000e+00> : vector<1x512xf32>
    %429 = tpu.matmul %396, %7, %cst_91 {dimension_numbers = #tpu.dot_dimension_numbers<[1], [0], [0], [1], [0, 0, 1, 1], [], []>} : vector<1x128xf32>, vector<128x512xf32>, vector<1x512xf32> -> vector<1x512xf32>
    %430 = arith.addf %428, %429 : vector<1x512xf32>
    %431 = vector.extract_strided_slice %430 {offsets = [0, 0], sizes = [1, 128], strides = [1, 1]} : vector<1x512xf32> to vector<1x128xf32>
    %432 = arith.negf %431 : vector<1x128xf32>
    %433 = math.exp %432 : vector<1x128xf32>
    %cst_92 = arith.constant 1.000000e+00 : f32
    %434 = vector.broadcast %cst_92 : f32 to vector<1x128xf32>
    %435 = arith.addf %434, %433 : vector<1x128xf32>
    %436 = arith.divf %434, %435 : vector<1x128xf32>
    %437 = vector.extract_strided_slice %430 {offsets = [0, 128], sizes = [1, 128], strides = [1, 1]} : vector<1x512xf32> to vector<1x128xf32>
    %438 = arith.negf %437 : vector<1x128xf32>
    %439 = math.exp %438 : vector<1x128xf32>
    %cst_93 = arith.constant 1.000000e+00 : f32
    %440 = vector.broadcast %cst_93 : f32 to vector<1x128xf32>
    %441 = arith.addf %440, %439 : vector<1x128xf32>
    %442 = arith.divf %440, %441 : vector<1x128xf32>
    %443 = vector.extract_strided_slice %430 {offsets = [0, 256], sizes = [1, 128], strides = [1, 1]} : vector<1x512xf32> to vector<1x128xf32>
    %444 = math.tanh %443 : vector<1x128xf32>
    %445 = vector.extract_strided_slice %430 {offsets = [0, 384], sizes = [1, 128], strides = [1, 1]} : vector<1x512xf32> to vector<1x128xf32>
    %446 = arith.negf %445 : vector<1x128xf32>
    %447 = math.exp %446 : vector<1x128xf32>
    %cst_94 = arith.constant 1.000000e+00 : f32
    %448 = vector.broadcast %cst_94 : f32 to vector<1x128xf32>
    %449 = arith.addf %448, %447 : vector<1x128xf32>
    %450 = arith.divf %448, %449 : vector<1x128xf32>
    %451 = arith.mulf %442, %394 : vector<1x128xf32>
    %452 = arith.mulf %436, %444 : vector<1x128xf32>
    %453 = arith.addf %451, %452 : vector<1x128xf32>
    %454 = math.tanh %453 : vector<1x128xf32>
    %455 = arith.mulf %450, %454 : vector<1x128xf32>
    %456 = tpu.concatenate %455, %424 in 1 : vector<1x128xf32>, vector<1x128xf32> -> vector<1x256xf32>
    %cst_95 = arith.constant dense<0.000000e+00> : vector<1x512xf32>
    %457 = tpu.matmul %456, %8, %cst_95 {dimension_numbers = #tpu.dot_dimension_numbers<[1], [0], [0], [1], [0, 0, 1, 1], [], []>} : vector<1x256xf32>, vector<256x512xf32>, vector<1x512xf32> -> vector<1x512xf32>
    %458 = arith.addf %457, %9 : vector<1x512xf32>
    %459 = vector.extract_strided_slice %458 {offsets = [0, 0], sizes = [1, 128], strides = [1, 1]} : vector<1x512xf32> to vector<1x128xf32>
    %460 = arith.negf %459 : vector<1x128xf32>
    %461 = math.exp %460 : vector<1x128xf32>
    %cst_96 = arith.constant 1.000000e+00 : f32
    %462 = vector.broadcast %cst_96 : f32 to vector<1x128xf32>
    %463 = arith.addf %462, %461 : vector<1x128xf32>
    %464 = arith.divf %462, %463 : vector<1x128xf32>
    %465 = vector.extract_strided_slice %458 {offsets = [0, 128], sizes = [1, 128], strides = [1, 1]} : vector<1x512xf32> to vector<1x128xf32>
    %466 = arith.negf %465 : vector<1x128xf32>
    %467 = math.exp %466 : vector<1x128xf32>
    %cst_97 = arith.constant 1.000000e+00 : f32
    %468 = vector.broadcast %cst_97 : f32 to vector<1x128xf32>
    %469 = arith.addf %468, %467 : vector<1x128xf32>
    %470 = arith.divf %468, %469 : vector<1x128xf32>
    %471 = vector.extract_strided_slice %458 {offsets = [0, 256], sizes = [1, 128], strides = [1, 1]} : vector<1x512xf32> to vector<1x128xf32>
    %472 = math.tanh %471 : vector<1x128xf32>
    %473 = vector.extract_strided_slice %458 {offsets = [0, 384], sizes = [1, 128], strides = [1, 1]} : vector<1x512xf32> to vector<1x128xf32>
    %474 = arith.negf %473 : vector<1x128xf32>
    %475 = math.exp %474 : vector<1x128xf32>
    %cst_98 = arith.constant 1.000000e+00 : f32
    %476 = vector.broadcast %cst_98 : f32 to vector<1x128xf32>
    %477 = arith.addf %476, %475 : vector<1x128xf32>
    %478 = arith.divf %476, %477 : vector<1x128xf32>
    %479 = arith.mulf %470, %422 : vector<1x128xf32>
    %480 = arith.mulf %464, %472 : vector<1x128xf32>
    %481 = arith.addf %479, %480 : vector<1x128xf32>
    %482 = math.tanh %481 : vector<1x128xf32>
    %483 = arith.mulf %478, %482 : vector<1x128xf32>
    %484 = arith.index_cast %c7_i32 : i32 to index
    %c0_99 = arith.constant 0 : index
    %485 = vector.load %arg14[%484, %c0_99] : memref<8x128xf32, #tpu.memory_space<vmem>>, vector<1x128xf32>
    tpu.vector_store %arg14[%484, %c0_99], %483 {strides = array<i32>} : memref<8x128xf32, #tpu.memory_space<vmem>>, vector<1x128xf32>,
    %c8_i32 = arith.constant 8 : i32
    %c0_100 = arith.constant 0 : index
    %c0_101 = arith.constant 0 : index
    %486 = vector.load %arg11[%c0_100, %c0_101] : memref<2x128xf32, #tpu.memory_space<vmem>>, vector<1x128xf32>
    tpu.vector_store %arg11[%c0_100, %c0_101], %455 {strides = array<i32>} : memref<2x128xf32, #tpu.memory_space<vmem>>, vector<1x128xf32>,
    %c0_102 = arith.constant 0 : index
    %c0_103 = arith.constant 0 : index
    %487 = vector.load %arg12[%c0_102, %c0_103] : memref<2x128xf32, #tpu.memory_space<vmem>>, vector<1x128xf32>
    tpu.vector_store %arg12[%c0_102, %c0_103], %453 {strides = array<i32>} : memref<2x128xf32, #tpu.memory_space<vmem>>, vector<1x128xf32>,
    %c1_104 = arith.constant 1 : index
    %c0_105 = arith.constant 0 : index
    %488 = vector.load %arg11[%c1_104, %c0_105] : memref<2x128xf32, #tpu.memory_space<vmem>>, vector<1x128xf32>
    tpu.vector_store %arg11[%c1_104, %c0_105], %483 {strides = array<i32>} : memref<2x128xf32, #tpu.memory_space<vmem>>, vector<1x128xf32>,
    %c1_106 = arith.constant 1 : index
    %c0_107 = arith.constant 0 : index
    %489 = vector.load %arg12[%c1_106, %c0_107] : memref<2x128xf32, #tpu.memory_space<vmem>>, vector<1x128xf32>
    tpu.vector_store %arg12[%c1_106, %c0_107], %481 {strides = array<i32>} : memref<2x128xf32, #tpu.memory_space<vmem>>, vector<1x128xf32>,
    %c0_108 = arith.constant 0 : index
    %c0_109 = arith.constant 0 : index
    %490 = vector.load %arg14[%c0_108, %c0_109] : memref<8x128xf32, #tpu.memory_space<vmem>>, vector<8x128xf32>
    %c0_110 = arith.constant 0 : index
    %c0_111 = arith.constant 0 : index
    %491 = vector.load %arg8[%c0_110, %c0_111] : memref<128x128xf32, #tpu.memory_space<vmem>>, vector<128x128xf32>
    %cst_112 = arith.constant dense<0.000000e+00> : vector<8x128xf32>
    %492 = tpu.matmul %490, %491, %cst_112 {dimension_numbers = #tpu.dot_dimension_numbers<[1], [0], [0], [1], [0, 0, 1, 1], [], []>} : vector<8x128xf32>, vector<128x128xf32>, vector<8x128xf32> -> vector<8x128xf32>
    %c0_113 = arith.constant 0 : index
    %c0_114 = arith.constant 0 : index
    %493 = vector.load %arg9[%c0_113, %c0_114] : memref<1x128xf32, #tpu.memory_space<vmem>>, vector<1x128xf32>
    %494 = vector.broadcast %493 : vector<1x128xf32> to vector<8x128xf32>
    %495 = arith.addf %492, %494 : vector<8x128xf32>
    %cst_115 = arith.constant dense<0xFF800000> : vector<8xf32>
    %496 = vector.multi_reduction <maximumf>, %495, %cst_115 [1] : vector<8x128xf32> to vector<8xf32>
    %497 = vector.shape_cast %496 : vector<8xf32> to vector<8x1xf32>
    %498 = vector.broadcast %497 : vector<8x1xf32> to vector<8x128xf32>
    %499 = arith.subf %495, %498 : vector<8x128xf32>
    %500 = math.exp %499 : vector<8x128xf32>
    %cst_116 = arith.constant dense<0.000000e+00> : vector<8xf32>
    %501 = vector.multi_reduction <add>, %500, %cst_116 [1] : vector<8x128xf32> to vector<8xf32>
    %502 = vector.shape_cast %501 : vector<8xf32> to vector<8x1xf32>
    %503 = math.log %502 : vector<8x1xf32>
    %504 = vector.broadcast %503 : vector<8x1xf32> to vector<8x128xf32>
    %505 = arith.subf %499, %504 : vector<8x128xf32>
    %c0_117 = arith.constant 0 : index
    %c0_118 = arith.constant 0 : index
    %506 = vector.load %arg10[%c0_117, %c0_118] : memref<8x128xf32, #tpu.memory_space<vmem>>, vector<8x128xf32>
    tpu.vector_store %arg10[%c0_117, %c0_118], %505 {strides = array<i32>} : memref<8x128xf32, #tpu.memory_space<vmem>>, vector<8x128xf32>,
    return
  }
}

</mosaic_0001>

<llo_original>
// kernel: tpu_custom_call.1
$region0: #{tpu_custom_call.1}
  #allocation0 [shape = 'u32[]', space=smem, size = 0x4, offset = 0x4, fixed_abs, tag = 'smem constant byte address 0x4 - core index']
  #allocation1 [shape = 'u32[72,128]{1,0:T(1,128)}', space=vmem, size = 0x9000, scoped, tag = 'internal scratch']
  #allocation2 [shape = 'f32[8,512]{1,0:T(8,128)}', space=vmem, size = 0x4000, scoped, tag = 'scratch operand']
  #allocation3 [shape = 'f32[8,128]{1,0:T(8,128)}', space=vmem, size = 0x1000, scoped, tag = 'scratch operand']
  %s0 = inlined_call_operand.hbm [shape: f32[8,78], index: 0, kind: input, shape index: {}]
  %s1 = inlined_call_operand.hbm [shape: f32[2,128], index: 1, kind: input, shape index: {}]
  %s2 = inlined_call_operand.hbm [shape: f32[2,128], index: 2, kind: input, shape index: {}]
  %s3 = inlined_call_operand.hbm [shape: f32[78,512], index: 3, kind: input, shape index: {}]
  %s4 = inlined_call_operand.hbm [shape: f32[128,512], index: 4, kind: input, shape index: {}]
  %s5 = inlined_call_operand.vmem [shape: f32[1,512], index: 5, kind: input, shape index: {}]
  %s6 = inlined_call_operand.hbm [shape: f32[256,512], index: 6, kind: input, shape index: {}]
  %s7 = inlined_call_operand.hbm [shape: f32[1,512], index: 7, kind: input, shape index: {}]
  %s8 = inlined_call_operand.hbm [shape: f32[128,128], index: 8, kind: input, shape index: {}]
  %s9 = inlined_call_operand.vmem [shape: f32[1,128], index: 9, kind: input, shape index: {}]
  %s10 = inlined_call_operand.hbm [shape: f32[8,128], index: 10, kind: output, shape index: {0}]
  %s11 = inlined_call_operand.hbm [shape: f32[2,128], index: 11, kind: output, shape index: {1}]
  %s12 = inlined_call_operand.hbm [shape: f32[2,128], index: 12, kind: output, shape index: {2}]
  %13 = xla_tuple %s10, %s11, %s12
  %s14 = sld [smem:[#allocation0]]
  $region98: #{tpu_custom_call.1} parent=0
    _
  %s16 = ssub.s32 1, %s14
  %s17 = scalar_select 0, %s16, %s14
  $region1: #{tpu_custom_call.1} parent=0
    #allocation4 [shape = 'u8[4096]{0}', space=vmem, size = 0x1000, scoped, tag = 'input window, operand 0, single buffered']
    #allocation5 [shape = 's32[1]{0}', space=sflag, size = 0x4, scoped, tag = 'scoped memory for tpu_custom_call.1']
    #allocation6 [shape = 's32[1]{0}', space=sflag, size = 0x4, scoped, tag = 'scoped memory for tpu_custom_call.1']
    #allocation7 [shape = 'u8[1024]{0}', space=vmem, size = 0x400, scoped, tag = 'input window, operand 1, single buffered']
    #allocation8 [shape = 's32[1]{0}', space=sflag, size = 0x4, scoped, tag = 'scoped memory for tpu_custom_call.1']
    #allocation9 [shape = 'u8[1024]{0}', space=vmem, size = 0x400, scoped, tag = 'input window, operand 2, single buffered']
    #allocation10 [shape = 'u8[163840]{0}', space=vmem, size = 0x28000, scoped, tag = 'input window, operand 3, single buffered']
    #allocation11 [shape = 's32[1]{0}', space=sflag, size = 0x4, scoped, tag = 'scoped memory for tpu_custom_call.1']
    #allocation12 [shape = 'u8[262144]{0}', space=vmem, size = 0x40000, scoped, tag = 'input window, operand 4, single buffered']
    #allocation13 [shape = 'u8[524288]{0}', space=vmem, size = 0x80000, scoped, tag = 'input window, operand 6, single buffered']
    #allocation14 [shape = 's32[1]{0}', space=sflag, size = 0x4, scoped, tag = 'scoped memory for tpu_custom_call.1']
    #allocation15 [shape = 'u8[2048]{0}', space=vmem, size = 0x800, scoped, tag = 'input window, operand 7, single buffered']
    #allocation16 [shape = 'u8[65536]{0}', space=vmem, size = 0x10000, scoped, tag = 'input window, operand 8, single buffered']
    #allocation17 [shape = 's32[1]{0}', space=sflag, size = 0x4, scoped, tag = 'scoped memory for tpu_custom_call.1']
    #allocation18 [shape = 'u8[4096]{0}', space=vmem, size = 0x1000, scoped, tag = 'output window, operand 0, single buffered']
    #allocation19 [shape = 'u8[1024]{0}', space=vmem, size = 0x400, scoped, tag = 'output window, operand 1, single buffered']
    #allocation20 [shape = 's32[1]{0}', space=sflag, size = 0x4, scoped, tag = 'scoped memory for tpu_custom_call.1']
    #allocation21 [shape = 'u8[1024]{0}', space=vmem, size = 0x400, scoped, tag = 'output window, operand 2, single buffered']
    %18 = vsyncpa [#allocation5], 0
    %19 = vsyncpa [#allocation8], 0
    %20 = vsyncpa [#allocation11], 0
    %21 = vsyncpa [#allocation14], 0
    %22 = vsyncpa [#allocation17], 0
    %23 = vsyncpa [#allocation6], 0
    %24 = vsyncpa [#allocation20], 0
    // Predicated region
    $region2: #{tpu_custom_call.1} parent=1 // pred_check
      _
    $region3: #{tpu_custom_call.1} parent=1 // pred_check_branch
      %26 = sbr.rel (0) target = $region5
    $region4: #{tpu_custom_call.1} parent=1 // pred_region
      %28 = vsyncadd [#allocation5], 0
      %s30 = sshll.u32 %s0, 4
      %s31 = int_to_ptr.hbm [resolvable:$true] %s30
      %s32 = sshll.u32 [#allocation4], 4
      %s33 = int_to_ptr.vmem [resolvable:$true] %s32
      %35 = dma.hbm_to_vmem [thread:$0]  %s31, 128, %s33, [#allocation5]
    $region5: #{tpu_custom_call.1} parent=1 // pred_fallthru
      _
    // Predicated region
    $region6: #{tpu_custom_call.1} parent=1 // pred_check
      _
    $region7: #{tpu_custom_call.1} parent=1 // pred_check_branch
      %37 = sbr.rel (0) target = $region9
    $region8: #{tpu_custom_call.1} parent=1 // pred_region
      %39 = vsyncadd [#allocation8], 0
      %s41 = sshll.u32 %s1, 4
      %s42 = int_to_ptr.hbm [resolvable:$true] %s41
      %s43 = sshll.u32 [#allocation7], 4
      %s44 = int_to_ptr.vmem [resolvable:$true] %s43
      %46 = dma.hbm_to_vmem [thread:$0]  %s42, 32, %s44, [#allocation8]
    $region9: #{tpu_custom_call.1} parent=1 // pred_fallthru
      _
    // Predicated region
    $region10: #{tpu_custom_call.1} parent=1 // pred_check
      _
    $region11: #{tpu_custom_call.1} parent=1 // pred_check_branch
      %48 = sbr.rel (0) target = $region13
    $region12: #{tpu_custom_call.1} parent=1 // pred_region
      %50 = vsyncadd [#allocation8], 0
      %s52 = sshll.u32 %s2, 4
      %s53 = int_to_ptr.hbm [resolvable:$true] %s52
      %s54 = sshll.u32 [#allocation9], 4
      %s55 = int_to_ptr.vmem [resolvable:$true] %s54
      %57 = dma.hbm_to_vmem [thread:$0]  %s53, 32, %s55, [#allocation8]
    $region13: #{tpu_custom_call.1} parent=1 // pred_fallthru
      _
    // Predicated region
    $region14: #{tpu_custom_call.1} parent=1 // pred_check
      _
    $region15: #{tpu_custom_call.1} parent=1 // pred_check_branch
      %59 = sbr.rel (0) target = $region17
    $region16: #{tpu_custom_call.1} parent=1 // pred_region
      %61 = vsyncadd [#allocation11], 0
      %s62 = sshll.u32 %s3, 4
      %s63 = int_to_ptr.hbm [resolvable:$true] %s62
      %s64 = sshll.u32 [#allocation10], 4
      %s65 = int_to_ptr.vmem [resolvable:$true] %s64
      %70 = dma.hbm_to_vmem [thread:$0]  %s63, 5120, %s65, [#allocation11], 512, 512, 32
    $region17: #{tpu_custom_call.1} parent=1 // pred_fallthru
      _
    // Predicated region
    $region18: #{tpu_custom_call.1} parent=1 // pred_check
      _
    $region19: #{tpu_custom_call.1} parent=1 // pred_check_branch
      %72 = sbr.rel (0) target = $region21
    $region20: #{tpu_custom_call.1} parent=1 // pred_region
      %74 = vsyncadd [#allocation11], 0
      %s75 = sshll.u32 %s4, 4
      %s76 = int_to_ptr.hbm [resolvable:$true] %s75
      %s77 = sshll.u32 [#allocation12], 4
      %s78 = int_to_ptr.vmem [resolvable:$true] %s77
      %83 = dma.hbm_to_vmem [thread:$0]  %s76, 8192, %s78, [#allocation11], 512, 512, 32
    $region21: #{tpu_custom_call.1} parent=1 // pred_fallthru
      _
    // Predicated region
    $region22: #{tpu_custom_call.1} parent=1 // pred_check
      _
    $region23: #{tpu_custom_call.1} parent=1 // pred_check_branch
      %85 = sbr.rel (0) target = $region25
    $region24: #{tpu_custom_call.1} parent=1 // pred_region
      _
    $region25: #{tpu_custom_call.1} parent=1 // pred_fallthru
      _
    // Predicated region
    $region26: #{tpu_custom_call.1} parent=1 // pred_check
      _
    $region27: #{tpu_custom_call.1} parent=1 // pred_check_branch
      %87 = sbr.rel (0) target = $region29
    $region28: #{tpu_custom_call.1} parent=1 // pred_region
      %89 = vsyncadd [#allocation14], 0
      %s90 = sshll.u32 %s6, 4
      %s91 = int_to_ptr.hbm [resolvable:$true] %s90
      %s92 = sshll.u32 [#allocation13], 4
      %s93 = int_to_ptr.vmem [resolvable:$true] %s92
      %98 = dma.hbm_to_vmem [thread:$0]  %s91, 16384, %s93, [#allocation14], 512, 512, 32
    $region29: #{tpu_custom_call.1} parent=1 // pred_fallthru
      _
    // Predicated region
    $region30: #{tpu_custom_call.1} parent=1 // pred_check
      _
    $region31: #{tpu_custom_call.1} parent=1 // pred_check_branch
      %100 = sbr.rel (0) target = $region33
    $region32: #{tpu_custom_call.1} parent=1 // pred_region
      %102 = vsyncadd [#allocation14], 0
      %s104 = sshll.u32 %s7, 4
      %s105 = int_to_ptr.hbm [resolvable:$true] %s104
      %s106 = sshll.u32 [#allocation15], 4
      %s107 = int_to_ptr.vmem [resolvable:$true] %s106
      %109 = dma.hbm_to_vmem [thread:$0]  %s105, 64, %s107, [#allocation14]
    $region33: #{tpu_custom_call.1} parent=1 // pred_fallthru
      _
    // Predicated region
    $region34: #{tpu_custom_call.1} parent=1 // pred_check
      _
    $region35: #{tpu_custom_call.1} parent=1 // pred_check_branch
      %111 = sbr.rel (0) target = $region37
    $region36: #{tpu_custom_call.1} parent=1 // pred_region
      %113 = vsyncadd [#allocation17], 0
      %s114 = sshll.u32 %s8, 4
      %s115 = int_to_ptr.hbm [resolvable:$true] %s114
      %s116 = sshll.u32 [#allocation16], 4
      %s117 = int_to_ptr.vmem [resolvable:$true] %s116
      %122 = dma.hbm_to_vmem [thread:$0]  %s115, 2048, %s117, [#allocation17], 128, 128, 8
    $region37: #{tpu_custom_call.1} parent=1 // pred_fallthru
      _
    // Predicated region
    $region38: #{tpu_custom_call.1} parent=1 // pred_check
      _
    $region39: #{tpu_custom_call.1} parent=1 // pred_check_branch
      %124 = sbr.rel (0) target = $region41
    $region40: #{tpu_custom_call.1} parent=1 // pred_region
      _
    $region41: #{tpu_custom_call.1} parent=1 // pred_fallthru
      _
    // Predicated region
    $region42: #{tpu_custom_call.1} parent=1 // pred_check
      _
    $region43: #{tpu_custom_call.1} parent=1 // pred_check_branch
      %126 = sbr.rel (0) target = $region45
    $region44: #{tpu_custom_call.1} parent=1 // pred_region
      %128 = dma.done [#allocation5], 128
    $region45: #{tpu_custom_call.1} parent=1 // pred_fallthru
      _
    // Predicated region
    $region46: #{tpu_custom_call.1} parent=1 // pred_check
      _
    $region47: #{tpu_custom_call.1} parent=1 // pred_check_branch
      %130 = sbr.rel (0) target = $region49
    $region48: #{tpu_custom_call.1} parent=1 // pred_region
      %132 = dma.done [#allocation8], 32
    $region49: #{tpu_custom_call.1} parent=1 // pred_fallthru
      _
    // Predicated region
    $region50: #{tpu_custom_call.1} parent=1 // pred_check
      _
    $region51: #{tpu_custom_call.1} parent=1 // pred_check_branch
      %134 = sbr.rel (0) target = $region53
    $region52: #{tpu_custom_call.1} parent=1 // pred_region
      %136 = dma.done [#allocation8], 32
    $region53: #{tpu_custom_call.1} parent=1 // pred_fallthru
      _
    // Predicated region
    $region54: #{tpu_custom_call.1} parent=1 // pred_check
      _
    $region55: #{tpu_custom_call.1} parent=1 // pred_check_branch
      %138 = sbr.rel (0) target = $region57
    $region56: #{tpu_custom_call.1} parent=1 // pred_region
      %140 = dma.done [#allocation11], 5120
    $region57: #{tpu_custom_call.1} parent=1 // pred_fallthru
      _
    // Predicated region
    $region58: #{tpu_custom_call.1} parent=1 // pred_check
      _
    $region59: #{tpu_custom_call.1} parent=1 // pred_check_branch
      %142 = sbr.rel (0) target = $region61
    $region60: #{tpu_custom_call.1} parent=1 // pred_region
      %144 = dma.done [#allocation11], 8192
    $region61: #{tpu_custom_call.1} parent=1 // pred_fallthru
      _
    // Predicated region
    $region62: #{tpu_custom_call.1} parent=1 // pred_check
      _
    $region63: #{tpu_custom_call.1} parent=1 // pred_check_branch
      %146 = sbr.rel (0) target = $region65
    $region64: #{tpu_custom_call.1} parent=1 // pred_region
      %148 = dma.done [#allocation14], 16384
    $region65: #{tpu_custom_call.1} parent=1 // pred_fallthru
      _
    // Predicated region
    $region66: #{tpu_custom_call.1} parent=1 // pred_check
      _
    $region67: #{tpu_custom_call.1} parent=1 // pred_check_branch
      %150 = sbr.rel (0) target = $region69
    $region68: #{tpu_custom_call.1} parent=1 // pred_region
      %152 = dma.done [#allocation14], 64
    $region69: #{tpu_custom_call.1} parent=1 // pred_fallthru
      _
    // Predicated region
    $region70: #{tpu_custom_call.1} parent=1 // pred_check
      _
    $region71: #{tpu_custom_call.1} parent=1 // pred_check_branch
      %154 = sbr.rel (0) target = $region73
    $region72: #{tpu_custom_call.1} parent=1 // pred_region
      %156 = dma.done [#allocation17], 2048
    $region73: #{tpu_custom_call.1} parent=1 // pred_fallthru
      _
    %v157 = vld [vmem:[#allocation4] sm:$0xff]
    %v158 = vld [vmem:[#allocation10] sm:$0xff]
    %v159 = vld [vmem:[#allocation10 + $0x8] sm:$0xff]
    %v160 = vld [vmem:[#allocation10 + $0x10] sm:$0xff]
    %v161 = vld [vmem:[#allocation10 + $0x18] sm:$0xff]
    %v162 = vld [vmem:[#allocation10 + $0x20] sm:$0xff]
    %v163 = vld [vmem:[#allocation10 + $0x28] sm:$0xff]
    %v164 = vld [vmem:[#allocation10 + $0x30] sm:$0xff]
    %v165 = vld [vmem:[#allocation10 + $0x38] sm:$0xff]
    %v166 = vld [vmem:[#allocation10 + $0x40] sm:$0xff]
    %v167 = vld [vmem:[#allocation10 + $0x48] sm:$0xff]
    %v168 = vld [vmem:[#allocation10 + $0x50] sm:$0xff]
    %v169 = vld [vmem:[#allocation10 + $0x58] sm:$0xff]
    %v170 = vld [vmem:[#allocation10 + $0x60] sm:$0xff]
    %v171 = vld [vmem:[#allocation10 + $0x68] sm:$0xff]
    %v172 = vld [vmem:[#allocation10 + $0x70] sm:$0xff]
    %v173 = vld [vmem:[#allocation10 + $0x78] sm:$0xff]
    %v174 = vld [vmem:[#allocation10 + $0x80] sm:$0xff]
    %v175 = vld [vmem:[#allocation10 + $0x88] sm:$0xff]
    %v176 = vld [vmem:[#allocation10 + $0x90] sm:$0xff]
    %v177 = vld [vmem:[#allocation10 + $0x98] sm:$0xff]
    %v178 = vld [vmem:[#allocation10 + $0xa0] sm:$0xff]
    %v179 = vld [vmem:[#allocation10 + $0xa8] sm:$0xff]
    %v180 = vld [vmem:[#allocation10 + $0xb0] sm:$0xff]
    %v181 = vld [vmem:[#allocation10 + $0xb8] sm:$0xff]
    %v182 = vld [vmem:[#allocation10 + $0xc0] sm:$0xff]
    %v183 = vld [vmem:[#allocation10 + $0xc8] sm:$0xff]
    %v184 = vld [vmem:[#allocation10 + $0xd0] sm:$0xff]
    %v185 = vld [vmem:[#allocation10 + $0xd8] sm:$0xff]
    %v186 = vld [vmem:[#allocation10 + $0xe0] sm:$0xff]
    %v187 = vld [vmem:[#allocation10 + $0xe8] sm:$0xff]
    %v188 = vld [vmem:[#allocation10 + $0xf0] sm:$0xff]
    %v189 = vld [vmem:[#allocation10 + $0xf8] sm:$0xff]
    %v190 = vld [vmem:[#allocation10 + $0x100] sm:$0xff]
    %v191 = vld [vmem:[#allocation10 + $0x108] sm:$0xff]
    %v192 = vld [vmem:[#allocation10 + $0x110] sm:$0xff]
    %v193 = vld [vmem:[#allocation10 + $0x118] sm:$0xff]
    %v194 = vld [vmem:[#allocation10 + $0x120] sm:$0x3f]
    %v195 = vld [vmem:[#allocation10 + $0x128] sm:$0x3f]
    %v196 = vld [vmem:[#allocation10 + $0x130] sm:$0x3f]
    %v197 = vld [vmem:[#allocation10 + $0x138] sm:$0x3f]
    %v198 = vld [vmem:[%s5] sm:$0xf]
    %v200 = vperm.slane %v198, 0
    %v201 = vperm.slane %v198, 1
    %v202 = vperm.slane %v198, 2
    %v203 = vperm.slane %v198, 3
    %vm208 = vcmask 637952
    %v210 = vsel %vm208, %v157, 0
    %vm212 = vcmask 1045504
    %v214 = vsel %vm212, %v194, 0
    %v217 = vsel %vm212, %v195, 0
    %v220 = vsel %vm212, %v196, 0
    %v223 = vsel %vm212, %v197, 0
    %225 = vmatpush.msra.mxu0 0.0
    %226 = vmatpush.msra.mxu0 0.0
    %227 = vmatpush.msra.mxu0 0.0
    %228 = vmatpush.msra.mxu0 0.0
    %229 = vmatpush.msra.mxu0 0.0
    %230 = vmatpush.msra.mxu0 0.0
    %231 = vmatpush.msra.mxu0 %v214
    %232 = vmatpush.msra.mxu0 %v190
    %233 = vmatpush.msra.mxu0 %v186
    %234 = vmatpush.msra.mxu0 %v182
    %235 = vmatpush.msra.mxu0 %v178
    %236 = vmatpush.msra.mxu0 %v174
    %237 = vmatpush.msra.mxu0 %v170
    %238 = vmatpush.msra.mxu0 %v166
    %239 = vmatpush.msra.mxu0 %v162
    %240 = vmatpush.msra.mxu0 %v158
    %241 = vmatmul.f32.gmra.mxu0 %v210
    %v242 = vpop.f32.mrf.mxu0
    %v243 = vadd.f32 %v200, %v242
    %244 = vdwg.mxu0
    %245 = vmatpush.msra.mxu0 0.0
    %246 = vmatpush.msra.mxu0 0.0
    %247 = vmatpush.msra.mxu0 0.0
    %248 = vmatpush.msra.mxu0 0.0
    %249 = vmatpush.msra.mxu0 0.0
    %250 = vmatpush.msra.mxu0 0.0
    %251 = vmatpush.msra.mxu0 %v217
    %252 = vmatpush.msra.mxu0 %v191
    %253 = vmatpush.msra.mxu0 %v187
    %254 = vmatpush.msra.mxu0 %v183
    %255 = vmatpush.msra.mxu0 %v179
    %256 = vmatpush.msra.mxu0 %v175
    %257 = vmatpush.msra.mxu0 %v171
    %258 = vmatpush.msra.mxu0 %v167
    %259 = vmatpush.msra.mxu0 %v163
    %260 = vmatpush.msra.mxu0 %v159
    %261 = vmatmul.f32.gmra.mxu0 %v210
    %v262 = vpop.f32.mrf.mxu0
    %v263 = vadd.f32 %v201, %v262
    %264 = vdwg.mxu0
    %265 = vmatpush.msra.mxu0 0.0
    %266 = vmatpush.msra.mxu0 0.0
    %267 = vmatpush.msra.mxu0 0.0
    %268 = vmatpush.msra.mxu0 0.0
    %269 = vmatpush.msra.mxu0 0.0
    %270 = vmatpush.msra.mxu0 0.0
    %271 = vmatpush.msra.mxu0 %v220
    %272 = vmatpush.msra.mxu0 %v192
    %273 = vmatpush.msra.mxu0 %v188
    %274 = vmatpush.msra.mxu0 %v184
    %275 = vmatpush.msra.mxu0 %v180
    %276 = vmatpush.msra.mxu0 %v176
    %277 = vmatpush.msra.mxu0 %v172
    %278 = vmatpush.msra.mxu0 %v168
    %279 = vmatpush.msra.mxu0 %v164
    %280 = vmatpush.msra.mxu0 %v160
    %281 = vmatmul.f32.gmra.mxu0 %v210
    %v282 = vpop.f32.mrf.mxu0
    %v283 = vadd.f32 %v202, %v282
    %284 = vdwg.mxu0
    %285 = vmatpush.msra.mxu0 0.0
    %286 = vmatpush.msra.mxu0 0.0
    %287 = vmatpush.msra.mxu0 0.0
    %288 = vmatpush.msra.mxu0 0.0
    %289 = vmatpush.msra.mxu0 0.0
    %290 = vmatpush.msra.mxu0 0.0
    %291 = vmatpush.msra.mxu0 %v223
    %292 = vmatpush.msra.mxu0 %v193
    %293 = vmatpush.msra.mxu0 %v189
    %294 = vmatpush.msra.mxu0 %v185
    %295 = vmatpush.msra.mxu0 %v181
    %296 = vmatpush.msra.mxu0 %v177
    %297 = vmatpush.msra.mxu0 %v173
    %298 = vmatpush.msra.mxu0 %v169
    %299 = vmatpush.msra.mxu0 %v165
    %300 = vmatpush.msra.mxu0 %v161
    %301 = vmatmul.f32.gmra.mxu0 %v210
    %v302 = vpop.f32.mrf.mxu0
    %v303 = vadd.f32 %v203, %v302
    %304 = vdwg.mxu0
    %305 = vst [vmem:[#allocation2] sm:$0xff] %v243
    %306 = vst [vmem:[#allocation2 + $0x8] sm:$0xff] %v263
    %307 = vst [vmem:[#allocation2 + $0x10] sm:$0xff] %v283
    %308 = vst [vmem:[#allocation2 + $0x18] sm:$0xff] %v303
    %v309 = vld [vmem:[#allocation12] sm:$0xff]
    %v310 = vld [vmem:[#allocation12 + $0x8] sm:$0xff]
    %v311 = vld [vmem:[#allocation12 + $0x10] sm:$0xff]
    %v312 = vld [vmem:[#allocation12 + $0x18] sm:$0xff]
    %v313 = vld [vmem:[#allocation12 + $0x20] sm:$0xff]
    %v314 = vld [vmem:[#allocation12 + $0x28] sm:$0xff]
    %v315 = vld [vmem:[#allocation12 + $0x30] sm:$0xff]
    %v316 = vld [vmem:[#allocation12 + $0x38] sm:$0xff]
    %v317 = vld [vmem:[#allocation12 + $0x40] sm:$0xff]
    %v318 = vld [vmem:[#allocation12 + $0x48] sm:$0xff]
    %v319 = vld [vmem:[#allocation12 + $0x50] sm:$0xff]
    %v320 = vld [vmem:[#allocation12 + $0x58] sm:$0xff]
    %v321 = vld [vmem:[#allocation12 + $0x60] sm:$0xff]
    %v322 = vld [vmem:[#allocation12 + $0x68] sm:$0xff]
    %v323 = vld [vmem:[#allocation12 + $0x70] sm:$0xff]
    %v324 = vld [vmem:[#allocation12 + $0x78] sm:$0xff]
    %v325 = vld [vmem:[#allocation12 + $0x80] sm:$0xff]
    %v326 = vld [vmem:[#allocation12 + $0x88] sm:$0xff]
    %v327 = vld [vmem:[#allocation12 + $0x90] sm:$0xff]
    %v328 = vld [vmem:[#allocation12 + $0x98] sm:$0xff]
    %v329 = vld [vmem:[#allocation12 + $0xa0] sm:$0xff]
    %v330 = vld [vmem:[#allocation12 + $0xa8] sm:$0xff]
    %v331 = vld [vmem:[#allocation12 + $0xb0] sm:$0xff]
    %v332 = vld [vmem:[#allocation12 + $0xb8] sm:$0xff]
    %v333 = vld [vmem:[#allocation12 + $0xc0] sm:$0xff]
    %v334 = vld [vmem:[#allocation12 + $0xc8] sm:$0xff]
    %v335 = vld [vmem:[#allocation12 + $0xd0] sm:$0xff]
    %v336 = vld [vmem:[#allocation12 + $0xd8] sm:$0xff]
    %v337 = vld [vmem:[#allocation12 + $0xe0] sm:$0xff]
    %v338 = vld [vmem:[#allocation12 + $0xe8] sm:$0xff]
    %v339 = vld [vmem:[#allocation12 + $0xf0] sm:$0xff]
    %v340 = vld [vmem:[#allocation12 + $0xf8] sm:$0xff]
    %v341 = vld [vmem:[#allocation12 + $0x100] sm:$0xff]
    %v342 = vld [vmem:[#allocation12 + $0x108] sm:$0xff]
    %v343 = vld [vmem:[#allocation12 + $0x110] sm:$0xff]
    %v344 = vld [vmem:[#allocation12 + $0x118] sm:$0xff]
    %v345 = vld [vmem:[#allocation12 + $0x120] sm:$0xff]
    %v346 = vld [vmem:[#allocation12 + $0x128] sm:$0xff]
    %v347 = vld [vmem:[#allocation12 + $0x130] sm:$0xff]
    %v348 = vld [vmem:[#allocation12 + $0x138] sm:$0xff]
    %v349 = vld [vmem:[#allocation12 + $0x140] sm:$0xff]
    %v350 = vld [vmem:[#allocation12 + $0x148] sm:$0xff]
    %v351 = vld [vmem:[#allocation12 + $0x150] sm:$0xff]
    %v352 = vld [vmem:[#allocation12 + $0x158] sm:$0xff]
    %v353 = vld [vmem:[#allocation12 + $0x160] sm:$0xff]
    %v354 = vld [vmem:[#allocation12 + $0x168] sm:$0xff]
    %v355 = vld [vmem:[#allocation12 + $0x170] sm:$0xff]
    %v356 = vld [vmem:[#allocation12 + $0x178] sm:$0xff]
    %v357 = vld [vmem:[#allocation12 + $0x180] sm:$0xff]
    %v358 = vld [vmem:[#allocation12 + $0x188] sm:$0xff]
    %v359 = vld [vmem:[#allocation12 + $0x190] sm:$0xff]
    %v360 = vld [vmem:[#allocation12 + $0x198] sm:$0xff]
    %v361 = vld [vmem:[#allocation12 + $0x1a0] sm:$0xff]
    %v362 = vld [vmem:[#allocation12 + $0x1a8] sm:$0xff]
    %v363 = vld [vmem:[#allocation12 + $0x1b0] sm:$0xff]
    %v364 = vld [vmem:[#allocation12 + $0x1b8] sm:$0xff]
    %v365 = vld [vmem:[#allocation12 + $0x1c0] sm:$0xff]
    %v366 = vld [vmem:[#allocation12 + $0x1c8] sm:$0xff]
    %v367 = vld [vmem:[#allocation12 + $0x1d0] sm:$0xff]
    %v368 = vld [vmem:[#allocation12 + $0x1d8] sm:$0xff]
    %v369 = vld [vmem:[#allocation12 + $0x1e0] sm:$0xff]
    %v370 = vld [vmem:[#allocation12 + $0x1e8] sm:$0xff]
    %v371 = vld [vmem:[#allocation12 + $0x1f0] sm:$0xff]
    %v372 = vld [vmem:[#allocation12 + $0x1f8] sm:$0xff]
    %v373 = vld [vmem:[#allocation13] sm:$0xff]
    %v374 = vld [vmem:[#allocation13 + $0x8] sm:$0xff]
    %v375 = vld [vmem:[#allocation13 + $0x10] sm:$0xff]
    %v376 = vld [vmem:[#allocation13 + $0x18] sm:$0xff]
    %v377 = vld [vmem:[#allocation13 + $0x20] sm:$0xff]
    %v378 = vld [vmem:[#allocation13 + $0x28] sm:$0xff]
    %v379 = vld [vmem:[#allocation13 + $0x30] sm:$0xff]
    %v380 = vld [vmem:[#allocation13 + $0x38] sm:$0xff]
    %v381 = vld [vmem:[#allocation13 + $0x40] sm:$0xff]
    %v382 = vld [vmem:[#allocation13 + $0x48] sm:$0xff]
    %v383 = vld [vmem:[#allocation13 + $0x50] sm:$0xff]
    %v384 = vld [vmem:[#allocation13 + $0x58] sm:$0xff]
    %v385 = vld [vmem:[#allocation13 + $0x60] sm:$0xff]
    %v386 = vld [vmem:[#allocation13 + $0x68] sm:$0xff]
    %v387 = vld [vmem:[#allocation13 + $0x70] sm:$0xff]
    %v388 = vld [vmem:[#allocation13 + $0x78] sm:$0xff]
    %v389 = vld [vmem:[#allocation13 + $0x80] sm:$0xff]
    %v390 = vld [vmem:[#allocation13 + $0x88] sm:$0xff]
    %v391 = vld [vmem:[#allocation13 + $0x90] sm:$0xff]
    %v392 = vld [vmem:[#allocation13 + $0x98] sm:$0xff]
    %v393 = vld [vmem:[#allocation13 + $0xa0] sm:$0xff]
    %v394 = vld [vmem:[#allocation13 + $0xa8] sm:$0xff]
    %v395 = vld [vmem:[#allocation13 + $0xb0] sm:$0xff]
    %v396 = vld [vmem:[#allocation13 + $0xb8] sm:$0xff]
    %v397 = vld [vmem:[#allocation13 + $0xc0] sm:$0xff]
    %v398 = vld [vmem:[#allocation13 + $0xc8] sm:$0xff]
    %v399 = vld [vmem:[#allocation13 + $0xd0] sm:$0xff]
    %v400 = vld [vmem:[#allocation13 + $0xd8] sm:$0xff]
    %v401 = vld [vmem:[#allocation13 + $0xe0] sm:$0xff]
    %v402 = vld [vmem:[#allocation13 + $0xe8] sm:$0xff]
    %v403 = vld [vmem:[#allocation13 + $0xf0] sm:$0xff]
    %v404 = vld [vmem:[#allocation13 + $0xf8] sm:$0xff]
    %v405 = vld [vmem:[#allocation13 + $0x100] sm:$0xff]
    %v406 = vld [vmem:[#allocation13 + $0x108] sm:$0xff]
    %v407 = vld [vmem:[#allocation13 + $0x110] sm:$0xff]
    %v408 = vld [vmem:[#allocation13 + $0x118] sm:$0xff]
    %v409 = vld [vmem:[#allocation13 + $0x120] sm:$0xff]
    %v410 = vld [vmem:[#allocation13 + $0x128] sm:$0xff]
    %v411 = vld [vmem:[#allocation13 + $0x130] sm:$0xff]
    %v412 = vld [vmem:[#allocation13 + $0x138] sm:$0xff]
    %v413 = vld [vmem:[#allocation13 + $0x140] sm:$0xff]
    %v414 = vld [vmem:[#allocation13 + $0x148] sm:$0xff]
    %v415 = vld [vmem:[#allocation13 + $0x150] sm:$0xff]
    %v416 = vld [vmem:[#allocation13 + $0x158] sm:$0xff]
    %v417 = vld [vmem:[#allocation13 + $0x160] sm:$0xff]
    %v418 = vld [vmem:[#allocation13 + $0x168] sm:$0xff]
    %v419 = vld [vmem:[#allocation13 + $0x170] sm:$0xff]
    %v420 = vld [vmem:[#allocation13 + $0x178] sm:$0xff]
    %v421 = vld [vmem:[#allocation13 + $0x180] sm:$0xff]
    %v422 = vld [vmem:[#allocation13 + $0x188] sm:$0xff]
    %v423 = vld [vmem:[#allocation13 + $0x190] sm:$0xff]
    %v424 = vld [vmem:[#allocation13 + $0x198] sm:$0xff]
    %v425 = vld [vmem:[#allocation13 + $0x1a0] sm:$0xff]
    %v426 = vld [vmem:[#allocation13 + $0x1a8] sm:$0xff]
    %v427 = vld [vmem:[#allocation13 + $0x1b0] sm:$0xff]
    %v428 = vld [vmem:[#allocation13 + $0x1b8] sm:$0xff]
    %v429 = vld [vmem:[#allocation13 + $0x1c0] sm:$0xff]
    %v430 = vld [vmem:[#allocation13 + $0x1c8] sm:$0xff]
    %v431 = vld [vmem:[#allocation13 + $0x1d0] sm:$0xff]
    %v432 = vld [vmem:[#allocation13 + $0x1d8] sm:$0xff]
    %v433 = vld [vmem:[#allocation13 + $0x1e0] sm:$0xff]
    %v434 = vld [vmem:[#allocation13 + $0x1e8] sm:$0xff]
    %v435 = vld [vmem:[#allocation13 + $0x1f0] sm:$0xff]
    %v436 = vld [vmem:[#allocation13 + $0x1f8] sm:$0xff]
    %v437 = vld [vmem:[#allocation13 + $0x200] sm:$0xff]
    %v438 = vld [vmem:[#allocation13 + $0x208] sm:$0xff]
    %v439 = vld [vmem:[#allocation13 + $0x210] sm:$0xff]
    %v440 = vld [vmem:[#allocation13 + $0x218] sm:$0xff]
    %v441 = vld [vmem:[#allocation13 + $0x220] sm:$0xff]
    %v442 = vld [vmem:[#allocation13 + $0x228] sm:$0xff]
    %v443 = vld [vmem:[#allocation13 + $0x230] sm:$0xff]
    %v444 = vld [vmem:[#allocation13 + $0x238] sm:$0xff]
    %v445 = vld [vmem:[#allocation13 + $0x240] sm:$0xff]
    %v446 = vld [vmem:[#allocation13 + $0x248] sm:$0xff]
    %v447 = vld [vmem:[#allocation13 + $0x250] sm:$0xff]
    %v448 = vld [vmem:[#allocation13 + $0x258] sm:$0xff]
    %v449 = vld [vmem:[#allocation13 + $0x260] sm:$0xff]
    %v450 = vld [vmem:[#allocation13 + $0x268] sm:$0xff]
    %v451 = vld [vmem:[#allocation13 + $0x270] sm:$0xff]
    %v452 = vld [vmem:[#allocation13 + $0x278] sm:$0xff]
    %v453 = vld [vmem:[#allocation13 + $0x280] sm:$0xff]
    %v454 = vld [vmem:[#allocation13 + $0x288] sm:$0xff]
    %v455 = vld [vmem:[#allocation13 + $0x290] sm:$0xff]
    %v456 = vld [vmem:[#allocation13 + $0x298] sm:$0xff]
    %v457 = vld [vmem:[#allocation13 + $0x2a0] sm:$0xff]
    %v458 = vld [vmem:[#allocation13 + $0x2a8] sm:$0xff]
    %v459 = vld [vmem:[#allocation13 + $0x2b0] sm:$0xff]
    %v460 = vld [vmem:[#allocation13 + $0x2b8] sm:$0xff]
    %v461 = vld [vmem:[#allocation13 + $0x2c0] sm:$0xff]
    %v462 = vld [vmem:[#allocation13 + $0x2c8] sm:$0xff]
    %v463 = vld [vmem:[#allocation13 + $0x2d0] sm:$0xff]
    %v464 = vld [vmem:[#allocation13 + $0x2d8] sm:$0xff]
    %v465 = vld [vmem:[#allocation13 + $0x2e0] sm:$0xff]
    %v466 = vld [vmem:[#allocation13 + $0x2e8] sm:$0xff]
    %v467 = vld [vmem:[#allocation13 + $0x2f0] sm:$0xff]
    %v468 = vld [vmem:[#allocation13 + $0x2f8] sm:$0xff]
    %v469 = vld [vmem:[#allocation13 + $0x300] sm:$0xff]
    %v470 = vld [vmem:[#allocation13 + $0x308] sm:$0xff]
    %v471 = vld [vmem:[#allocation13 + $0x310] sm:$0xff]
    %v472 = vld [vmem:[#allocation13 + $0x318] sm:$0xff]
    %v473 = vld [vmem:[#allocation13 + $0x320] sm:$0xff]
    %v474 = vld [vmem:[#allocation13 + $0x328] sm:$0xff]
    %v475 = vld [vmem:[#allocation13 + $0x330] sm:$0xff]
    %v476 = vld [vmem:[#allocation13 + $0x338] sm:$0xff]
    %v477 = vld [vmem:[#allocation13 + $0x340] sm:$0xff]
    %v478 = vld [vmem:[#allocation13 + $0x348] sm:$0xff]
    %v479 = vld [vmem:[#allocation13 + $0x350] sm:$0xff]
    %v480 = vld [vmem:[#allocation13 + $0x358] sm:$0xff]
    %v481 = vld [vmem:[#allocation13 + $0x360] sm:$0xff]
    %v482 = vld [vmem:[#allocation13 + $0x368] sm:$0xff]
    %v483 = vld [vmem:[#allocation13 + $0x370] sm:$0xff]
    %v484 = vld [vmem:[#allocation13 + $0x378] sm:$0xff]
    %v485 = vld [vmem:[#allocation13 + $0x380] sm:$0xff]
    %v486 = vld [vmem:[#allocation13 + $0x388] sm:$0xff]
    %v487 = vld [vmem:[#allocation13 + $0x390] sm:$0xff]
    %v488 = vld [vmem:[#allocation13 + $0x398] sm:$0xff]
    %v489 = vld [vmem:[#allocation13 + $0x3a0] sm:$0xff]
    %v490 = vld [vmem:[#allocation13 + $0x3a8] sm:$0xff]
    %v491 = vld [vmem:[#allocation13 + $0x3b0] sm:$0xff]
    %v492 = vld [vmem:[#allocation13 + $0x3b8] sm:$0xff]
    %v493 = vld [vmem:[#allocation13 + $0x3c0] sm:$0xff]
    %v494 = vld [vmem:[#allocation13 + $0x3c8] sm:$0xff]
    %v495 = vld [vmem:[#allocation13 + $0x3d0] sm:$0xff]
    %v496 = vld [vmem:[#allocation13 + $0x3d8] sm:$0xff]
    %v497 = vld [vmem:[#allocation13 + $0x3e0] sm:$0xff]
    %v498 = vld [vmem:[#allocation13 + $0x3e8] sm:$0xff]
    %v499 = vld [vmem:[#allocation13 + $0x3f0] sm:$0xff]
    %v500 = vld [vmem:[#allocation13 + $0x3f8] sm:$0xff]
    %v501 = vld [vmem:[#allocation15] sm:$0xf]
    %v502 = vld [vmem:[#allocation7] sm:$0x1]
    %v503 = vld [vmem:[#allocation9] sm:$0x1]
    %v504 = vld [vmem:[#allocation7 + $0x1] sm:$0x1]
    %v505 = vld [vmem:[#allocation9 + $0x1] sm:$0x1]
    %v506 = vld [vmem:[#allocation2] ss:$8 sm:$0xf]
    %507 = vmatpush.msra.mxu0 %v369
    %508 = vmatpush.msra.mxu0 %v365
    %509 = vmatpush.msra.mxu0 %v361
    %510 = vmatpush.msra.mxu0 %v357
    %511 = vmatpush.msra.mxu0 %v353
    %512 = vmatpush.msra.mxu0 %v349
    %513 = vmatpush.msra.mxu0 %v345
    %514 = vmatpush.msra.mxu0 %v341
    %515 = vmatpush.msra.mxu0 %v337
    %516 = vmatpush.msra.mxu0 %v333
    %517 = vmatpush.msra.mxu0 %v329
    %518 = vmatpush.msra.mxu0 %v325
    %519 = vmatpush.msra.mxu0 %v321
    %520 = vmatpush.msra.mxu0 %v317
    %521 = vmatpush.msra.mxu0 %v313
    %522 = vmatpush.msra.mxu0 %v309
    %523 = vmatmul.f32.gmra.mxu0 %v502
    %v524 = vpop.f32.mrf.mxu0
    %v525 = vadd.f32 0.0, %v524
    %526 = vdwg.mxu0
    %527 = vmatpush.msra.mxu0 %v370
    %528 = vmatpush.msra.mxu0 %v366
    %529 = vmatpush.msra.mxu0 %v362
    %530 = vmatpush.msra.mxu0 %v358
    %531 = vmatpush.msra.mxu0 %v354
    %532 = vmatpush.msra.mxu0 %v350
    %533 = vmatpush.msra.mxu0 %v346
    %534 = vmatpush.msra.mxu0 %v342
    %535 = vmatpush.msra.mxu0 %v338
    %536 = vmatpush.msra.mxu0 %v334
    %537 = vmatpush.msra.mxu0 %v330
    %538 = vmatpush.msra.mxu0 %v326
    %539 = vmatpush.msra.mxu0 %v322
    %540 = vmatpush.msra.mxu0 %v318
    %541 = vmatpush.msra.mxu0 %v314
    %542 = vmatpush.msra.mxu0 %v310
    %543 = vmatmul.f32.gmra.mxu0 %v502
    %v544 = vpop.f32.mrf.mxu0
    %v545 = vadd.f32 0.0, %v544
    %546 = vdwg.mxu0
    %547 = vmatpush.msra.mxu0 %v371
    %548 = vmatpush.msra.mxu0 %v367
    %549 = vmatpush.msra.mxu0 %v363
    %550 = vmatpush.msra.mxu0 %v359
    %551 = vmatpush.msra.mxu0 %v355
    %552 = vmatpush.msra.mxu0 %v351
    %553 = vmatpush.msra.mxu0 %v347
    %554 = vmatpush.msra.mxu0 %v343
    %555 = vmatpush.msra.mxu0 %v339
    %556 = vmatpush.msra.mxu0 %v335
    %557 = vmatpush.msra.mxu0 %v331
    %558 = vmatpush.msra.mxu0 %v327
    %559 = vmatpush.msra.mxu0 %v323
    %560 = vmatpush.msra.mxu0 %v319
    %561 = vmatpush.msra.mxu0 %v315
    %562 = vmatpush.msra.mxu0 %v311
    %563 = vmatmul.f32.gmra.mxu0 %v502
    %v564 = vpop.f32.mrf.mxu0
    %v565 = vadd.f32 0.0, %v564
    %566 = vdwg.mxu0
    %567 = vmatpush.msra.mxu0 %v372
    %568 = vmatpush.msra.mxu0 %v368
    %569 = vmatpush.msra.mxu0 %v364
    %570 = vmatpush.msra.mxu0 %v360
    %571 = vmatpush.msra.mxu0 %v356
    %572 = vmatpush.msra.mxu0 %v352
    %573 = vmatpush.msra.mxu0 %v348
    %574 = vmatpush.msra.mxu0 %v344
    %575 = vmatpush.msra.mxu0 %v340
    %576 = vmatpush.msra.mxu0 %v336
    %577 = vmatpush.msra.mxu0 %v332
    %578 = vmatpush.msra.mxu0 %v328
    %579 = vmatpush.msra.mxu0 %v324
    %580 = vmatpush.msra.mxu0 %v320
    %581 = vmatpush.msra.mxu0 %v316
    %582 = vmatpush.msra.mxu0 %v312
    %583 = vmatmul.f32.gmra.mxu0 %v502
    %v584 = vpop.f32.mrf.mxu0
    %v585 = vadd.f32 0.0, %v584
    %586 = vdwg.mxu0
    %v591 = vrot.slane %v545, 7
    %v592 = vrot.slane %v565, 6
    %v593 = vrot.slane %v585, 5
    %vm594 = vcmask 1040384
    %v595 = vsel %vm594, %v525, %v591
    %vm596 = vcmask 1042434
    %v597 = vsel %vm596, %v592, %v593
    %vm598 = vcmask 1041408
    %v599 = vsel %vm598, %v595, %v597
    %v601 = vadd.f32 %v506, %v599
    %v602 = vxor.u32 %v601, 2147483648
    %v603 = vmul.f32 %v602, 1.442695
    %v604 = vpow.pop %v603
    %v605 = vadd.f32 %v604, 1.0
    %v606 = vrcp.pop %v605
    %v607 = vmul.f32 %v605, %v606
    %v608 = vsub.f32 1.0, %v607
    %v609 = vmul.f32 %v606, %v608
    %v610 = vadd.f32 %v606, %v609
    %vm611 = vweird.f32 %v605
    %vm612 = vweird.f32 %v606
    %vm613 = vmor %vm611, %vm612
    %v614 = vsel %vm613, %v606, %v610
    %v615 = vand.u32 2147483647, %v605
    %vm616 = vcmp.eq.f32.partialorder %v615, 8.507059e+37
    %v617 = vand.u32 %v605, 2147483648
    %v618 = vor.u32 1.1754944e-38, %v617
    %v619 = vsel %vm616, %v618, %v614
    %v620 = vmul.f32 1.0, %v619
    %v622 = vrot.slane %v601, 1
    %v624 = vxor.u32 %v622, 2147483648
    %v625 = vmul.f32 %v624, 1.442695
    %v626 = vpow.pop %v625
    %v627 = vadd.f32 %v626, 1.0
    %v628 = vrcp.pop %v627
    %v629 = vmul.f32 %v627, %v628
    %v630 = vsub.f32 1.0, %v629
    %v631 = vmul.f32 %v628, %v630
    %v632 = vadd.f32 %v628, %v631
    %vm633 = vweird.f32 %v627
    %vm634 = vweird.f32 %v628
    %vm635 = vmor %vm633, %vm634
    %v636 = vsel %vm635, %v628, %v632
    %v637 = vand.u32 2147483647, %v627
    %vm638 = vcmp.eq.f32.partialorder %v637, 8.507059e+37
    %v639 = vand.u32 %v627, 2147483648
    %v640 = vor.u32 1.1754944e-38, %v639
    %v641 = vsel %vm638, %v640, %v636
    %v642 = vmul.f32 1.0, %v641
    %v643 = vrot.slane %v601, 2
    %v645 = vtanh.pop %v643
    %v646 = vrot.slane %v601, 3
    %v648 = vxor.u32 %v646, 2147483648
    %v649 = vmul.f32 %v648, 1.442695
    %v650 = vpow.pop %v649
    %v651 = vadd.f32 %v650, 1.0
    %v652 = vrcp.pop %v651
    %v653 = vmul.f32 %v651, %v652
    %v654 = vsub.f32 1.0, %v653
    %v655 = vmul.f32 %v652, %v654
    %v656 = vadd.f32 %v652, %v655
    %vm657 = vweird.f32 %v651
    %vm658 = vweird.f32 %v652
    %vm659 = vmor %vm657, %vm658
    %v660 = vsel %vm659, %v652, %v656
    %v661 = vand.u32 2147483647, %v651
    %vm662 = vcmp.eq.f32.partialorder %v661, 8.507059e+37
    %v663 = vand.u32 %v651, 2147483648
    %v664 = vor.u32 1.1754944e-38, %v663
    %v665 = vsel %vm662, %v664, %v660
    %v666 = vmul.f32 1.0, %v665
    %v667 = vmul.f32 %v642, %v503
    %v668 = vmul.f32 %v620, %v645
    %v669 = vadd.f32 %v667, %v668
    %v670 = vtanh.pop %v669
    %v671 = vmul.f32 %v666, %v670
    %v673 = vperm.slane %v501, 0
    %v674 = vperm.slane %v501, 1
    %v675 = vperm.slane %v501, 2
    %v676 = vperm.slane %v501, 3
    %681 = vmatpush.msra.mxu0 %v433
    %682 = vmatpush.msra.mxu0 %v429
    %683 = vmatpush.msra.mxu0 %v425
    %684 = vmatpush.msra.mxu0 %v421
    %685 = vmatpush.msra.mxu0 %v417
    %686 = vmatpush.msra.mxu0 %v413
    %687 = vmatpush.msra.mxu0 %v409
    %688 = vmatpush.msra.mxu0 %v405
    %689 = vmatpush.msra.mxu0 %v401
    %690 = vmatpush.msra.mxu0 %v397
    %691 = vmatpush.msra.mxu0 %v393
    %692 = vmatpush.msra.mxu0 %v389
    %693 = vmatpush.msra.mxu0 %v385
    %694 = vmatpush.msra.mxu0 %v381
    %695 = vmatpush.msra.mxu0 %v377
    %696 = vmatpush.msra.mxu0 %v373
    %697 = vmatmul.f32.gmra.mxu0 %v671
    %v698 = vpop.f32.mrf.mxu0
    %v699 = vadd.f32 %v673, %v698
    %700 = vdwg.mxu0
    %701 = vmatpush.msra.mxu0 %v497
    %702 = vmatpush.msra.mxu0 %v493
    %703 = vmatpush.msra.mxu0 %v489
    %704 = vmatpush.msra.mxu0 %v485
    %705 = vmatpush.msra.mxu0 %v481
    %706 = vmatpush.msra.mxu0 %v477
    %707 = vmatpush.msra.mxu0 %v473
    %708 = vmatpush.msra.mxu0 %v469
    %709 = vmatpush.msra.mxu0 %v465
    %710 = vmatpush.msra.mxu0 %v461
    %711 = vmatpush.msra.mxu0 %v457
    %712 = vmatpush.msra.mxu0 %v453
    %713 = vmatpush.msra.mxu0 %v449
    %714 = vmatpush.msra.mxu0 %v445
    %715 = vmatpush.msra.mxu0 %v441
    %716 = vmatpush.msra.mxu0 %v437
    %717 = vmatmul.f32.gmra.mxu0 %v504
    %v718 = vpop.f32.mrf.mxu0
    %v719 = vadd.f32 %v699, %v718
    %720 = vdwg.mxu0
    %721 = vmatpush.msra.mxu0 %v434
    %722 = vmatpush.msra.mxu0 %v430
    %723 = vmatpush.msra.mxu0 %v426
    %724 = vmatpush.msra.mxu0 %v422
    %725 = vmatpush.msra.mxu0 %v418
    %726 = vmatpush.msra.mxu0 %v414
    %727 = vmatpush.msra.mxu0 %v410
    %728 = vmatpush.msra.mxu0 %v406
    %729 = vmatpush.msra.mxu0 %v402
    %730 = vmatpush.msra.mxu0 %v398
    %731 = vmatpush.msra.mxu0 %v394
    %732 = vmatpush.msra.mxu0 %v390
    %733 = vmatpush.msra.mxu0 %v386
    %734 = vmatpush.msra.mxu0 %v382
    %735 = vmatpush.msra.mxu0 %v378
    %736 = vmatpush.msra.mxu0 %v374
    %737 = vmatmul.f32.gmra.mxu0 %v671
    %v738 = vpop.f32.mrf.mxu0
    %v739 = vadd.f32 %v674, %v738
    %740 = vdwg.mxu0
    %741 = vmatpush.msra.mxu0 %v498
    %742 = vmatpush.msra.mxu0 %v494
    %743 = vmatpush.msra.mxu0 %v490
    %744 = vmatpush.msra.mxu0 %v486
    %745 = vmatpush.msra.mxu0 %v482
    %746 = vmatpush.msra.mxu0 %v478
    %747 = vmatpush.msra.mxu0 %v474
    %748 = vmatpush.msra.mxu0 %v470
    %749 = vmatpush.msra.mxu0 %v466
    %750 = vmatpush.msra.mxu0 %v462
    %751 = vmatpush.msra.mxu0 %v458
    %752 = vmatpush.msra.mxu0 %v454
    %753 = vmatpush.msra.mxu0 %v450
    %754 = vmatpush.msra.mxu0 %v446
    %755 = vmatpush.msra.mxu0 %v442
    %756 = vmatpush.msra.mxu0 %v438
    %757 = vmatmul.f32.gmra.mxu0 %v504
    %v758 = vpop.f32.mrf.mxu0
    %v759 = vadd.f32 %v739, %v758
    %760 = vdwg.mxu0
    %761 = vmatpush.msra.mxu0 %v435
    %762 = vmatpush.msra.mxu0 %v431
    %763 = vmatpush.msra.mxu0 %v427
    %764 = vmatpush.msra.mxu0 %v423
    %765 = vmatpush.msra.mxu0 %v419
    %766 = vmatpush.msra.mxu0 %v415
    %767 = vmatpush.msra.mxu0 %v411
    %768 = vmatpush.msra.mxu0 %v407
    %769 = vmatpush.msra.mxu0 %v403
    %770 = vmatpush.msra.mxu0 %v399
    %771 = vmatpush.msra.mxu0 %v395
    %772 = vmatpush.msra.mxu0 %v391
    %773 = vmatpush.msra.mxu0 %v387
    %774 = vmatpush.msra.mxu0 %v383
    %775 = vmatpush.msra.mxu0 %v379
    %776 = vmatpush.msra.mxu0 %v375
    %777 = vmatmul.f32.gmra.mxu0 %v671
    %v778 = vpop.f32.mrf.mxu0
    %v779 = vadd.f32 %v675, %v778
    %780 = vdwg.mxu0
    %781 = vmatpush.msra.mxu0 %v499
    %782 = vmatpush.msra.mxu0 %v495
    %783 = vmatpush.msra.mxu0 %v491
    %784 = vmatpush.msra.mxu0 %v487
    %785 = vmatpush.msra.mxu0 %v483
    %786 = vmatpush.msra.mxu0 %v479
    %787 = vmatpush.msra.mxu0 %v475
    %788 = vmatpush.msra.mxu0 %v471
    %789 = vmatpush.msra.mxu0 %v467
    %790 = vmatpush.msra.mxu0 %v463
    %791 = vmatpush.msra.mxu0 %v459
    %792 = vmatpush.msra.mxu0 %v455
    %793 = vmatpush.msra.mxu0 %v451
    %794 = vmatpush.msra.mxu0 %v447
    %795 = vmatpush.msra.mxu0 %v443
    %796 = vmatpush.msra.mxu0 %v439
    %797 = vmatmul.f32.gmra.mxu0 %v504
    %v798 = vpop.f32.mrf.mxu0
    %v799 = vadd.f32 %v779, %v798
    %800 = vdwg.mxu0
    %801 = vmatpush.msra.mxu0 %v436
    %802 = vmatpush.msra.mxu0 %v432
    %803 = vmatpush.msra.mxu0 %v428
    %804 = vmatpush.msra.mxu0 %v424
    %805 = vmatpush.msra.mxu0 %v420
    %806 = vmatpush.msra.mxu0 %v416
    %807 = vmatpush.msra.mxu0 %v412
    %808 = vmatpush.msra.mxu0 %v408
    %809 = vmatpush.msra.mxu0 %v404
    %810 = vmatpush.msra.mxu0 %v400
    %811 = vmatpush.msra.mxu0 %v396
    %812 = vmatpush.msra.mxu0 %v392
    %813 = vmatpush.msra.mxu0 %v388
    %814 = vmatpush.msra.mxu0 %v384
    %815 = vmatpush.msra.mxu0 %v380
    %816 = vmatpush.msra.mxu0 %v376
    %817 = vmatmul.f32.gmra.mxu0 %v671
    %v818 = vpop.f32.mrf.mxu0
    %v819 = vadd.f32 %v676, %v818
    %820 = vdwg.mxu0
    %821 = vmatpush.msra.mxu0 %v500
    %822 = vmatpush.msra.mxu0 %v496
    %823 = vmatpush.msra.mxu0 %v492
    %824 = vmatpush.msra.mxu0 %v488
    %825 = vmatpush.msra.mxu0 %v484
    %826 = vmatpush.msra.mxu0 %v480
    %827 = vmatpush.msra.mxu0 %v476
    %828 = vmatpush.msra.mxu0 %v472
    %829 = vmatpush.msra.mxu0 %v468
    %830 = vmatpush.msra.mxu0 %v464
    %831 = vmatpush.msra.mxu0 %v460
    %832 = vmatpush.msra.mxu0 %v456
    %833 = vmatpush.msra.mxu0 %v452
    %834 = vmatpush.msra.mxu0 %v448
    %835 = vmatpush.msra.mxu0 %v444
    %836 = vmatpush.msra.mxu0 %v440
    %837 = vmatmul.f32.gmra.mxu0 %v504
    %v838 = vpop.f32.mrf.mxu0
    %v839 = vadd.f32 %v819, %v838
    %840 = vdwg.mxu0
    %v841 = vxor.u32 %v719, 2147483648
    %v842 = vmul.f32 %v841, 1.442695
    %v843 = vpow.pop %v842
    %v844 = vadd.f32 %v843, 1.0
    %v845 = vrcp.pop %v844
    %v846 = vmul.f32 %v844, %v845
    %v847 = vsub.f32 1.0, %v846
    %v848 = vmul.f32 %v845, %v847
    %v849 = vadd.f32 %v845, %v848
    %vm850 = vweird.f32 %v844
    %vm851 = vweird.f32 %v845
    %vm852 = vmor %vm850, %vm851
    %v853 = vsel %vm852, %v845, %v849
    %v854 = vand.u32 2147483647, %v844
    %vm855 = vcmp.eq.f32.partialorder %v854, 8.507059e+37
    %v856 = vand.u32 %v844, 2147483648
    %v857 = vor.u32 1.1754944e-38, %v856
    %v858 = vsel %vm855, %v857, %v853
    %v859 = vmul.f32 1.0, %v858
    %v860 = vxor.u32 %v759, 2147483648
    %v861 = vmul.f32 %v860, 1.442695
    %v862 = vpow.pop %v861
    %v863 = vadd.f32 %v862, 1.0
    %v864 = vrcp.pop %v863
    %v865 = vmul.f32 %v863, %v864
    %v866 = vsub.f32 1.0, %v865
    %v867 = vmul.f32 %v864, %v866
    %v868 = vadd.f32 %v864, %v867
    %vm869 = vweird.f32 %v863
    %vm870 = vweird.f32 %v864
    %vm871 = vmor %vm869, %vm870
    %v872 = vsel %vm871, %v864, %v868
    %v873 = vand.u32 2147483647, %v863
    %vm874 = vcmp.eq.f32.partialorder %v873, 8.507059e+37
    %v875 = vand.u32 %v863, 2147483648
    %v876 = vor.u32 1.1754944e-38, %v875
    %v877 = vsel %vm874, %v876, %v872
    %v878 = vmul.f32 1.0, %v877
    %v879 = vtanh.pop %v799
    %v880 = vxor.u32 %v839, 2147483648
    %v881 = vmul.f32 %v880, 1.442695
    %v882 = vpow.pop %v881
    %v883 = vadd.f32 %v882, 1.0
    %v884 = vrcp.pop %v883
    %v885 = vmul.f32 %v883, %v884
    %v886 = vsub.f32 1.0, %v885
    %v887 = vmul.f32 %v884, %v886
    %v888 = vadd.f32 %v884, %v887
    %vm889 = vweird.f32 %v883
    %vm890 = vweird.f32 %v884
    %vm891 = vmor %vm889, %vm890
    %v892 = vsel %vm891, %v884, %v888
    %v893 = vand.u32 2147483647, %v883
    %vm894 = vcmp.eq.f32.partialorder %v893, 8.507059e+37
    %v895 = vand.u32 %v883, 2147483648
    %v896 = vor.u32 1.1754944e-38, %v895
    %v897 = vsel %vm894, %v896, %v892
    %v898 = vmul.f32 1.0, %v897
    %v899 = vmul.f32 %v878, %v505
    %v900 = vmul.f32 %v859, %v879
    %v901 = vadd.f32 %v899, %v900
    %v902 = vtanh.pop %v901
    %v903 = vmul.f32 %v898, %v902
    %904 = vst [vmem:[#allocation3] sm:$0x1] %v903
    %s905 = scalar_lea.vmem [#allocation2], 1
    %v906 = vld [vmem:[%s905] ss:$8 sm:$0xf]
    %907 = vmatpush.msra.mxu0 %v369
    %908 = vmatpush.msra.mxu0 %v365
    %909 = vmatpush.msra.mxu0 %v361
    %910 = vmatpush.msra.mxu0 %v357
    %911 = vmatpush.msra.mxu0 %v353
    %912 = vmatpush.msra.mxu0 %v349
    %913 = vmatpush.msra.mxu0 %v345
    %914 = vmatpush.msra.mxu0 %v341
    %915 = vmatpush.msra.mxu0 %v337
    %916 = vmatpush.msra.mxu0 %v333
    %917 = vmatpush.msra.mxu0 %v329
    %918 = vmatpush.msra.mxu0 %v325
    %919 = vmatpush.msra.mxu0 %v321
    %920 = vmatpush.msra.mxu0 %v317
    %921 = vmatpush.msra.mxu0 %v313
    %922 = vmatpush.msra.mxu0 %v309
    %923 = vmatmul.f32.gmra.mxu0 %v671
    %v924 = vpop.f32.mrf.mxu0
    %v925 = vadd.f32 0.0, %v924
    %926 = vdwg.mxu0
    %927 = vmatpush.msra.mxu0 %v370
    %928 = vmatpush.msra.mxu0 %v366
    %929 = vmatpush.msra.mxu0 %v362
    %930 = vmatpush.msra.mxu0 %v358
    %931 = vmatpush.msra.mxu0 %v354
    %932 = vmatpush.msra.mxu0 %v350
    %933 = vmatpush.msra.mxu0 %v346
    %934 = vmatpush.msra.mxu0 %v342
    %935 = vmatpush.msra.mxu0 %v338
    %936 = vmatpush.msra.mxu0 %v334
    %937 = vmatpush.msra.mxu0 %v330
    %938 = vmatpush.msra.mxu0 %v326
    %939 = vmatpush.msra.mxu0 %v322
    %940 = vmatpush.msra.mxu0 %v318
    %941 = vmatpush.msra.mxu0 %v314
    %942 = vmatpush.msra.mxu0 %v310
    %943 = vmatmul.f32.gmra.mxu0 %v671
    %v944 = vpop.f32.mrf.mxu0
    %v945 = vadd.f32 0.0, %v944
    %946 = vdwg.mxu0
    %947 = vmatpush.msra.mxu0 %v371
    %948 = vmatpush.msra.mxu0 %v367
    %949 = vmatpush.msra.mxu0 %v363
    %950 = vmatpush.msra.mxu0 %v359
    %951 = vmatpush.msra.mxu0 %v355
    %952 = vmatpush.msra.mxu0 %v351
    %953 = vmatpush.msra.mxu0 %v347
    %954 = vmatpush.msra.mxu0 %v343
    %955 = vmatpush.msra.mxu0 %v339
    %956 = vmatpush.msra.mxu0 %v335
    %957 = vmatpush.msra.mxu0 %v331
    %958 = vmatpush.msra.mxu0 %v327
    %959 = vmatpush.msra.mxu0 %v323
    %960 = vmatpush.msra.mxu0 %v319
    %961 = vmatpush.msra.mxu0 %v315
    %962 = vmatpush.msra.mxu0 %v311
    %963 = vmatmul.f32.gmra.mxu0 %v671
    %v964 = vpop.f32.mrf.mxu0
    %v965 = vadd.f32 0.0, %v964
    %966 = vdwg.mxu0
    %967 = vmatpush.msra.mxu0 %v372
    %968 = vmatpush.msra.mxu0 %v368
    %969 = vmatpush.msra.mxu0 %v364
    %970 = vmatpush.msra.mxu0 %v360
    %971 = vmatpush.msra.mxu0 %v356
    %972 = vmatpush.msra.mxu0 %v352
    %973 = vmatpush.msra.mxu0 %v348
    %974 = vmatpush.msra.mxu0 %v344
    %975 = vmatpush.msra.mxu0 %v340
    %976 = vmatpush.msra.mxu0 %v336
    %977 = vmatpush.msra.mxu0 %v332
    %978 = vmatpush.msra.mxu0 %v328
    %979 = vmatpush.msra.mxu0 %v324
    %980 = vmatpush.msra.mxu0 %v320
    %981 = vmatpush.msra.mxu0 %v316
    %982 = vmatpush.msra.mxu0 %v312
    %983 = vmatmul.f32.gmra.mxu0 %v671
    %v984 = vpop.f32.mrf.mxu0
    %v985 = vadd.f32 0.0, %v984
    %986 = vdwg.mxu0
    %v991 = vrot.slane %v945, 7
    %v992 = vrot.slane %v965, 6
    %v993 = vrot.slane %v985, 5
    %v994 = vsel %vm594, %v925, %v991
    %v995 = vsel %vm596, %v992, %v993
    %v996 = vsel %vm598, %v994, %v995
    %v998 = vadd.f32 %v906, %v996
    %v999 = vxor.u32 %v998, 2147483648
    %v1000 = vmul.f32 %v999, 1.442695
    %v1001 = vpow.pop %v1000
    %v1002 = vadd.f32 %v1001, 1.0
    %v1003 = vrcp.pop %v1002
    %v1004 = vmul.f32 %v1002, %v1003
    %v1005 = vsub.f32 1.0, %v1004
    %v1006 = vmul.f32 %v1003, %v1005
    %v1007 = vadd.f32 %v1003, %v1006
    %vm1008 = vweird.f32 %v1002
    %vm1009 = vweird.f32 %v1003
    %vm1010 = vmor %vm1008, %vm1009
    %v1011 = vsel %vm1010, %v1003, %v1007
    %v1012 = vand.u32 2147483647, %v1002
    %vm1013 = vcmp.eq.f32.partialorder %v1012, 8.507059e+37
    %v1014 = vand.u32 %v1002, 2147483648
    %v1015 = vor.u32 1.1754944e-38, %v1014
    %v1016 = vsel %vm1013, %v1015, %v1011
    %v1017 = vmul.f32 1.0, %v1016
    %v1019 = vrot.slane %v998, 1
    %v1021 = vxor.u32 %v1019, 2147483648
    %v1022 = vmul.f32 %v1021, 1.442695
    %v1023 = vpow.pop %v1022
    %v1024 = vadd.f32 %v1023, 1.0
    %v1025 = vrcp.pop %v1024
    %v1026 = vmul.f32 %v1024, %v1025
    %v1027 = vsub.f32 1.0, %v1026
    %v1028 = vmul.f32 %v1025, %v1027
    %v1029 = vadd.f32 %v1025, %v1028
    %vm1030 = vweird.f32 %v1024
    %vm1031 = vweird.f32 %v1025
    %vm1032 = vmor %vm1030, %vm1031
    %v1033 = vsel %vm1032, %v1025, %v1029
    %v1034 = vand.u32 2147483647, %v1024
    %vm1035 = vcmp.eq.f32.partialorder %v1034, 8.507059e+37
    %v1036 = vand.u32 %v1024, 2147483648
    %v1037 = vor.u32 1.1754944e-38, %v1036
    %v1038 = vsel %vm1035, %v1037, %v1033
    %v1039 = vmul.f32 1.0, %v1038
    %v1040 = vrot.slane %v998, 2
    %v1042 = vtanh.pop %v1040
    %v1043 = vrot.slane %v998, 3
    %v1045 = vxor.u32 %v1043, 2147483648
    %v1046 = vmul.f32 %v1045, 1.442695
    %v1047 = vpow.pop %v1046
    %v1048 = vadd.f32 %v1047, 1.0
    %v1049 = vrcp.pop %v1048
    %v1050 = vmul.f32 %v1048, %v1049
    %v1051 = vsub.f32 1.0, %v1050
    %v1052 = vmul.f32 %v1049, %v1051
    %v1053 = vadd.f32 %v1049, %v1052
    %vm1054 = vweird.f32 %v1048
    %vm1055 = vweird.f32 %v1049
    %vm1056 = vmor %vm1054, %vm1055
    %v1057 = vsel %vm1056, %v1049, %v1053
    %v1058 = vand.u32 2147483647, %v1048
    %vm1059 = vcmp.eq.f32.partialorder %v1058, 8.507059e+37
    %v1060 = vand.u32 %v1048, 2147483648
    %v1061 = vor.u32 1.1754944e-38, %v1060
    %v1062 = vsel %vm1059, %v1061, %v1057
    %v1063 = vmul.f32 1.0, %v1062
    %v1064 = vmul.f32 %v1039, %v669
    %v1065 = vmul.f32 %v1017, %v1042
    %v1066 = vadd.f32 %v1064, %v1065
    %v1067 = vtanh.pop %v1066
    %v1068 = vmul.f32 %v1063, %v1067
    %1069 = vmatpush.msra.mxu0 %v433
    %1070 = vmatpush.msra.mxu0 %v429
    %1071 = vmatpush.msra.mxu0 %v425
    %1072 = vmatpush.msra.mxu0 %v421
    %1073 = vmatpush.msra.mxu0 %v417
    %1074 = vmatpush.msra.mxu0 %v413
    %1075 = vmatpush.msra.mxu0 %v409
    %1076 = vmatpush.msra.mxu0 %v405
    %1077 = vmatpush.msra.mxu0 %v401
    %1078 = vmatpush.msra.mxu0 %v397
    %1079 = vmatpush.msra.mxu0 %v393
    %1080 = vmatpush.msra.mxu0 %v389
    %1081 = vmatpush.msra.mxu0 %v385
    %1082 = vmatpush.msra.mxu0 %v381
    %1083 = vmatpush.msra.mxu0 %v377
    %1084 = vmatpush.msra.mxu0 %v373
    %1085 = vmatmul.f32.gmra.mxu0 %v1068
    %v1086 = vpop.f32.mrf.mxu0
    %v1087 = vadd.f32 %v673, %v1086
    %1088 = vdwg.mxu0
    %1089 = vmatpush.msra.mxu0 %v497
    %1090 = vmatpush.msra.mxu0 %v493
    %1091 = vmatpush.msra.mxu0 %v489
    %1092 = vmatpush.msra.mxu0 %v485
    %1093 = vmatpush.msra.mxu0 %v481
    %1094 = vmatpush.msra.mxu0 %v477
    %1095 = vmatpush.msra.mxu0 %v473
    %1096 = vmatpush.msra.mxu0 %v469
    %1097 = vmatpush.msra.mxu0 %v465
    %1098 = vmatpush.msra.mxu0 %v461
    %1099 = vmatpush.msra.mxu0 %v457
    %1100 = vmatpush.msra.mxu0 %v453
    %1101 = vmatpush.msra.mxu0 %v449
    %1102 = vmatpush.msra.mxu0 %v445
    %1103 = vmatpush.msra.mxu0 %v441
    %1104 = vmatpush.msra.mxu0 %v437
    %1105 = vmatmul.f32.gmra.mxu0 %v903
    %v1106 = vpop.f32.mrf.mxu0
    %v1107 = vadd.f32 %v1087, %v1106
    %1108 = vdwg.mxu0
    %1109 = vmatpush.msra.mxu0 %v434
    %1110 = vmatpush.msra.mxu0 %v430
    %1111 = vmatpush.msra.mxu0 %v426
    %1112 = vmatpush.msra.mxu0 %v422
    %1113 = vmatpush.msra.mxu0 %v418
    %1114 = vmatpush.msra.mxu0 %v414
    %1115 = vmatpush.msra.mxu0 %v410
    %1116 = vmatpush.msra.mxu0 %v406
    %1117 = vmatpush.msra.mxu0 %v402
    %1118 = vmatpush.msra.mxu0 %v398
    %1119 = vmatpush.msra.mxu0 %v394
    %1120 = vmatpush.msra.mxu0 %v390
    %1121 = vmatpush.msra.mxu0 %v386
    %1122 = vmatpush.msra.mxu0 %v382
    %1123 = vmatpush.msra.mxu0 %v378
    %1124 = vmatpush.msra.mxu0 %v374
    %1125 = vmatmul.f32.gmra.mxu0 %v1068
    %v1126 = vpop.f32.mrf.mxu0
    %v1127 = vadd.f32 %v674, %v1126
    %1128 = vdwg.mxu0
    %1129 = vmatpush.msra.mxu0 %v498
    %1130 = vmatpush.msra.mxu0 %v494
    %1131 = vmatpush.msra.mxu0 %v490
    %1132 = vmatpush.msra.mxu0 %v486
    %1133 = vmatpush.msra.mxu0 %v482
    %1134 = vmatpush.msra.mxu0 %v478
    %1135 = vmatpush.msra.mxu0 %v474
    %1136 = vmatpush.msra.mxu0 %v470
    %1137 = vmatpush.msra.mxu0 %v466
    %1138 = vmatpush.msra.mxu0 %v462
    %1139 = vmatpush.msra.mxu0 %v458
    %1140 = vmatpush.msra.mxu0 %v454
    %1141 = vmatpush.msra.mxu0 %v450
    %1142 = vmatpush.msra.mxu0 %v446
    %1143 = vmatpush.msra.mxu0 %v442
    %1144 = vmatpush.msra.mxu0 %v438
    %1145 = vmatmul.f32.gmra.mxu0 %v903
    %v1146 = vpop.f32.mrf.mxu0
    %v1147 = vadd.f32 %v1127, %v1146
    %1148 = vdwg.mxu0
    %1149 = vmatpush.msra.mxu0 %v435
    %1150 = vmatpush.msra.mxu0 %v431
    %1151 = vmatpush.msra.mxu0 %v427
    %1152 = vmatpush.msra.mxu0 %v423
    %1153 = vmatpush.msra.mxu0 %v419
    %1154 = vmatpush.msra.mxu0 %v415
    %1155 = vmatpush.msra.mxu0 %v411
    %1156 = vmatpush.msra.mxu0 %v407
    %1157 = vmatpush.msra.mxu0 %v403
    %1158 = vmatpush.msra.mxu0 %v399
    %1159 = vmatpush.msra.mxu0 %v395
    %1160 = vmatpush.msra.mxu0 %v391
    %1161 = vmatpush.msra.mxu0 %v387
    %1162 = vmatpush.msra.mxu0 %v383
    %1163 = vmatpush.msra.mxu0 %v379
    %1164 = vmatpush.msra.mxu0 %v375
    %1165 = vmatmul.f32.gmra.mxu0 %v1068
    %v1166 = vpop.f32.mrf.mxu0
    %v1167 = vadd.f32 %v675, %v1166
    %1168 = vdwg.mxu0
    %1169 = vmatpush.msra.mxu0 %v499
    %1170 = vmatpush.msra.mxu0 %v495
    %1171 = vmatpush.msra.mxu0 %v491
    %1172 = vmatpush.msra.mxu0 %v487
    %1173 = vmatpush.msra.mxu0 %v483
    %1174 = vmatpush.msra.mxu0 %v479
    %1175 = vmatpush.msra.mxu0 %v475
    %1176 = vmatpush.msra.mxu0 %v471
    %1177 = vmatpush.msra.mxu0 %v467
    %1178 = vmatpush.msra.mxu0 %v463
    %1179 = vmatpush.msra.mxu0 %v459
    %1180 = vmatpush.msra.mxu0 %v455
    %1181 = vmatpush.msra.mxu0 %v451
    %1182 = vmatpush.msra.mxu0 %v447
    %1183 = vmatpush.msra.mxu0 %v443
    %1184 = vmatpush.msra.mxu0 %v439
    %1185 = vmatmul.f32.gmra.mxu0 %v903
    %v1186 = vpop.f32.mrf.mxu0
    %v1187 = vadd.f32 %v1167, %v1186
    %1188 = vdwg.mxu0
    %1189 = vmatpush.msra.mxu0 %v436
    %1190 = vmatpush.msra.mxu0 %v432
    %1191 = vmatpush.msra.mxu0 %v428
    %1192 = vmatpush.msra.mxu0 %v424
    %1193 = vmatpush.msra.mxu0 %v420
    %1194 = vmatpush.msra.mxu0 %v416
    %1195 = vmatpush.msra.mxu0 %v412
    %1196 = vmatpush.msra.mxu0 %v408
    %1197 = vmatpush.msra.mxu0 %v404
    %1198 = vmatpush.msra.mxu0 %v400
    %1199 = vmatpush.msra.mxu0 %v396
    %1200 = vmatpush.msra.mxu0 %v392
    %1201 = vmatpush.msra.mxu0 %v388
    %1202 = vmatpush.msra.mxu0 %v384
    %1203 = vmatpush.msra.mxu0 %v380
    %1204 = vmatpush.msra.mxu0 %v376
    %1205 = vmatmul.f32.gmra.mxu0 %v1068
    %v1206 = vpop.f32.mrf.mxu0
    %v1207 = vadd.f32 %v676, %v1206
    %1208 = vdwg.mxu0
    %1209 = vmatpush.msra.mxu0 %v500
    %1210 = vmatpush.msra.mxu0 %v496
    %1211 = vmatpush.msra.mxu0 %v492
    %1212 = vmatpush.msra.mxu0 %v488
    %1213 = vmatpush.msra.mxu0 %v484
    %1214 = vmatpush.msra.mxu0 %v480
    %1215 = vmatpush.msra.mxu0 %v476
    %1216 = vmatpush.msra.mxu0 %v472
    %1217 = vmatpush.msra.mxu0 %v468
    %1218 = vmatpush.msra.mxu0 %v464
    %1219 = vmatpush.msra.mxu0 %v460
    %1220 = vmatpush.msra.mxu0 %v456
    %1221 = vmatpush.msra.mxu0 %v452
    %1222 = vmatpush.msra.mxu0 %v448
    %1223 = vmatpush.msra.mxu0 %v444
    %1224 = vmatpush.msra.mxu0 %v440
    %1225 = vmatmul.f32.gmra.mxu0 %v903
    %v1226 = vpop.f32.mrf.mxu0
    %v1227 = vadd.f32 %v1207, %v1226
    %1228 = vdwg.mxu0
    %v1229 = vxor.u32 %v1107, 2147483648
    %v1230 = vmul.f32 %v1229, 1.442695
    %v1231 = vpow.pop %v1230
    %v1232 = vadd.f32 %v1231, 1.0
    %v1233 = vrcp.pop %v1232
    %v1234 = vmul.f32 %v1232, %v1233
    %v1235 = vsub.f32 1.0, %v1234
    %v1236 = vmul.f32 %v1233, %v1235
    %v1237 = vadd.f32 %v1233, %v1236
    %vm1238 = vweird.f32 %v1232
    %vm1239 = vweird.f32 %v1233
    %vm1240 = vmor %vm1238, %vm1239
    %v1241 = vsel %vm1240, %v1233, %v1237
    %v1242 = vand.u32 2147483647, %v1232
    %vm1243 = vcmp.eq.f32.partialorder %v1242, 8.507059e+37
    %v1244 = vand.u32 %v1232, 2147483648
    %v1245 = vor.u32 1.1754944e-38, %v1244
    %v1246 = vsel %vm1243, %v1245, %v1241
    %v1247 = vmul.f32 1.0, %v1246
    %v1248 = vxor.u32 %v1147, 2147483648
    %v1249 = vmul.f32 %v1248, 1.442695
    %v1250 = vpow.pop %v1249
    %v1251 = vadd.f32 %v1250, 1.0
    %v1252 = vrcp.pop %v1251
    %v1253 = vmul.f32 %v1251, %v1252
    %v1254 = vsub.f32 1.0, %v1253
    %v1255 = vmul.f32 %v1252, %v1254
    %v1256 = vadd.f32 %v1252, %v1255
    %vm1257 = vweird.f32 %v1251
    %vm1258 = vweird.f32 %v1252
    %vm1259 = vmor %vm1257, %vm1258
    %v1260 = vsel %vm1259, %v1252, %v1256
    %v1261 = vand.u32 2147483647, %v1251
    %vm1262 = vcmp.eq.f32.partialorder %v1261, 8.507059e+37
    %v1263 = vand.u32 %v1251, 2147483648
    %v1264 = vor.u32 1.1754944e-38, %v1263
    %v1265 = vsel %vm1262, %v1264, %v1260
    %v1266 = vmul.f32 1.0, %v1265
    %v1267 = vtanh.pop %v1187
    %v1268 = vxor.u32 %v1227, 2147483648
    %v1269 = vmul.f32 %v1268, 1.442695
    %v1270 = vpow.pop %v1269
    %v1271 = vadd.f32 %v1270, 1.0
    %v1272 = vrcp.pop %v1271
    %v1273 = vmul.f32 %v1271, %v1272
    %v1274 = vsub.f32 1.0, %v1273
    %v1275 = vmul.f32 %v1272, %v1274
    %v1276 = vadd.f32 %v1272, %v1275
    %vm1277 = vweird.f32 %v1271
    %vm1278 = vweird.f32 %v1272
    %vm1279 = vmor %vm1277, %vm1278
    %v1280 = vsel %vm1279, %v1272, %v1276
    %v1281 = vand.u32 2147483647, %v1271
    %vm1282 = vcmp.eq.f32.partialorder %v1281, 8.507059e+37
    %v1283 = vand.u32 %v1271, 2147483648
    %v1284 = vor.u32 1.1754944e-38, %v1283
    %v1285 = vsel %vm1282, %v1284, %v1280
    %v1286 = vmul.f32 1.0, %v1285
    %v1287 = vmul.f32 %v1266, %v901
    %v1288 = vmul.f32 %v1247, %v1267
    %v1289 = vadd.f32 %v1287, %v1288
    %v1290 = vtanh.pop %v1289
    %v1291 = vmul.f32 %v1286, %v1290
    %1292 = vst [vmem:[#allocation3 + $0x1] sm:$0x1] %v1291
    %s1293 = scalar_lea.vmem [#allocation2], 2
    %v1294 = vld [vmem:[%s1293] ss:$8 sm:$0xf]
    %1295 = vmatpush.msra.mxu0 %v369
    %1296 = vmatpush.msra.mxu0 %v365
    %1297 = vmatpush.msra.mxu0 %v361
    %1298 = vmatpush.msra.mxu0 %v357
    %1299 = vmatpush.msra.mxu0 %v353
    %1300 = vmatpush.msra.mxu0 %v349
    %1301 = vmatpush.msra.mxu0 %v345
    %1302 = vmatpush.msra.mxu0 %v341
    %1303 = vmatpush.msra.mxu0 %v337
    %1304 = vmatpush.msra.mxu0 %v333
    %1305 = vmatpush.msra.mxu0 %v329
    %1306 = vmatpush.msra.mxu0 %v325
    %1307 = vmatpush.msra.mxu0 %v321
    %1308 = vmatpush.msra.mxu0 %v317
    %1309 = vmatpush.msra.mxu0 %v313
    %1310 = vmatpush.msra.mxu0 %v309
    %1311 = vmatmul.f32.gmra.mxu0 %v1068
    %v1312 = vpop.f32.mrf.mxu0
    %v1313 = vadd.f32 0.0, %v1312
    %1314 = vdwg.mxu0
    %1315 = vmatpush.msra.mxu0 %v370
    %1316 = vmatpush.msra.mxu0 %v366
    %1317 = vmatpush.msra.mxu0 %v362
    %1318 = vmatpush.msra.mxu0 %v358
    %1319 = vmatpush.msra.mxu0 %v354
    %1320 = vmatpush.msra.mxu0 %v350
    %1321 = vmatpush.msra.mxu0 %v346
    %1322 = vmatpush.msra.mxu0 %v342
    %1323 = vmatpush.msra.mxu0 %v338
    %1324 = vmatpush.msra.mxu0 %v334
    %1325 = vmatpush.msra.mxu0 %v330
    %1326 = vmatpush.msra.mxu0 %v326
    %1327 = vmatpush.msra.mxu0 %v322
    %1328 = vmatpush.msra.mxu0 %v318
    %1329 = vmatpush.msra.mxu0 %v314
    %1330 = vmatpush.msra.mxu0 %v310
    %1331 = vmatmul.f32.gmra.mxu0 %v1068
    %v1332 = vpop.f32.mrf.mxu0
    %v1333 = vadd.f32 0.0, %v1332
    %1334 = vdwg.mxu0
    %1335 = vmatpush.msra.mxu0 %v371
    %1336 = vmatpush.msra.mxu0 %v367
    %1337 = vmatpush.msra.mxu0 %v363
    %1338 = vmatpush.msra.mxu0 %v359
    %1339 = vmatpush.msra.mxu0 %v355
    %1340 = vmatpush.msra.mxu0 %v351
    %1341 = vmatpush.msra.mxu0 %v347
    %1342 = vmatpush.msra.mxu0 %v343
    %1343 = vmatpush.msra.mxu0 %v339
    %1344 = vmatpush.msra.mxu0 %v335
    %1345 = vmatpush.msra.mxu0 %v331
    %1346 = vmatpush.msra.mxu0 %v327
    %1347 = vmatpush.msra.mxu0 %v323
    %1348 = vmatpush.msra.mxu0 %v319
    %1349 = vmatpush.msra.mxu0 %v315
    %1350 = vmatpush.msra.mxu0 %v311
    %1351 = vmatmul.f32.gmra.mxu0 %v1068
    %v1352 = vpop.f32.mrf.mxu0
    %v1353 = vadd.f32 0.0, %v1352
    %1354 = vdwg.mxu0
    %1355 = vmatpush.msra.mxu0 %v372
    %1356 = vmatpush.msra.mxu0 %v368
    %1357 = vmatpush.msra.mxu0 %v364
    %1358 = vmatpush.msra.mxu0 %v360
    %1359 = vmatpush.msra.mxu0 %v356
    %1360 = vmatpush.msra.mxu0 %v352
    %1361 = vmatpush.msra.mxu0 %v348
    %1362 = vmatpush.msra.mxu0 %v344
    %1363 = vmatpush.msra.mxu0 %v340
    %1364 = vmatpush.msra.mxu0 %v336
    %1365 = vmatpush.msra.mxu0 %v332
    %1366 = vmatpush.msra.mxu0 %v328
    %1367 = vmatpush.msra.mxu0 %v324
    %1368 = vmatpush.msra.mxu0 %v320
    %1369 = vmatpush.msra.mxu0 %v316
    %1370 = vmatpush.msra.mxu0 %v312
    %1371 = vmatmul.f32.gmra.mxu0 %v1068
    %v1372 = vpop.f32.mrf.mxu0
    %v1373 = vadd.f32 0.0, %v1372
    %1374 = vdwg.mxu0
    %v1379 = vrot.slane %v1333, 7
    %v1380 = vrot.slane %v1353, 6
    %v1381 = vrot.slane %v1373, 5
    %v1382 = vsel %vm594, %v1313, %v1379
    %v1383 = vsel %vm596, %v1380, %v1381
    %v1384 = vsel %vm598, %v1382, %v1383
    %v1386 = vadd.f32 %v1294, %v1384
    %v1387 = vxor.u32 %v1386, 2147483648
    %v1388 = vmul.f32 %v1387, 1.442695
    %v1389 = vpow.pop %v1388
    %v1390 = vadd.f32 %v1389, 1.0
    %v1391 = vrcp.pop %v1390
    %v1392 = vmul.f32 %v1390, %v1391
    %v1393 = vsub.f32 1.0, %v1392
    %v1394 = vmul.f32 %v1391, %v1393
    %v1395 = vadd.f32 %v1391, %v1394
    %vm1396 = vweird.f32 %v1390
    %vm1397 = vweird.f32 %v1391
    %vm1398 = vmor %vm1396, %vm1397
    %v1399 = vsel %vm1398, %v1391, %v1395
    %v1400 = vand.u32 2147483647, %v1390
    %vm1401 = vcmp.eq.f32.partialorder %v1400, 8.507059e+37
    %v1402 = vand.u32 %v1390, 2147483648
    %v1403 = vor.u32 1.1754944e-38, %v1402
    %v1404 = vsel %vm1401, %v1403, %v1399
    %v1405 = vmul.f32 1.0, %v1404
    %v1407 = vrot.slane %v1386, 1
    %v1409 = vxor.u32 %v1407, 2147483648
    %v1410 = vmul.f32 %v1409, 1.442695
    %v1411 = vpow.pop %v1410
    %v1412 = vadd.f32 %v1411, 1.0
    %v1413 = vrcp.pop %v1412
    %v1414 = vmul.f32 %v1412, %v1413
    %v1415 = vsub.f32 1.0, %v1414
    %v1416 = vmul.f32 %v1413, %v1415
    %v1417 = vadd.f32 %v1413, %v1416
    %vm1418 = vweird.f32 %v1412
    %vm1419 = vweird.f32 %v1413
    %vm1420 = vmor %vm1418, %vm1419
    %v1421 = vsel %vm1420, %v1413, %v1417
    %v1422 = vand.u32 2147483647, %v1412
    %vm1423 = vcmp.eq.f32.partialorder %v1422, 8.507059e+37
    %v1424 = vand.u32 %v1412, 2147483648
    %v1425 = vor.u32 1.1754944e-38, %v1424
    %v1426 = vsel %vm1423, %v1425, %v1421
    %v1427 = vmul.f32 1.0, %v1426
    %v1428 = vrot.slane %v1386, 2
    %v1430 = vtanh.pop %v1428
    %v1431 = vrot.slane %v1386, 3
    %v1433 = vxor.u32 %v1431, 2147483648
    %v1434 = vmul.f32 %v1433, 1.442695
    %v1435 = vpow.pop %v1434
    %v1436 = vadd.f32 %v1435, 1.0
    %v1437 = vrcp.pop %v1436
    %v1438 = vmul.f32 %v1436, %v1437
    %v1439 = vsub.f32 1.0, %v1438
    %v1440 = vmul.f32 %v1437, %v1439
    %v1441 = vadd.f32 %v1437, %v1440
    %vm1442 = vweird.f32 %v1436
    %vm1443 = vweird.f32 %v1437
    %vm1444 = vmor %vm1442, %vm1443
    %v1445 = vsel %vm1444, %v1437, %v1441
    %v1446 = vand.u32 2147483647, %v1436
    %vm1447 = vcmp.eq.f32.partialorder %v1446, 8.507059e+37
    %v1448 = vand.u32 %v1436, 2147483648
    %v1449 = vor.u32 1.1754944e-38, %v1448
    %v1450 = vsel %vm1447, %v1449, %v1445
    %v1451 = vmul.f32 1.0, %v1450
    %v1452 = vmul.f32 %v1427, %v1066
    %v1453 = vmul.f32 %v1405, %v1430
    %v1454 = vadd.f32 %v1452, %v1453
    %v1455 = vtanh.pop %v1454
    %v1456 = vmul.f32 %v1451, %v1455
    %1457 = vmatpush.msra.mxu0 %v433
    %1458 = vmatpush.msra.mxu0 %v429
    %1459 = vmatpush.msra.mxu0 %v425
    %1460 = vmatpush.msra.mxu0 %v421
    %1461 = vmatpush.msra.mxu0 %v417
    %1462 = vmatpush.msra.mxu0 %v413
    %1463 = vmatpush.msra.mxu0 %v409
    %1464 = vmatpush.msra.mxu0 %v405
    %1465 = vmatpush.msra.mxu0 %v401
    %1466 = vmatpush.msra.mxu0 %v397
    %1467 = vmatpush.msra.mxu0 %v393
    %1468 = vmatpush.msra.mxu0 %v389
    %1469 = vmatpush.msra.mxu0 %v385
    %1470 = vmatpush.msra.mxu0 %v381
    %1471 = vmatpush.msra.mxu0 %v377
    %1472 = vmatpush.msra.mxu0 %v373
    %1473 = vmatmul.f32.gmra.mxu0 %v1456
    %v1474 = vpop.f32.mrf.mxu0
    %v1475 = vadd.f32 %v673, %v1474
    %1476 = vdwg.mxu0
    %1477 = vmatpush.msra.mxu0 %v497
    %1478 = vmatpush.msra.mxu0 %v493
    %1479 = vmatpush.msra.mxu0 %v489
    %1480 = vmatpush.msra.mxu0 %v485
    %1481 = vmatpush.msra.mxu0 %v481
    %1482 = vmatpush.msra.mxu0 %v477
    %1483 = vmatpush.msra.mxu0 %v473
    %1484 = vmatpush.msra.mxu0 %v469
    %1485 = vmatpush.msra.mxu0 %v465
    %1486 = vmatpush.msra.mxu0 %v461
    %1487 = vmatpush.msra.mxu0 %v457
    %1488 = vmatpush.msra.mxu0 %v453
    %1489 = vmatpush.msra.mxu0 %v449
    %1490 = vmatpush.msra.mxu0 %v445
    %1491 = vmatpush.msra.mxu0 %v441
    %1492 = vmatpush.msra.mxu0 %v437
    %1493 = vmatmul.f32.gmra.mxu0 %v1291
    %v1494 = vpop.f32.mrf.mxu0
    %v1495 = vadd.f32 %v1475, %v1494
    %1496 = vdwg.mxu0
    %1497 = vmatpush.msra.mxu0 %v434
    %1498 = vmatpush.msra.mxu0 %v430
    %1499 = vmatpush.msra.mxu0 %v426
    %1500 = vmatpush.msra.mxu0 %v422
    %1501 = vmatpush.msra.mxu0 %v418
    %1502 = vmatpush.msra.mxu0 %v414
    %1503 = vmatpush.msra.mxu0 %v410
    %1504 = vmatpush.msra.mxu0 %v406
    %1505 = vmatpush.msra.mxu0 %v402
    %1506 = vmatpush.msra.mxu0 %v398
    %1507 = vmatpush.msra.mxu0 %v394
    %1508 = vmatpush.msra.mxu0 %v390
    %1509 = vmatpush.msra.mxu0 %v386
    %1510 = vmatpush.msra.mxu0 %v382
    %1511 = vmatpush.msra.mxu0 %v378
    %1512 = vmatpush.msra.mxu0 %v374
    %1513 = vmatmul.f32.gmra.mxu0 %v1456
    %v1514 = vpop.f32.mrf.mxu0
    %v1515 = vadd.f32 %v674, %v1514
    %1516 = vdwg.mxu0
    %1517 = vmatpush.msra.mxu0 %v498
    %1518 = vmatpush.msra.mxu0 %v494
    %1519 = vmatpush.msra.mxu0 %v490
    %1520 = vmatpush.msra.mxu0 %v486
    %1521 = vmatpush.msra.mxu0 %v482
    %1522 = vmatpush.msra.mxu0 %v478
    %1523 = vmatpush.msra.mxu0 %v474
    %1524 = vmatpush.msra.mxu0 %v470
    %1525 = vmatpush.msra.mxu0 %v466
    %1526 = vmatpush.msra.mxu0 %v462
    %1527 = vmatpush.msra.mxu0 %v458
    %1528 = vmatpush.msra.mxu0 %v454
    %1529 = vmatpush.msra.mxu0 %v450
    %1530 = vmatpush.msra.mxu0 %v446
    %1531 = vmatpush.msra.mxu0 %v442
    %1532 = vmatpush.msra.mxu0 %v438
    %1533 = vmatmul.f32.gmra.mxu0 %v1291
    %v1534 = vpop.f32.mrf.mxu0
    %v1535 = vadd.f32 %v1515, %v1534
    %1536 = vdwg.mxu0
    %1537 = vmatpush.msra.mxu0 %v435
    %1538 = vmatpush.msra.mxu0 %v431
    %1539 = vmatpush.msra.mxu0 %v427
    %1540 = vmatpush.msra.mxu0 %v423
    %1541 = vmatpush.msra.mxu0 %v419
    %1542 = vmatpush.msra.mxu0 %v415
    %1543 = vmatpush.msra.mxu0 %v411
    %1544 = vmatpush.msra.mxu0 %v407
    %1545 = vmatpush.msra.mxu0 %v403
    %1546 = vmatpush.msra.mxu0 %v399
    %1547 = vmatpush.msra.mxu0 %v395
    %1548 = vmatpush.msra.mxu0 %v391
    %1549 = vmatpush.msra.mxu0 %v387
    %1550 = vmatpush.msra.mxu0 %v383
    %1551 = vmatpush.msra.mxu0 %v379
    %1552 = vmatpush.msra.mxu0 %v375
    %1553 = vmatmul.f32.gmra.mxu0 %v1456
    %v1554 = vpop.f32.mrf.mxu0
    %v1555 = vadd.f32 %v675, %v1554
    %1556 = vdwg.mxu0
    %1557 = vmatpush.msra.mxu0 %v499
    %1558 = vmatpush.msra.mxu0 %v495
    %1559 = vmatpush.msra.mxu0 %v491
    %1560 = vmatpush.msra.mxu0 %v487
    %1561 = vmatpush.msra.mxu0 %v483
    %1562 = vmatpush.msra.mxu0 %v479
    %1563 = vmatpush.msra.mxu0 %v475
    %1564 = vmatpush.msra.mxu0 %v471
    %1565 = vmatpush.msra.mxu0 %v467
    %1566 = vmatpush.msra.mxu0 %v463
    %1567 = vmatpush.msra.mxu0 %v459
    %1568 = vmatpush.msra.mxu0 %v455
    %1569 = vmatpush.msra.mxu0 %v451
    %1570 = vmatpush.msra.mxu0 %v447
    %1571 = vmatpush.msra.mxu0 %v443
    %1572 = vmatpush.msra.mxu0 %v439
    %1573 = vmatmul.f32.gmra.mxu0 %v1291
    %v1574 = vpop.f32.mrf.mxu0
    %v1575 = vadd.f32 %v1555, %v1574
    %1576 = vdwg.mxu0
    %1577 = vmatpush.msra.mxu0 %v436
    %1578 = vmatpush.msra.mxu0 %v432
    %1579 = vmatpush.msra.mxu0 %v428
    %1580 = vmatpush.msra.mxu0 %v424
    %1581 = vmatpush.msra.mxu0 %v420
    %1582 = vmatpush.msra.mxu0 %v416
    %1583 = vmatpush.msra.mxu0 %v412
    %1584 = vmatpush.msra.mxu0 %v408
    %1585 = vmatpush.msra.mxu0 %v404
    %1586 = vmatpush.msra.mxu0 %v400
    %1587 = vmatpush.msra.mxu0 %v396
    %1588 = vmatpush.msra.mxu0 %v392
    %1589 = vmatpush.msra.mxu0 %v388
    %1590 = vmatpush.msra.mxu0 %v384
    %1591 = vmatpush.msra.mxu0 %v380
    %1592 = vmatpush.msra.mxu0 %v376
    %1593 = vmatmul.f32.gmra.mxu0 %v1456
    %v1594 = vpop.f32.mrf.mxu0
    %v1595 = vadd.f32 %v676, %v1594
    %1596 = vdwg.mxu0
    %1597 = vmatpush.msra.mxu0 %v500
    %1598 = vmatpush.msra.mxu0 %v496
    %1599 = vmatpush.msra.mxu0 %v492
    %1600 = vmatpush.msra.mxu0 %v488
    %1601 = vmatpush.msra.mxu0 %v484
    %1602 = vmatpush.msra.mxu0 %v480
    %1603 = vmatpush.msra.mxu0 %v476
    %1604 = vmatpush.msra.mxu0 %v472
    %1605 = vmatpush.msra.mxu0 %v468
    %1606 = vmatpush.msra.mxu0 %v464
    %1607 = vmatpush.msra.mxu0 %v460
    %1608 = vmatpush.msra.mxu0 %v456
    %1609 = vmatpush.msra.mxu0 %v452
    %1610 = vmatpush.msra.mxu0 %v448
    %1611 = vmatpush.msra.mxu0 %v444
    %1612 = vmatpush.msra.mxu0 %v440
    %1613 = vmatmul.f32.gmra.mxu0 %v1291
    %v1614 = vpop.f32.mrf.mxu0
    %v1615 = vadd.f32 %v1595, %v1614
    %1616 = vdwg.mxu0
    %v1617 = vxor.u32 %v1495, 2147483648
    %v1618 = vmul.f32 %v1617, 1.442695
    %v1619 = vpow.pop %v1618
    %v1620 = vadd.f32 %v1619, 1.0
    %v1621 = vrcp.pop %v1620
    %v1622 = vmul.f32 %v1620, %v1621
    %v1623 = vsub.f32 1.0, %v1622
    %v1624 = vmul.f32 %v1621, %v1623
    %v1625 = vadd.f32 %v1621, %v1624
    %vm1626 = vweird.f32 %v1620
    %vm1627 = vweird.f32 %v1621
    %vm1628 = vmor %vm1626, %vm1627
    %v1629 = vsel %vm1628, %v1621, %v1625
    %v1630 = vand.u32 2147483647, %v1620
    %vm1631 = vcmp.eq.f32.partialorder %v1630, 8.507059e+37
    %v1632 = vand.u32 %v1620, 2147483648
    %v1633 = vor.u32 1.1754944e-38, %v1632
    %v1634 = vsel %vm1631, %v1633, %v1629
    %v1635 = vmul.f32 1.0, %v1634
    %v1636 = vxor.u32 %v1535, 2147483648
    %v1637 = vmul.f32 %v1636, 1.442695
    %v1638 = vpow.pop %v1637
    %v1639 = vadd.f32 %v1638, 1.0
    %v1640 = vrcp.pop %v1639
    %v1641 = vmul.f32 %v1639, %v1640
    %v1642 = vsub.f32 1.0, %v1641
    %v1643 = vmul.f32 %v1640, %v1642
    %v1644 = vadd.f32 %v1640, %v1643
    %vm1645 = vweird.f32 %v1639
    %vm1646 = vweird.f32 %v1640
    %vm1647 = vmor %vm1645, %vm1646
    %v1648 = vsel %vm1647, %v1640, %v1644
    %v1649 = vand.u32 2147483647, %v1639
    %vm1650 = vcmp.eq.f32.partialorder %v1649, 8.507059e+37
    %v1651 = vand.u32 %v1639, 2147483648
    %v1652 = vor.u32 1.1754944e-38, %v1651
    %v1653 = vsel %vm1650, %v1652, %v1648
    %v1654 = vmul.f32 1.0, %v1653
    %v1655 = vtanh.pop %v1575
    %v1656 = vxor.u32 %v1615, 2147483648
    %v1657 = vmul.f32 %v1656, 1.442695
    %v1658 = vpow.pop %v1657
    %v1659 = vadd.f32 %v1658, 1.0
    %v1660 = vrcp.pop %v1659
    %v1661 = vmul.f32 %v1659, %v1660
    %v1662 = vsub.f32 1.0, %v1661
    %v1663 = vmul.f32 %v1660, %v1662
    %v1664 = vadd.f32 %v1660, %v1663
    %vm1665 = vweird.f32 %v1659
    %vm1666 = vweird.f32 %v1660
    %vm1667 = vmor %vm1665, %vm1666
    %v1668 = vsel %vm1667, %v1660, %v1664
    %v1669 = vand.u32 2147483647, %v1659
    %vm1670 = vcmp.eq.f32.partialorder %v1669, 8.507059e+37
    %v1671 = vand.u32 %v1659, 2147483648
    %v1672 = vor.u32 1.1754944e-38, %v1671
    %v1673 = vsel %vm1670, %v1672, %v1668
    %v1674 = vmul.f32 1.0, %v1673
    %v1675 = vmul.f32 %v1654, %v1289
    %v1676 = vmul.f32 %v1635, %v1655
    %v1677 = vadd.f32 %v1675, %v1676
    %v1678 = vtanh.pop %v1677
    %v1679 = vmul.f32 %v1674, %v1678
    %1680 = vst [vmem:[#allocation3 + $0x2] sm:$0x1] %v1679
    %s1681 = scalar_lea.vmem [#allocation2], 3
    %v1682 = vld [vmem:[%s1681] ss:$8 sm:$0xf]
    %1683 = vmatpush.msra.mxu0 %v369
    %1684 = vmatpush.msra.mxu0 %v365
    %1685 = vmatpush.msra.mxu0 %v361
    %1686 = vmatpush.msra.mxu0 %v357
    %1687 = vmatpush.msra.mxu0 %v353
    %1688 = vmatpush.msra.mxu0 %v349
    %1689 = vmatpush.msra.mxu0 %v345
    %1690 = vmatpush.msra.mxu0 %v341
    %1691 = vmatpush.msra.mxu0 %v337
    %1692 = vmatpush.msra.mxu0 %v333
    %1693 = vmatpush.msra.mxu0 %v329
    %1694 = vmatpush.msra.mxu0 %v325
    %1695 = vmatpush.msra.mxu0 %v321
    %1696 = vmatpush.msra.mxu0 %v317
    %1697 = vmatpush.msra.mxu0 %v313
    %1698 = vmatpush.msra.mxu0 %v309
    %1699 = vmatmul.f32.gmra.mxu0 %v1456
    %v1700 = vpop.f32.mrf.mxu0
    %v1701 = vadd.f32 0.0, %v1700
    %1702 = vdwg.mxu0
    %1703 = vmatpush.msra.mxu0 %v370
    %1704 = vmatpush.msra.mxu0 %v366
    %1705 = vmatpush.msra.mxu0 %v362
    %1706 = vmatpush.msra.mxu0 %v358
    %1707 = vmatpush.msra.mxu0 %v354
    %1708 = vmatpush.msra.mxu0 %v350
    %1709 = vmatpush.msra.mxu0 %v346
    %1710 = vmatpush.msra.mxu0 %v342
    %1711 = vmatpush.msra.mxu0 %v338
    %1712 = vmatpush.msra.mxu0 %v334
    %1713 = vmatpush.msra.mxu0 %v330
    %1714 = vmatpush.msra.mxu0 %v326
    %1715 = vmatpush.msra.mxu0 %v322
    %1716 = vmatpush.msra.mxu0 %v318
    %1717 = vmatpush.msra.mxu0 %v314
    %1718 = vmatpush.msra.mxu0 %v310
    %1719 = vmatmul.f32.gmra.mxu0 %v1456
    %v1720 = vpop.f32.mrf.mxu0
    %v1721 = vadd.f32 0.0, %v1720
    %1722 = vdwg.mxu0
    %1723 = vmatpush.msra.mxu0 %v371
    %1724 = vmatpush.msra.mxu0 %v367
    %1725 = vmatpush.msra.mxu0 %v363
    %1726 = vmatpush.msra.mxu0 %v359
    %1727 = vmatpush.msra.mxu0 %v355
    %1728 = vmatpush.msra.mxu0 %v351
    %1729 = vmatpush.msra.mxu0 %v347
    %1730 = vmatpush.msra.mxu0 %v343
    %1731 = vmatpush.msra.mxu0 %v339
    %1732 = vmatpush.msra.mxu0 %v335
    %1733 = vmatpush.msra.mxu0 %v331
    %1734 = vmatpush.msra.mxu0 %v327
    %1735 = vmatpush.msra.mxu0 %v323
    %1736 = vmatpush.msra.mxu0 %v319
    %1737 = vmatpush.msra.mxu0 %v315
    %1738 = vmatpush.msra.mxu0 %v311
    %1739 = vmatmul.f32.gmra.mxu0 %v1456
    %v1740 = vpop.f32.mrf.mxu0
    %v1741 = vadd.f32 0.0, %v1740
    %1742 = vdwg.mxu0
    %1743 = vmatpush.msra.mxu0 %v372
    %1744 = vmatpush.msra.mxu0 %v368
    %1745 = vmatpush.msra.mxu0 %v364
    %1746 = vmatpush.msra.mxu0 %v360
    %1747 = vmatpush.msra.mxu0 %v356
    %1748 = vmatpush.msra.mxu0 %v352
    %1749 = vmatpush.msra.mxu0 %v348
    %1750 = vmatpush.msra.mxu0 %v344
    %1751 = vmatpush.msra.mxu0 %v340
    %1752 = vmatpush.msra.mxu0 %v336
    %1753 = vmatpush.msra.mxu0 %v332
    %1754 = vmatpush.msra.mxu0 %v328
    %1755 = vmatpush.msra.mxu0 %v324
    %1756 = vmatpush.msra.mxu0 %v320
    %1757 = vmatpush.msra.mxu0 %v316
    %1758 = vmatpush.msra.mxu0 %v312
    %1759 = vmatmul.f32.gmra.mxu0 %v1456
    %v1760 = vpop.f32.mrf.mxu0
    %v1761 = vadd.f32 0.0, %v1760
    %1762 = vdwg.mxu0
    %v1767 = vrot.slane %v1721, 7
    %v1768 = vrot.slane %v1741, 6
    %v1769 = vrot.slane %v1761, 5
    %v1770 = vsel %vm594, %v1701, %v1767
    %v1771 = vsel %vm596, %v1768, %v1769
    %v1772 = vsel %vm598, %v1770, %v1771
    %v1774 = vadd.f32 %v1682, %v1772
    %v1775 = vxor.u32 %v1774, 2147483648
    %v1776 = vmul.f32 %v1775, 1.442695
    %v1777 = vpow.pop %v1776
    %v1778 = vadd.f32 %v1777, 1.0
    %v1779 = vrcp.pop %v1778
    %v1780 = vmul.f32 %v1778, %v1779
    %v1781 = vsub.f32 1.0, %v1780
    %v1782 = vmul.f32 %v1779, %v1781
    %v1783 = vadd.f32 %v1779, %v1782
    %vm1784 = vweird.f32 %v1778
    %vm1785 = vweird.f32 %v1779
    %vm1786 = vmor %vm1784, %vm1785
    %v1787 = vsel %vm1786, %v1779, %v1783
    %v1788 = vand.u32 2147483647, %v1778
    %vm1789 = vcmp.eq.f32.partialorder %v1788, 8.507059e+37
    %v1790 = vand.u32 %v1778, 2147483648
    %v1791 = vor.u32 1.1754944e-38, %v1790
    %v1792 = vsel %vm1789, %v1791, %v1787
    %v1793 = vmul.f32 1.0, %v1792
    %v1795 = vrot.slane %v1774, 1
    %v1797 = vxor.u32 %v1795, 2147483648
    %v1798 = vmul.f32 %v1797, 1.442695
    %v1799 = vpow.pop %v1798
    %v1800 = vadd.f32 %v1799, 1.0
    %v1801 = vrcp.pop %v1800
    %v1802 = vmul.f32 %v1800, %v1801
    %v1803 = vsub.f32 1.0, %v1802
    %v1804 = vmul.f32 %v1801, %v1803
    %v1805 = vadd.f32 %v1801, %v1804
    %vm1806 = vweird.f32 %v1800
    %vm1807 = vweird.f32 %v1801
    %vm1808 = vmor %vm1806, %vm1807
    %v1809 = vsel %vm1808, %v1801, %v1805
    %v1810 = vand.u32 2147483647, %v1800
    %vm1811 = vcmp.eq.f32.partialorder %v1810, 8.507059e+37
    %v1812 = vand.u32 %v1800, 2147483648
    %v1813 = vor.u32 1.1754944e-38, %v1812
    %v1814 = vsel %vm1811, %v1813, %v1809
    %v1815 = vmul.f32 1.0, %v1814
    %v1816 = vrot.slane %v1774, 2
    %v1818 = vtanh.pop %v1816
    %v1819 = vrot.slane %v1774, 3
    %v1821 = vxor.u32 %v1819, 2147483648
    %v1822 = vmul.f32 %v1821, 1.442695
    %v1823 = vpow.pop %v1822
    %v1824 = vadd.f32 %v1823, 1.0
    %v1825 = vrcp.pop %v1824
    %v1826 = vmul.f32 %v1824, %v1825
    %v1827 = vsub.f32 1.0, %v1826
    %v1828 = vmul.f32 %v1825, %v1827
    %v1829 = vadd.f32 %v1825, %v1828
    %vm1830 = vweird.f32 %v1824
    %vm1831 = vweird.f32 %v1825
    %vm1832 = vmor %vm1830, %vm1831
    %v1833 = vsel %vm1832, %v1825, %v1829
    %v1834 = vand.u32 2147483647, %v1824
    %vm1835 = vcmp.eq.f32.partialorder %v1834, 8.507059e+37
    %v1836 = vand.u32 %v1824, 2147483648
    %v1837 = vor.u32 1.1754944e-38, %v1836
    %v1838 = vsel %vm1835, %v1837, %v1833
    %v1839 = vmul.f32 1.0, %v1838
    %v1840 = vmul.f32 %v1815, %v1454
    %v1841 = vmul.f32 %v1793, %v1818
    %v1842 = vadd.f32 %v1840, %v1841
    %v1843 = vtanh.pop %v1842
    %v1844 = vmul.f32 %v1839, %v1843
    %1845 = vmatpush.msra.mxu0 %v433
    %1846 = vmatpush.msra.mxu0 %v429
    %1847 = vmatpush.msra.mxu0 %v425
    %1848 = vmatpush.msra.mxu0 %v421
    %1849 = vmatpush.msra.mxu0 %v417
    %1850 = vmatpush.msra.mxu0 %v413
    %1851 = vmatpush.msra.mxu0 %v409
    %1852 = vmatpush.msra.mxu0 %v405
    %1853 = vmatpush.msra.mxu0 %v401
    %1854 = vmatpush.msra.mxu0 %v397
    %1855 = vmatpush.msra.mxu0 %v393
    %1856 = vmatpush.msra.mxu0 %v389
    %1857 = vmatpush.msra.mxu0 %v385
    %1858 = vmatpush.msra.mxu0 %v381
    %1859 = vmatpush.msra.mxu0 %v377
    %1860 = vmatpush.msra.mxu0 %v373
    %1861 = vmatmul.f32.gmra.mxu0 %v1844
    %v1862 = vpop.f32.mrf.mxu0
    %v1863 = vadd.f32 %v673, %v1862
    %1864 = vdwg.mxu0
    %1865 = vmatpush.msra.mxu0 %v497
    %1866 = vmatpush.msra.mxu0 %v493
    %1867 = vmatpush.msra.mxu0 %v489
    %1868 = vmatpush.msra.mxu0 %v485
    %1869 = vmatpush.msra.mxu0 %v481
    %1870 = vmatpush.msra.mxu0 %v477
    %1871 = vmatpush.msra.mxu0 %v473
    %1872 = vmatpush.msra.mxu0 %v469
    %1873 = vmatpush.msra.mxu0 %v465
    %1874 = vmatpush.msra.mxu0 %v461
    %1875 = vmatpush.msra.mxu0 %v457
    %1876 = vmatpush.msra.mxu0 %v453
    %1877 = vmatpush.msra.mxu0 %v449
    %1878 = vmatpush.msra.mxu0 %v445
    %1879 = vmatpush.msra.mxu0 %v441
    %1880 = vmatpush.msra.mxu0 %v437
    %1881 = vmatmul.f32.gmra.mxu0 %v1679
    %v1882 = vpop.f32.mrf.mxu0
    %v1883 = vadd.f32 %v1863, %v1882
    %1884 = vdwg.mxu0
    %1885 = vmatpush.msra.mxu0 %v434
    %1886 = vmatpush.msra.mxu0 %v430
    %1887 = vmatpush.msra.mxu0 %v426
    %1888 = vmatpush.msra.mxu0 %v422
    %1889 = vmatpush.msra.mxu0 %v418
    %1890 = vmatpush.msra.mxu0 %v414
    %1891 = vmatpush.msra.mxu0 %v410
    %1892 = vmatpush.msra.mxu0 %v406
    %1893 = vmatpush.msra.mxu0 %v402
    %1894 = vmatpush.msra.mxu0 %v398
    %1895 = vmatpush.msra.mxu0 %v394
    %1896 = vmatpush.msra.mxu0 %v390
    %1897 = vmatpush.msra.mxu0 %v386
    %1898 = vmatpush.msra.mxu0 %v382
    %1899 = vmatpush.msra.mxu0 %v378
    %1900 = vmatpush.msra.mxu0 %v374
    %1901 = vmatmul.f32.gmra.mxu0 %v1844
    %v1902 = vpop.f32.mrf.mxu0
    %v1903 = vadd.f32 %v674, %v1902
    %1904 = vdwg.mxu0
    %1905 = vmatpush.msra.mxu0 %v498
    %1906 = vmatpush.msra.mxu0 %v494
    %1907 = vmatpush.msra.mxu0 %v490
    %1908 = vmatpush.msra.mxu0 %v486
    %1909 = vmatpush.msra.mxu0 %v482
    %1910 = vmatpush.msra.mxu0 %v478
    %1911 = vmatpush.msra.mxu0 %v474
    %1912 = vmatpush.msra.mxu0 %v470
    %1913 = vmatpush.msra.mxu0 %v466
    %1914 = vmatpush.msra.mxu0 %v462
    %1915 = vmatpush.msra.mxu0 %v458
    %1916 = vmatpush.msra.mxu0 %v454
    %1917 = vmatpush.msra.mxu0 %v450
    %1918 = vmatpush.msra.mxu0 %v446
    %1919 = vmatpush.msra.mxu0 %v442
    %1920 = vmatpush.msra.mxu0 %v438
    %1921 = vmatmul.f32.gmra.mxu0 %v1679
    %v1922 = vpop.f32.mrf.mxu0
    %v1923 = vadd.f32 %v1903, %v1922
    %1924 = vdwg.mxu0
    %1925 = vmatpush.msra.mxu0 %v435
    %1926 = vmatpush.msra.mxu0 %v431
    %1927 = vmatpush.msra.mxu0 %v427
    %1928 = vmatpush.msra.mxu0 %v423
    %1929 = vmatpush.msra.mxu0 %v419
    %1930 = vmatpush.msra.mxu0 %v415
    %1931 = vmatpush.msra.mxu0 %v411
    %1932 = vmatpush.msra.mxu0 %v407
    %1933 = vmatpush.msra.mxu0 %v403
    %1934 = vmatpush.msra.mxu0 %v399
    %1935 = vmatpush.msra.mxu0 %v395
    %1936 = vmatpush.msra.mxu0 %v391
    %1937 = vmatpush.msra.mxu0 %v387
    %1938 = vmatpush.msra.mxu0 %v383
    %1939 = vmatpush.msra.mxu0 %v379
    %1940 = vmatpush.msra.mxu0 %v375
    %1941 = vmatmul.f32.gmra.mxu0 %v1844
    %v1942 = vpop.f32.mrf.mxu0
    %v1943 = vadd.f32 %v675, %v1942
    %1944 = vdwg.mxu0
    %1945 = vmatpush.msra.mxu0 %v499
    %1946 = vmatpush.msra.mxu0 %v495
    %1947 = vmatpush.msra.mxu0 %v491
    %1948 = vmatpush.msra.mxu0 %v487
    %1949 = vmatpush.msra.mxu0 %v483
    %1950 = vmatpush.msra.mxu0 %v479
    %1951 = vmatpush.msra.mxu0 %v475
    %1952 = vmatpush.msra.mxu0 %v471
    %1953 = vmatpush.msra.mxu0 %v467
    %1954 = vmatpush.msra.mxu0 %v463
    %1955 = vmatpush.msra.mxu0 %v459
    %1956 = vmatpush.msra.mxu0 %v455
    %1957 = vmatpush.msra.mxu0 %v451
    %1958 = vmatpush.msra.mxu0 %v447
    %1959 = vmatpush.msra.mxu0 %v443
    %1960 = vmatpush.msra.mxu0 %v439
    %1961 = vmatmul.f32.gmra.mxu0 %v1679
    %v1962 = vpop.f32.mrf.mxu0
    %v1963 = vadd.f32 %v1943, %v1962
    %1964 = vdwg.mxu0
    %1965 = vmatpush.msra.mxu0 %v436
    %1966 = vmatpush.msra.mxu0 %v432
    %1967 = vmatpush.msra.mxu0 %v428
    %1968 = vmatpush.msra.mxu0 %v424
    %1969 = vmatpush.msra.mxu0 %v420
    %1970 = vmatpush.msra.mxu0 %v416
    %1971 = vmatpush.msra.mxu0 %v412
    %1972 = vmatpush.msra.mxu0 %v408
    %1973 = vmatpush.msra.mxu0 %v404
    %1974 = vmatpush.msra.mxu0 %v400
    %1975 = vmatpush.msra.mxu0 %v396
    %1976 = vmatpush.msra.mxu0 %v392
    %1977 = vmatpush.msra.mxu0 %v388
    %1978 = vmatpush.msra.mxu0 %v384
    %1979 = vmatpush.msra.mxu0 %v380
    %1980 = vmatpush.msra.mxu0 %v376
    %1981 = vmatmul.f32.gmra.mxu0 %v1844
    %v1982 = vpop.f32.mrf.mxu0
    %v1983 = vadd.f32 %v676, %v1982
    %1984 = vdwg.mxu0
    %1985 = vmatpush.msra.mxu0 %v500
    %1986 = vmatpush.msra.mxu0 %v496
    %1987 = vmatpush.msra.mxu0 %v492
    %1988 = vmatpush.msra.mxu0 %v488
    %1989 = vmatpush.msra.mxu0 %v484
    %1990 = vmatpush.msra.mxu0 %v480
    %1991 = vmatpush.msra.mxu0 %v476
    %1992 = vmatpush.msra.mxu0 %v472
    %1993 = vmatpush.msra.mxu0 %v468
    %1994 = vmatpush.msra.mxu0 %v464
    %1995 = vmatpush.msra.mxu0 %v460
    %1996 = vmatpush.msra.mxu0 %v456
    %1997 = vmatpush.msra.mxu0 %v452
    %1998 = vmatpush.msra.mxu0 %v448
    %1999 = vmatpush.msra.mxu0 %v444
    %2000 = vmatpush.msra.mxu0 %v440
    %2001 = vmatmul.f32.gmra.mxu0 %v1679
    %v2002 = vpop.f32.mrf.mxu0
    %v2003 = vadd.f32 %v1983, %v2002
    %2004 = vdwg.mxu0
    %v2005 = vxor.u32 %v1883, 2147483648
    %v2006 = vmul.f32 %v2005, 1.442695
    %v2007 = vpow.pop %v2006
    %v2008 = vadd.f32 %v2007, 1.0
    %v2009 = vrcp.pop %v2008
    %v2010 = vmul.f32 %v2008, %v2009
    %v2011 = vsub.f32 1.0, %v2010
    %v2012 = vmul.f32 %v2009, %v2011
    %v2013 = vadd.f32 %v2009, %v2012
    %vm2014 = vweird.f32 %v2008
    %vm2015 = vweird.f32 %v2009
    %vm2016 = vmor %vm2014, %vm2015
    %v2017 = vsel %vm2016, %v2009, %v2013
    %v2018 = vand.u32 2147483647, %v2008
    %vm2019 = vcmp.eq.f32.partialorder %v2018, 8.507059e+37
    %v2020 = vand.u32 %v2008, 2147483648
    %v2021 = vor.u32 1.1754944e-38, %v2020
    %v2022 = vsel %vm2019, %v2021, %v2017
    %v2023 = vmul.f32 1.0, %v2022
    %v2024 = vxor.u32 %v1923, 2147483648
    %v2025 = vmul.f32 %v2024, 1.442695
    %v2026 = vpow.pop %v2025
    %v2027 = vadd.f32 %v2026, 1.0
    %v2028 = vrcp.pop %v2027
    %v2029 = vmul.f32 %v2027, %v2028
    %v2030 = vsub.f32 1.0, %v2029
    %v2031 = vmul.f32 %v2028, %v2030
    %v2032 = vadd.f32 %v2028, %v2031
    %vm2033 = vweird.f32 %v2027
    %vm2034 = vweird.f32 %v2028
    %vm2035 = vmor %vm2033, %vm2034
    %v2036 = vsel %vm2035, %v2028, %v2032
    %v2037 = vand.u32 2147483647, %v2027
    %vm2038 = vcmp.eq.f32.partialorder %v2037, 8.507059e+37
    %v2039 = vand.u32 %v2027, 2147483648
    %v2040 = vor.u32 1.1754944e-38, %v2039
    %v2041 = vsel %vm2038, %v2040, %v2036
    %v2042 = vmul.f32 1.0, %v2041
    %v2043 = vtanh.pop %v1963
    %v2044 = vxor.u32 %v2003, 2147483648
    %v2045 = vmul.f32 %v2044, 1.442695
    %v2046 = vpow.pop %v2045
    %v2047 = vadd.f32 %v2046, 1.0
    %v2048 = vrcp.pop %v2047
    %v2049 = vmul.f32 %v2047, %v2048
    %v2050 = vsub.f32 1.0, %v2049
    %v2051 = vmul.f32 %v2048, %v2050
    %v2052 = vadd.f32 %v2048, %v2051
    %vm2053 = vweird.f32 %v2047
    %vm2054 = vweird.f32 %v2048
    %vm2055 = vmor %vm2053, %vm2054
    %v2056 = vsel %vm2055, %v2048, %v2052
    %v2057 = vand.u32 2147483647, %v2047
    %vm2058 = vcmp.eq.f32.partialorder %v2057, 8.507059e+37
    %v2059 = vand.u32 %v2047, 2147483648
    %v2060 = vor.u32 1.1754944e-38, %v2059
    %v2061 = vsel %vm2058, %v2060, %v2056
    %v2062 = vmul.f32 1.0, %v2061
    %v2063 = vmul.f32 %v2042, %v1677
    %v2064 = vmul.f32 %v2023, %v2043
    %v2065 = vadd.f32 %v2063, %v2064
    %v2066 = vtanh.pop %v2065
    %v2067 = vmul.f32 %v2062, %v2066
    %2068 = vst [vmem:[#allocation3 + $0x3] sm:$0x1] %v2067
    %s2069 = scalar_lea.vmem [#allocation2], 4
    %v2070 = vld [vmem:[%s2069] ss:$8 sm:$0xf]
    %2071 = vmatpush.msra.mxu0 %v369
    %2072 = vmatpush.msra.mxu0 %v365
    %2073 = vmatpush.msra.mxu0 %v361
    %2074 = vmatpush.msra.mxu0 %v357
    %2075 = vmatpush.msra.mxu0 %v353
    %2076 = vmatpush.msra.mxu0 %v349
    %2077 = vmatpush.msra.mxu0 %v345
    %2078 = vmatpush.msra.mxu0 %v341
    %2079 = vmatpush.msra.mxu0 %v337
    %2080 = vmatpush.msra.mxu0 %v333
    %2081 = vmatpush.msra.mxu0 %v329
    %2082 = vmatpush.msra.mxu0 %v325
    %2083 = vmatpush.msra.mxu0 %v321
    %2084 = vmatpush.msra.mxu0 %v317
    %2085 = vmatpush.msra.mxu0 %v313
    %2086 = vmatpush.msra.mxu0 %v309
    %2087 = vmatmul.f32.gmra.mxu0 %v1844
    %v2088 = vpop.f32.mrf.mxu0
    %v2089 = vadd.f32 0.0, %v2088
    %2090 = vdwg.mxu0
    %2091 = vmatpush.msra.mxu0 %v370
    %2092 = vmatpush.msra.mxu0 %v366
    %2093 = vmatpush.msra.mxu0 %v362
    %2094 = vmatpush.msra.mxu0 %v358
    %2095 = vmatpush.msra.mxu0 %v354
    %2096 = vmatpush.msra.mxu0 %v350
    %2097 = vmatpush.msra.mxu0 %v346
    %2098 = vmatpush.msra.mxu0 %v342
    %2099 = vmatpush.msra.mxu0 %v338
    %2100 = vmatpush.msra.mxu0 %v334
    %2101 = vmatpush.msra.mxu0 %v330
    %2102 = vmatpush.msra.mxu0 %v326
    %2103 = vmatpush.msra.mxu0 %v322
    %2104 = vmatpush.msra.mxu0 %v318
    %2105 = vmatpush.msra.mxu0 %v314
    %2106 = vmatpush.msra.mxu0 %v310
    %2107 = vmatmul.f32.gmra.mxu0 %v1844
    %v2108 = vpop.f32.mrf.mxu0
    %v2109 = vadd.f32 0.0, %v2108
    %2110 = vdwg.mxu0
    %2111 = vmatpush.msra.mxu0 %v371
    %2112 = vmatpush.msra.mxu0 %v367
    %2113 = vmatpush.msra.mxu0 %v363
    %2114 = vmatpush.msra.mxu0 %v359
    %2115 = vmatpush.msra.mxu0 %v355
    %2116 = vmatpush.msra.mxu0 %v351
    %2117 = vmatpush.msra.mxu0 %v347
    %2118 = vmatpush.msra.mxu0 %v343
    %2119 = vmatpush.msra.mxu0 %v339
    %2120 = vmatpush.msra.mxu0 %v335
    %2121 = vmatpush.msra.mxu0 %v331
    %2122 = vmatpush.msra.mxu0 %v327
    %2123 = vmatpush.msra.mxu0 %v323
    %2124 = vmatpush.msra.mxu0 %v319
    %2125 = vmatpush.msra.mxu0 %v315
    %2126 = vmatpush.msra.mxu0 %v311
    %2127 = vmatmul.f32.gmra.mxu0 %v1844
    %v2128 = vpop.f32.mrf.mxu0
    %v2129 = vadd.f32 0.0, %v2128
    %2130 = vdwg.mxu0
    %2131 = vmatpush.msra.mxu0 %v372
    %2132 = vmatpush.msra.mxu0 %v368
    %2133 = vmatpush.msra.mxu0 %v364
    %2134 = vmatpush.msra.mxu0 %v360
    %2135 = vmatpush.msra.mxu0 %v356
    %2136 = vmatpush.msra.mxu0 %v352
    %2137 = vmatpush.msra.mxu0 %v348
    %2138 = vmatpush.msra.mxu0 %v344
    %2139 = vmatpush.msra.mxu0 %v340
    %2140 = vmatpush.msra.mxu0 %v336
    %2141 = vmatpush.msra.mxu0 %v332
    %2142 = vmatpush.msra.mxu0 %v328
    %2143 = vmatpush.msra.mxu0 %v324
    %2144 = vmatpush.msra.mxu0 %v320
    %2145 = vmatpush.msra.mxu0 %v316
    %2146 = vmatpush.msra.mxu0 %v312
    %2147 = vmatmul.f32.gmra.mxu0 %v1844
    %v2148 = vpop.f32.mrf.mxu0
    %v2149 = vadd.f32 0.0, %v2148
    %2150 = vdwg.mxu0
    %v2155 = vrot.slane %v2109, 7
    %v2156 = vrot.slane %v2129, 6
    %v2157 = vrot.slane %v2149, 5
    %v2158 = vsel %vm594, %v2089, %v2155
    %v2159 = vsel %vm596, %v2156, %v2157
    %v2160 = vsel %vm598, %v2158, %v2159
    %v2162 = vadd.f32 %v2070, %v2160
    %v2163 = vxor.u32 %v2162, 2147483648
    %v2164 = vmul.f32 %v2163, 1.442695
    %v2165 = vpow.pop %v2164
    %v2166 = vadd.f32 %v2165, 1.0
    %v2167 = vrcp.pop %v2166
    %v2168 = vmul.f32 %v2166, %v2167
    %v2169 = vsub.f32 1.0, %v2168
    %v2170 = vmul.f32 %v2167, %v2169
    %v2171 = vadd.f32 %v2167, %v2170
    %vm2172 = vweird.f32 %v2166
    %vm2173 = vweird.f32 %v2167
    %vm2174 = vmor %vm2172, %vm2173
    %v2175 = vsel %vm2174, %v2167, %v2171
    %v2176 = vand.u32 2147483647, %v2166
    %vm2177 = vcmp.eq.f32.partialorder %v2176, 8.507059e+37
    %v2178 = vand.u32 %v2166, 2147483648
    %v2179 = vor.u32 1.1754944e-38, %v2178
    %v2180 = vsel %vm2177, %v2179, %v2175
    %v2181 = vmul.f32 1.0, %v2180
    %v2183 = vrot.slane %v2162, 1
    %v2185 = vxor.u32 %v2183, 2147483648
    %v2186 = vmul.f32 %v2185, 1.442695
    %v2187 = vpow.pop %v2186
    %v2188 = vadd.f32 %v2187, 1.0
    %v2189 = vrcp.pop %v2188
    %v2190 = vmul.f32 %v2188, %v2189
    %v2191 = vsub.f32 1.0, %v2190
    %v2192 = vmul.f32 %v2189, %v2191
    %v2193 = vadd.f32 %v2189, %v2192
    %vm2194 = vweird.f32 %v2188
    %vm2195 = vweird.f32 %v2189
    %vm2196 = vmor %vm2194, %vm2195
    %v2197 = vsel %vm2196, %v2189, %v2193
    %v2198 = vand.u32 2147483647, %v2188
    %vm2199 = vcmp.eq.f32.partialorder %v2198, 8.507059e+37
    %v2200 = vand.u32 %v2188, 2147483648
    %v2201 = vor.u32 1.1754944e-38, %v2200
    %v2202 = vsel %vm2199, %v2201, %v2197
    %v2203 = vmul.f32 1.0, %v2202
    %v2204 = vrot.slane %v2162, 2
    %v2206 = vtanh.pop %v2204
    %v2207 = vrot.slane %v2162, 3
    %v2209 = vxor.u32 %v2207, 2147483648
    %v2210 = vmul.f32 %v2209, 1.442695
    %v2211 = vpow.pop %v2210
    %v2212 = vadd.f32 %v2211, 1.0
    %v2213 = vrcp.pop %v2212
    %v2214 = vmul.f32 %v2212, %v2213
    %v2215 = vsub.f32 1.0, %v2214
    %v2216 = vmul.f32 %v2213, %v2215
    %v2217 = vadd.f32 %v2213, %v2216
    %vm2218 = vweird.f32 %v2212
    %vm2219 = vweird.f32 %v2213
    %vm2220 = vmor %vm2218, %vm2219
    %v2221 = vsel %vm2220, %v2213, %v2217
    %v2222 = vand.u32 2147483647, %v2212
    %vm2223 = vcmp.eq.f32.partialorder %v2222, 8.507059e+37
    %v2224 = vand.u32 %v2212, 2147483648
    %v2225 = vor.u32 1.1754944e-38, %v2224
    %v2226 = vsel %vm2223, %v2225, %v2221
    %v2227 = vmul.f32 1.0, %v2226
    %v2228 = vmul.f32 %v2203, %v1842
    %v2229 = vmul.f32 %v2181, %v2206
    %v2230 = vadd.f32 %v2228, %v2229
    %v2231 = vtanh.pop %v2230
    %v2232 = vmul.f32 %v2227, %v2231
    %2233 = vmatpush.msra.mxu0 %v433
    %2234 = vmatpush.msra.mxu0 %v429
    %2235 = vmatpush.msra.mxu0 %v425
    %2236 = vmatpush.msra.mxu0 %v421
    %2237 = vmatpush.msra.mxu0 %v417
    %2238 = vmatpush.msra.mxu0 %v413
    %2239 = vmatpush.msra.mxu0 %v409
    %2240 = vmatpush.msra.mxu0 %v405
    %2241 = vmatpush.msra.mxu0 %v401
    %2242 = vmatpush.msra.mxu0 %v397
    %2243 = vmatpush.msra.mxu0 %v393
    %2244 = vmatpush.msra.mxu0 %v389
    %2245 = vmatpush.msra.mxu0 %v385
    %2246 = vmatpush.msra.mxu0 %v381
    %2247 = vmatpush.msra.mxu0 %v377
    %2248 = vmatpush.msra.mxu0 %v373
    %2249 = vmatmul.f32.gmra.mxu0 %v2232
    %v2250 = vpop.f32.mrf.mxu0
    %v2251 = vadd.f32 %v673, %v2250
    %2252 = vdwg.mxu0
    %2253 = vmatpush.msra.mxu0 %v497
    %2254 = vmatpush.msra.mxu0 %v493
    %2255 = vmatpush.msra.mxu0 %v489
    %2256 = vmatpush.msra.mxu0 %v485
    %2257 = vmatpush.msra.mxu0 %v481
    %2258 = vmatpush.msra.mxu0 %v477
    %2259 = vmatpush.msra.mxu0 %v473
    %2260 = vmatpush.msra.mxu0 %v469
    %2261 = vmatpush.msra.mxu0 %v465
    %2262 = vmatpush.msra.mxu0 %v461
    %2263 = vmatpush.msra.mxu0 %v457
    %2264 = vmatpush.msra.mxu0 %v453
    %2265 = vmatpush.msra.mxu0 %v449
    %2266 = vmatpush.msra.mxu0 %v445
    %2267 = vmatpush.msra.mxu0 %v441
    %2268 = vmatpush.msra.mxu0 %v437
    %2269 = vmatmul.f32.gmra.mxu0 %v2067
    %v2270 = vpop.f32.mrf.mxu0
    %v2271 = vadd.f32 %v2251, %v2270
    %2272 = vdwg.mxu0
    %2273 = vmatpush.msra.mxu0 %v434
    %2274 = vmatpush.msra.mxu0 %v430
    %2275 = vmatpush.msra.mxu0 %v426
    %2276 = vmatpush.msra.mxu0 %v422
    %2277 = vmatpush.msra.mxu0 %v418
    %2278 = vmatpush.msra.mxu0 %v414
    %2279 = vmatpush.msra.mxu0 %v410
    %2280 = vmatpush.msra.mxu0 %v406
    %2281 = vmatpush.msra.mxu0 %v402
    %2282 = vmatpush.msra.mxu0 %v398
    %2283 = vmatpush.msra.mxu0 %v394
    %2284 = vmatpush.msra.mxu0 %v390
    %2285 = vmatpush.msra.mxu0 %v386
    %2286 = vmatpush.msra.mxu0 %v382
    %2287 = vmatpush.msra.mxu0 %v378
    %2288 = vmatpush.msra.mxu0 %v374
    %2289 = vmatmul.f32.gmra.mxu0 %v2232
    %v2290 = vpop.f32.mrf.mxu0
    %v2291 = vadd.f32 %v674, %v2290
    %2292 = vdwg.mxu0
    %2293 = vmatpush.msra.mxu0 %v498
    %2294 = vmatpush.msra.mxu0 %v494
    %2295 = vmatpush.msra.mxu0 %v490
    %2296 = vmatpush.msra.mxu0 %v486
    %2297 = vmatpush.msra.mxu0 %v482
    %2298 = vmatpush.msra.mxu0 %v478
    %2299 = vmatpush.msra.mxu0 %v474
    %2300 = vmatpush.msra.mxu0 %v470
    %2301 = vmatpush.msra.mxu0 %v466
    %2302 = vmatpush.msra.mxu0 %v462
    %2303 = vmatpush.msra.mxu0 %v458
    %2304 = vmatpush.msra.mxu0 %v454
    %2305 = vmatpush.msra.mxu0 %v450
    %2306 = vmatpush.msra.mxu0 %v446
    %2307 = vmatpush.msra.mxu0 %v442
    %2308 = vmatpush.msra.mxu0 %v438
    %2309 = vmatmul.f32.gmra.mxu0 %v2067
    %v2310 = vpop.f32.mrf.mxu0
    %v2311 = vadd.f32 %v2291, %v2310
    %2312 = vdwg.mxu0
    %2313 = vmatpush.msra.mxu0 %v435
    %2314 = vmatpush.msra.mxu0 %v431
    %2315 = vmatpush.msra.mxu0 %v427
    %2316 = vmatpush.msra.mxu0 %v423
    %2317 = vmatpush.msra.mxu0 %v419
    %2318 = vmatpush.msra.mxu0 %v415
    %2319 = vmatpush.msra.mxu0 %v411
    %2320 = vmatpush.msra.mxu0 %v407
    %2321 = vmatpush.msra.mxu0 %v403
    %2322 = vmatpush.msra.mxu0 %v399
    %2323 = vmatpush.msra.mxu0 %v395
    %2324 = vmatpush.msra.mxu0 %v391
    %2325 = vmatpush.msra.mxu0 %v387
    %2326 = vmatpush.msra.mxu0 %v383
    %2327 = vmatpush.msra.mxu0 %v379
    %2328 = vmatpush.msra.mxu0 %v375
    %2329 = vmatmul.f32.gmra.mxu0 %v2232
    %v2330 = vpop.f32.mrf.mxu0
    %v2331 = vadd.f32 %v675, %v2330
    %2332 = vdwg.mxu0
    %2333 = vmatpush.msra.mxu0 %v499
    %2334 = vmatpush.msra.mxu0 %v495
    %2335 = vmatpush.msra.mxu0 %v491
    %2336 = vmatpush.msra.mxu0 %v487
    %2337 = vmatpush.msra.mxu0 %v483
    %2338 = vmatpush.msra.mxu0 %v479
    %2339 = vmatpush.msra.mxu0 %v475
    %2340 = vmatpush.msra.mxu0 %v471
    %2341 = vmatpush.msra.mxu0 %v467
    %2342 = vmatpush.msra.mxu0 %v463
    %2343 = vmatpush.msra.mxu0 %v459
    %2344 = vmatpush.msra.mxu0 %v455
    %2345 = vmatpush.msra.mxu0 %v451
    %2346 = vmatpush.msra.mxu0 %v447
    %2347 = vmatpush.msra.mxu0 %v443
    %2348 = vmatpush.msra.mxu0 %v439
    %2349 = vmatmul.f32.gmra.mxu0 %v2067
    %v2350 = vpop.f32.mrf.mxu0
    %v2351 = vadd.f32 %v2331, %v2350
    %2352 = vdwg.mxu0
    %2353 = vmatpush.msra.mxu0 %v436
    %2354 = vmatpush.msra.mxu0 %v432
    %2355 = vmatpush.msra.mxu0 %v428
    %2356 = vmatpush.msra.mxu0 %v424
    %2357 = vmatpush.msra.mxu0 %v420
    %2358 = vmatpush.msra.mxu0 %v416
    %2359 = vmatpush.msra.mxu0 %v412
    %2360 = vmatpush.msra.mxu0 %v408
    %2361 = vmatpush.msra.mxu0 %v404
    %2362 = vmatpush.msra.mxu0 %v400
    %2363 = vmatpush.msra.mxu0 %v396
    %2364 = vmatpush.msra.mxu0 %v392
    %2365 = vmatpush.msra.mxu0 %v388
    %2366 = vmatpush.msra.mxu0 %v384
    %2367 = vmatpush.msra.mxu0 %v380
    %2368 = vmatpush.msra.mxu0 %v376
    %2369 = vmatmul.f32.gmra.mxu0 %v2232
    %v2370 = vpop.f32.mrf.mxu0
    %v2371 = vadd.f32 %v676, %v2370
    %2372 = vdwg.mxu0
    %2373 = vmatpush.msra.mxu0 %v500
    %2374 = vmatpush.msra.mxu0 %v496
    %2375 = vmatpush.msra.mxu0 %v492
    %2376 = vmatpush.msra.mxu0 %v488
    %2377 = vmatpush.msra.mxu0 %v484
    %2378 = vmatpush.msra.mxu0 %v480
    %2379 = vmatpush.msra.mxu0 %v476
    %2380 = vmatpush.msra.mxu0 %v472
    %2381 = vmatpush.msra.mxu0 %v468
    %2382 = vmatpush.msra.mxu0 %v464
    %2383 = vmatpush.msra.mxu0 %v460
    %2384 = vmatpush.msra.mxu0 %v456
    %2385 = vmatpush.msra.mxu0 %v452
    %2386 = vmatpush.msra.mxu0 %v448
    %2387 = vmatpush.msra.mxu0 %v444
    %2388 = vmatpush.msra.mxu0 %v440
    %2389 = vmatmul.f32.gmra.mxu0 %v2067
    %v2390 = vpop.f32.mrf.mxu0
    %v2391 = vadd.f32 %v2371, %v2390
    %2392 = vdwg.mxu0
    %v2393 = vxor.u32 %v2271, 2147483648
    %v2394 = vmul.f32 %v2393, 1.442695
    %v2395 = vpow.pop %v2394
    %v2396 = vadd.f32 %v2395, 1.0
    %v2397 = vrcp.pop %v2396
    %v2398 = vmul.f32 %v2396, %v2397
    %v2399 = vsub.f32 1.0, %v2398
    %v2400 = vmul.f32 %v2397, %v2399
    %v2401 = vadd.f32 %v2397, %v2400
    %vm2402 = vweird.f32 %v2396
    %vm2403 = vweird.f32 %v2397
    %vm2404 = vmor %vm2402, %vm2403
    %v2405 = vsel %vm2404, %v2397, %v2401
    %v2406 = vand.u32 2147483647, %v2396
    %vm2407 = vcmp.eq.f32.partialorder %v2406, 8.507059e+37
    %v2408 = vand.u32 %v2396, 2147483648
    %v2409 = vor.u32 1.1754944e-38, %v2408
    %v2410 = vsel %vm2407, %v2409, %v2405
    %v2411 = vmul.f32 1.0, %v2410
    %v2412 = vxor.u32 %v2311, 2147483648
    %v2413 = vmul.f32 %v2412, 1.442695
    %v2414 = vpow.pop %v2413
    %v2415 = vadd.f32 %v2414, 1.0
    %v2416 = vrcp.pop %v2415
    %v2417 = vmul.f32 %v2415, %v2416
    %v2418 = vsub.f32 1.0, %v2417
    %v2419 = vmul.f32 %v2416, %v2418
    %v2420 = vadd.f32 %v2416, %v2419
    %vm2421 = vweird.f32 %v2415
    %vm2422 = vweird.f32 %v2416
    %vm2423 = vmor %vm2421, %vm2422
    %v2424 = vsel %vm2423, %v2416, %v2420
    %v2425 = vand.u32 2147483647, %v2415
    %vm2426 = vcmp.eq.f32.partialorder %v2425, 8.507059e+37
    %v2427 = vand.u32 %v2415, 2147483648
    %v2428 = vor.u32 1.1754944e-38, %v2427
    %v2429 = vsel %vm2426, %v2428, %v2424
    %v2430 = vmul.f32 1.0, %v2429
    %v2431 = vtanh.pop %v2351
    %v2432 = vxor.u32 %v2391, 2147483648
    %v2433 = vmul.f32 %v2432, 1.442695
    %v2434 = vpow.pop %v2433
    %v2435 = vadd.f32 %v2434, 1.0
    %v2436 = vrcp.pop %v2435
    %v2437 = vmul.f32 %v2435, %v2436
    %v2438 = vsub.f32 1.0, %v2437
    %v2439 = vmul.f32 %v2436, %v2438
    %v2440 = vadd.f32 %v2436, %v2439
    %vm2441 = vweird.f32 %v2435
    %vm2442 = vweird.f32 %v2436
    %vm2443 = vmor %vm2441, %vm2442
    %v2444 = vsel %vm2443, %v2436, %v2440
    %v2445 = vand.u32 2147483647, %v2435
    %vm2446 = vcmp.eq.f32.partialorder %v2445, 8.507059e+37
    %v2447 = vand.u32 %v2435, 2147483648
    %v2448 = vor.u32 1.1754944e-38, %v2447
    %v2449 = vsel %vm2446, %v2448, %v2444
    %v2450 = vmul.f32 1.0, %v2449
    %v2451 = vmul.f32 %v2430, %v2065
    %v2452 = vmul.f32 %v2411, %v2431
    %v2453 = vadd.f32 %v2451, %v2452
    %v2454 = vtanh.pop %v2453
    %v2455 = vmul.f32 %v2450, %v2454
    %2456 = vst [vmem:[#allocation3 + $0x4] sm:$0x1] %v2455
    %s2457 = scalar_lea.vmem [#allocation2], 5
    %v2458 = vld [vmem:[%s2457] ss:$8 sm:$0xf]
    %2459 = vmatpush.msra.mxu0 %v369
    %2460 = vmatpush.msra.mxu0 %v365
    %2461 = vmatpush.msra.mxu0 %v361
    %2462 = vmatpush.msra.mxu0 %v357
    %2463 = vmatpush.msra.mxu0 %v353
    %2464 = vmatpush.msra.mxu0 %v349
    %2465 = vmatpush.msra.mxu0 %v345
    %2466 = vmatpush.msra.mxu0 %v341
    %2467 = vmatpush.msra.mxu0 %v337
    %2468 = vmatpush.msra.mxu0 %v333
    %2469 = vmatpush.msra.mxu0 %v329
    %2470 = vmatpush.msra.mxu0 %v325
    %2471 = vmatpush.msra.mxu0 %v321
    %2472 = vmatpush.msra.mxu0 %v317
    %2473 = vmatpush.msra.mxu0 %v313
    %2474 = vmatpush.msra.mxu0 %v309
    %2475 = vmatmul.f32.gmra.mxu0 %v2232
    %v2476 = vpop.f32.mrf.mxu0
    %v2477 = vadd.f32 0.0, %v2476
    %2478 = vdwg.mxu0
    %2479 = vmatpush.msra.mxu0 %v370
    %2480 = vmatpush.msra.mxu0 %v366
    %2481 = vmatpush.msra.mxu0 %v362
    %2482 = vmatpush.msra.mxu0 %v358
    %2483 = vmatpush.msra.mxu0 %v354
    %2484 = vmatpush.msra.mxu0 %v350
    %2485 = vmatpush.msra.mxu0 %v346
    %2486 = vmatpush.msra.mxu0 %v342
    %2487 = vmatpush.msra.mxu0 %v338
    %2488 = vmatpush.msra.mxu0 %v334
    %2489 = vmatpush.msra.mxu0 %v330
    %2490 = vmatpush.msra.mxu0 %v326
    %2491 = vmatpush.msra.mxu0 %v322
    %2492 = vmatpush.msra.mxu0 %v318
    %2493 = vmatpush.msra.mxu0 %v314
    %2494 = vmatpush.msra.mxu0 %v310
    %2495 = vmatmul.f32.gmra.mxu0 %v2232
    %v2496 = vpop.f32.mrf.mxu0
    %v2497 = vadd.f32 0.0, %v2496
    %2498 = vdwg.mxu0
    %2499 = vmatpush.msra.mxu0 %v371
    %2500 = vmatpush.msra.mxu0 %v367
    %2501 = vmatpush.msra.mxu0 %v363
    %2502 = vmatpush.msra.mxu0 %v359
    %2503 = vmatpush.msra.mxu0 %v355
    %2504 = vmatpush.msra.mxu0 %v351
    %2505 = vmatpush.msra.mxu0 %v347
    %2506 = vmatpush.msra.mxu0 %v343
    %2507 = vmatpush.msra.mxu0 %v339
    %2508 = vmatpush.msra.mxu0 %v335
    %2509 = vmatpush.msra.mxu0 %v331
    %2510 = vmatpush.msra.mxu0 %v327
    %2511 = vmatpush.msra.mxu0 %v323
    %2512 = vmatpush.msra.mxu0 %v319
    %2513 = vmatpush.msra.mxu0 %v315
    %2514 = vmatpush.msra.mxu0 %v311
    %2515 = vmatmul.f32.gmra.mxu0 %v2232
    %v2516 = vpop.f32.mrf.mxu0
    %v2517 = vadd.f32 0.0, %v2516
    %2518 = vdwg.mxu0
    %2519 = vmatpush.msra.mxu0 %v372
    %2520 = vmatpush.msra.mxu0 %v368
    %2521 = vmatpush.msra.mxu0 %v364
    %2522 = vmatpush.msra.mxu0 %v360
    %2523 = vmatpush.msra.mxu0 %v356
    %2524 = vmatpush.msra.mxu0 %v352
    %2525 = vmatpush.msra.mxu0 %v348
    %2526 = vmatpush.msra.mxu0 %v344
    %2527 = vmatpush.msra.mxu0 %v340
    %2528 = vmatpush.msra.mxu0 %v336
    %2529 = vmatpush.msra.mxu0 %v332
    %2530 = vmatpush.msra.mxu0 %v328
    %2531 = vmatpush.msra.mxu0 %v324
    %2532 = vmatpush.msra.mxu0 %v320
    %2533 = vmatpush.msra.mxu0 %v316
    %2534 = vmatpush.msra.mxu0 %v312
    %2535 = vmatmul.f32.gmra.mxu0 %v2232
    %v2536 = vpop.f32.mrf.mxu0
    %v2537 = vadd.f32 0.0, %v2536
    %2538 = vdwg.mxu0
    %v2543 = vrot.slane %v2497, 7
    %v2544 = vrot.slane %v2517, 6
    %v2545 = vrot.slane %v2537, 5
    %v2546 = vsel %vm594, %v2477, %v2543
    %v2547 = vsel %vm596, %v2544, %v2545
    %v2548 = vsel %vm598, %v2546, %v2547
    %v2550 = vadd.f32 %v2458, %v2548
    %v2551 = vxor.u32 %v2550, 2147483648
    %v2552 = vmul.f32 %v2551, 1.442695
    %v2553 = vpow.pop %v2552
    %v2554 = vadd.f32 %v2553, 1.0
    %v2555 = vrcp.pop %v2554
    %v2556 = vmul.f32 %v2554, %v2555
    %v2557 = vsub.f32 1.0, %v2556
    %v2558 = vmul.f32 %v2555, %v2557
    %v2559 = vadd.f32 %v2555, %v2558
    %vm2560 = vweird.f32 %v2554
    %vm2561 = vweird.f32 %v2555
    %vm2562 = vmor %vm2560, %vm2561
    %v2563 = vsel %vm2562, %v2555, %v2559
    %v2564 = vand.u32 2147483647, %v2554
    %vm2565 = vcmp.eq.f32.partialorder %v2564, 8.507059e+37
    %v2566 = vand.u32 %v2554, 2147483648
    %v2567 = vor.u32 1.1754944e-38, %v2566
    %v2568 = vsel %vm2565, %v2567, %v2563
    %v2569 = vmul.f32 1.0, %v2568
    %v2571 = vrot.slane %v2550, 1
    %v2573 = vxor.u32 %v2571, 2147483648
    %v2574 = vmul.f32 %v2573, 1.442695
    %v2575 = vpow.pop %v2574
    %v2576 = vadd.f32 %v2575, 1.0
    %v2577 = vrcp.pop %v2576
    %v2578 = vmul.f32 %v2576, %v2577
    %v2579 = vsub.f32 1.0, %v2578
    %v2580 = vmul.f32 %v2577, %v2579
    %v2581 = vadd.f32 %v2577, %v2580
    %vm2582 = vweird.f32 %v2576
    %vm2583 = vweird.f32 %v2577
    %vm2584 = vmor %vm2582, %vm2583
    %v2585 = vsel %vm2584, %v2577, %v2581
    %v2586 = vand.u32 2147483647, %v2576
    %vm2587 = vcmp.eq.f32.partialorder %v2586, 8.507059e+37
    %v2588 = vand.u32 %v2576, 2147483648
    %v2589 = vor.u32 1.1754944e-38, %v2588
    %v2590 = vsel %vm2587, %v2589, %v2585
    %v2591 = vmul.f32 1.0, %v2590
    %v2592 = vrot.slane %v2550, 2
    %v2594 = vtanh.pop %v2592
    %v2595 = vrot.slane %v2550, 3
    %v2597 = vxor.u32 %v2595, 2147483648
    %v2598 = vmul.f32 %v2597, 1.442695
    %v2599 = vpow.pop %v2598
    %v2600 = vadd.f32 %v2599, 1.0
    %v2601 = vrcp.pop %v2600
    %v2602 = vmul.f32 %v2600, %v2601
    %v2603 = vsub.f32 1.0, %v2602
    %v2604 = vmul.f32 %v2601, %v2603
    %v2605 = vadd.f32 %v2601, %v2604
    %vm2606 = vweird.f32 %v2600
    %vm2607 = vweird.f32 %v2601
    %vm2608 = vmor %vm2606, %vm2607
    %v2609 = vsel %vm2608, %v2601, %v2605
    %v2610 = vand.u32 2147483647, %v2600
    %vm2611 = vcmp.eq.f32.partialorder %v2610, 8.507059e+37
    %v2612 = vand.u32 %v2600, 2147483648
    %v2613 = vor.u32 1.1754944e-38, %v2612
    %v2614 = vsel %vm2611, %v2613, %v2609
    %v2615 = vmul.f32 1.0, %v2614
    %v2616 = vmul.f32 %v2591, %v2230
    %v2617 = vmul.f32 %v2569, %v2594
    %v2618 = vadd.f32 %v2616, %v2617
    %v2619 = vtanh.pop %v2618
    %v2620 = vmul.f32 %v2615, %v2619
    %2621 = vmatpush.msra.mxu0 %v433
    %2622 = vmatpush.msra.mxu0 %v429
    %2623 = vmatpush.msra.mxu0 %v425
    %2624 = vmatpush.msra.mxu0 %v421
    %2625 = vmatpush.msra.mxu0 %v417
    %2626 = vmatpush.msra.mxu0 %v413
    %2627 = vmatpush.msra.mxu0 %v409
    %2628 = vmatpush.msra.mxu0 %v405
    %2629 = vmatpush.msra.mxu0 %v401
    %2630 = vmatpush.msra.mxu0 %v397
    %2631 = vmatpush.msra.mxu0 %v393
    %2632 = vmatpush.msra.mxu0 %v389
    %2633 = vmatpush.msra.mxu0 %v385
    %2634 = vmatpush.msra.mxu0 %v381
    %2635 = vmatpush.msra.mxu0 %v377
    %2636 = vmatpush.msra.mxu0 %v373
    %2637 = vmatmul.f32.gmra.mxu0 %v2620
    %v2638 = vpop.f32.mrf.mxu0
    %v2639 = vadd.f32 %v673, %v2638
    %2640 = vdwg.mxu0
    %2641 = vmatpush.msra.mxu0 %v497
    %2642 = vmatpush.msra.mxu0 %v493
    %2643 = vmatpush.msra.mxu0 %v489
    %2644 = vmatpush.msra.mxu0 %v485
    %2645 = vmatpush.msra.mxu0 %v481
    %2646 = vmatpush.msra.mxu0 %v477
    %2647 = vmatpush.msra.mxu0 %v473
    %2648 = vmatpush.msra.mxu0 %v469
    %2649 = vmatpush.msra.mxu0 %v465
    %2650 = vmatpush.msra.mxu0 %v461
    %2651 = vmatpush.msra.mxu0 %v457
    %2652 = vmatpush.msra.mxu0 %v453
    %2653 = vmatpush.msra.mxu0 %v449
    %2654 = vmatpush.msra.mxu0 %v445
    %2655 = vmatpush.msra.mxu0 %v441
    %2656 = vmatpush.msra.mxu0 %v437
    %2657 = vmatmul.f32.gmra.mxu0 %v2455
    %v2658 = vpop.f32.mrf.mxu0
    %v2659 = vadd.f32 %v2639, %v2658
    %2660 = vdwg.mxu0
    %2661 = vmatpush.msra.mxu0 %v434
    %2662 = vmatpush.msra.mxu0 %v430
    %2663 = vmatpush.msra.mxu0 %v426
    %2664 = vmatpush.msra.mxu0 %v422
    %2665 = vmatpush.msra.mxu0 %v418
    %2666 = vmatpush.msra.mxu0 %v414
    %2667 = vmatpush.msra.mxu0 %v410
    %2668 = vmatpush.msra.mxu0 %v406
    %2669 = vmatpush.msra.mxu0 %v402
    %2670 = vmatpush.msra.mxu0 %v398
    %2671 = vmatpush.msra.mxu0 %v394
    %2672 = vmatpush.msra.mxu0 %v390
    %2673 = vmatpush.msra.mxu0 %v386
    %2674 = vmatpush.msra.mxu0 %v382
    %2675 = vmatpush.msra.mxu0 %v378
    %2676 = vmatpush.msra.mxu0 %v374
    %2677 = vmatmul.f32.gmra.mxu0 %v2620
    %v2678 = vpop.f32.mrf.mxu0
    %v2679 = vadd.f32 %v674, %v2678
    %2680 = vdwg.mxu0
    %2681 = vmatpush.msra.mxu0 %v498
    %2682 = vmatpush.msra.mxu0 %v494
    %2683 = vmatpush.msra.mxu0 %v490
    %2684 = vmatpush.msra.mxu0 %v486
    %2685 = vmatpush.msra.mxu0 %v482
    %2686 = vmatpush.msra.mxu0 %v478
    %2687 = vmatpush.msra.mxu0 %v474
    %2688 = vmatpush.msra.mxu0 %v470
    %2689 = vmatpush.msra.mxu0 %v466
    %2690 = vmatpush.msra.mxu0 %v462
    %2691 = vmatpush.msra.mxu0 %v458
    %2692 = vmatpush.msra.mxu0 %v454
    %2693 = vmatpush.msra.mxu0 %v450
    %2694 = vmatpush.msra.mxu0 %v446
    %2695 = vmatpush.msra.mxu0 %v442
    %2696 = vmatpush.msra.mxu0 %v438
    %2697 = vmatmul.f32.gmra.mxu0 %v2455
    %v2698 = vpop.f32.mrf.mxu0
    %v2699 = vadd.f32 %v2679, %v2698
    %2700 = vdwg.mxu0
    %2701 = vmatpush.msra.mxu0 %v435
    %2702 = vmatpush.msra.mxu0 %v431
    %2703 = vmatpush.msra.mxu0 %v427
    %2704 = vmatpush.msra.mxu0 %v423
    %2705 = vmatpush.msra.mxu0 %v419
    %2706 = vmatpush.msra.mxu0 %v415
    %2707 = vmatpush.msra.mxu0 %v411
    %2708 = vmatpush.msra.mxu0 %v407
    %2709 = vmatpush.msra.mxu0 %v403
    %2710 = vmatpush.msra.mxu0 %v399
    %2711 = vmatpush.msra.mxu0 %v395
    %2712 = vmatpush.msra.mxu0 %v391
    %2713 = vmatpush.msra.mxu0 %v387
    %2714 = vmatpush.msra.mxu0 %v383
    %2715 = vmatpush.msra.mxu0 %v379
    %2716 = vmatpush.msra.mxu0 %v375
    %2717 = vmatmul.f32.gmra.mxu0 %v2620
    %v2718 = vpop.f32.mrf.mxu0
    %v2719 = vadd.f32 %v675, %v2718
    %2720 = vdwg.mxu0
    %2721 = vmatpush.msra.mxu0 %v499
    %2722 = vmatpush.msra.mxu0 %v495
    %2723 = vmatpush.msra.mxu0 %v491
    %2724 = vmatpush.msra.mxu0 %v487
    %2725 = vmatpush.msra.mxu0 %v483
    %2726 = vmatpush.msra.mxu0 %v479
    %2727 = vmatpush.msra.mxu0 %v475
    %2728 = vmatpush.msra.mxu0 %v471
    %2729 = vmatpush.msra.mxu0 %v467
    %2730 = vmatpush.msra.mxu0 %v463
    %2731 = vmatpush.msra.mxu0 %v459
    %2732 = vmatpush.msra.mxu0 %v455
    %2733 = vmatpush.msra.mxu0 %v451
    %2734 = vmatpush.msra.mxu0 %v447
    %2735 = vmatpush.msra.mxu0 %v443
    %2736 = vmatpush.msra.mxu0 %v439
    %2737 = vmatmul.f32.gmra.mxu0 %v2455
    %v2738 = vpop.f32.mrf.mxu0
    %v2739 = vadd.f32 %v2719, %v2738
    %2740 = vdwg.mxu0
    %2741 = vmatpush.msra.mxu0 %v436
    %2742 = vmatpush.msra.mxu0 %v432
    %2743 = vmatpush.msra.mxu0 %v428
    %2744 = vmatpush.msra.mxu0 %v424
    %2745 = vmatpush.msra.mxu0 %v420
    %2746 = vmatpush.msra.mxu0 %v416
    %2747 = vmatpush.msra.mxu0 %v412
    %2748 = vmatpush.msra.mxu0 %v408
    %2749 = vmatpush.msra.mxu0 %v404
    %2750 = vmatpush.msra.mxu0 %v400
    %2751 = vmatpush.msra.mxu0 %v396
    %2752 = vmatpush.msra.mxu0 %v392
    %2753 = vmatpush.msra.mxu0 %v388
    %2754 = vmatpush.msra.mxu0 %v384
    %2755 = vmatpush.msra.mxu0 %v380
    %2756 = vmatpush.msra.mxu0 %v376
    %2757 = vmatmul.f32.gmra.mxu0 %v2620
    %v2758 = vpop.f32.mrf.mxu0
    %v2759 = vadd.f32 %v676, %v2758
    %2760 = vdwg.mxu0
    %2761 = vmatpush.msra.mxu0 %v500
    %2762 = vmatpush.msra.mxu0 %v496
    %2763 = vmatpush.msra.mxu0 %v492
    %2764 = vmatpush.msra.mxu0 %v488
    %2765 = vmatpush.msra.mxu0 %v484
    %2766 = vmatpush.msra.mxu0 %v480
    %2767 = vmatpush.msra.mxu0 %v476
    %2768 = vmatpush.msra.mxu0 %v472
    %2769 = vmatpush.msra.mxu0 %v468
    %2770 = vmatpush.msra.mxu0 %v464
    %2771 = vmatpush.msra.mxu0 %v460
    %2772 = vmatpush.msra.mxu0 %v456
    %2773 = vmatpush.msra.mxu0 %v452
    %2774 = vmatpush.msra.mxu0 %v448
    %2775 = vmatpush.msra.mxu0 %v444
    %2776 = vmatpush.msra.mxu0 %v440
    %2777 = vmatmul.f32.gmra.mxu0 %v2455
    %v2778 = vpop.f32.mrf.mxu0
    %v2779 = vadd.f32 %v2759, %v2778
    %2780 = vdwg.mxu0
    %v2781 = vxor.u32 %v2659, 2147483648
    %v2782 = vmul.f32 %v2781, 1.442695
    %v2783 = vpow.pop %v2782
    %v2784 = vadd.f32 %v2783, 1.0
    %v2785 = vrcp.pop %v2784
    %v2786 = vmul.f32 %v2784, %v2785
    %v2787 = vsub.f32 1.0, %v2786
    %v2788 = vmul.f32 %v2785, %v2787
    %v2789 = vadd.f32 %v2785, %v2788
    %vm2790 = vweird.f32 %v2784
    %vm2791 = vweird.f32 %v2785
    %vm2792 = vmor %vm2790, %vm2791
    %v2793 = vsel %vm2792, %v2785, %v2789
    %v2794 = vand.u32 2147483647, %v2784
    %vm2795 = vcmp.eq.f32.partialorder %v2794, 8.507059e+37
    %v2796 = vand.u32 %v2784, 2147483648
    %v2797 = vor.u32 1.1754944e-38, %v2796
    %v2798 = vsel %vm2795, %v2797, %v2793
    %v2799 = vmul.f32 1.0, %v2798
    %v2800 = vxor.u32 %v2699, 2147483648
    %v2801 = vmul.f32 %v2800, 1.442695
    %v2802 = vpow.pop %v2801
    %v2803 = vadd.f32 %v2802, 1.0
    %v2804 = vrcp.pop %v2803
    %v2805 = vmul.f32 %v2803, %v2804
    %v2806 = vsub.f32 1.0, %v2805
    %v2807 = vmul.f32 %v2804, %v2806
    %v2808 = vadd.f32 %v2804, %v2807
    %vm2809 = vweird.f32 %v2803
    %vm2810 = vweird.f32 %v2804
    %vm2811 = vmor %vm2809, %vm2810
    %v2812 = vsel %vm2811, %v2804, %v2808
    %v2813 = vand.u32 2147483647, %v2803
    %vm2814 = vcmp.eq.f32.partialorder %v2813, 8.507059e+37
    %v2815 = vand.u32 %v2803, 2147483648
    %v2816 = vor.u32 1.1754944e-38, %v2815
    %v2817 = vsel %vm2814, %v2816, %v2812
    %v2818 = vmul.f32 1.0, %v2817
    %v2819 = vtanh.pop %v2739
    %v2820 = vxor.u32 %v2779, 2147483648
    %v2821 = vmul.f32 %v2820, 1.442695
    %v2822 = vpow.pop %v2821
    %v2823 = vadd.f32 %v2822, 1.0
    %v2824 = vrcp.pop %v2823
    %v2825 = vmul.f32 %v2823, %v2824
    %v2826 = vsub.f32 1.0, %v2825
    %v2827 = vmul.f32 %v2824, %v2826
    %v2828 = vadd.f32 %v2824, %v2827
    %vm2829 = vweird.f32 %v2823
    %vm2830 = vweird.f32 %v2824
    %vm2831 = vmor %vm2829, %vm2830
    %v2832 = vsel %vm2831, %v2824, %v2828
    %v2833 = vand.u32 2147483647, %v2823
    %vm2834 = vcmp.eq.f32.partialorder %v2833, 8.507059e+37
    %v2835 = vand.u32 %v2823, 2147483648
    %v2836 = vor.u32 1.1754944e-38, %v2835
    %v2837 = vsel %vm2834, %v2836, %v2832
    %v2838 = vmul.f32 1.0, %v2837
    %v2839 = vmul.f32 %v2818, %v2453
    %v2840 = vmul.f32 %v2799, %v2819
    %v2841 = vadd.f32 %v2839, %v2840
    %v2842 = vtanh.pop %v2841
    %v2843 = vmul.f32 %v2838, %v2842
    %2844 = vst [vmem:[#allocation3 + $0x5] sm:$0x1] %v2843
    %s2845 = scalar_lea.vmem [#allocation2], 6
    %v2846 = vld [vmem:[%s2845] ss:$8 sm:$0xf]
    %2847 = vmatpush.msra.mxu0 %v369
    %2848 = vmatpush.msra.mxu0 %v365
    %2849 = vmatpush.msra.mxu0 %v361
    %2850 = vmatpush.msra.mxu0 %v357
    %2851 = vmatpush.msra.mxu0 %v353
    %2852 = vmatpush.msra.mxu0 %v349
    %2853 = vmatpush.msra.mxu0 %v345
    %2854 = vmatpush.msra.mxu0 %v341
    %2855 = vmatpush.msra.mxu0 %v337
    %2856 = vmatpush.msra.mxu0 %v333
    %2857 = vmatpush.msra.mxu0 %v329
    %2858 = vmatpush.msra.mxu0 %v325
    %2859 = vmatpush.msra.mxu0 %v321
    %2860 = vmatpush.msra.mxu0 %v317
    %2861 = vmatpush.msra.mxu0 %v313
    %2862 = vmatpush.msra.mxu0 %v309
    %2863 = vmatmul.f32.gmra.mxu0 %v2620
    %v2864 = vpop.f32.mrf.mxu0
    %v2865 = vadd.f32 0.0, %v2864
    %2866 = vdwg.mxu0
    %2867 = vmatpush.msra.mxu0 %v370
    %2868 = vmatpush.msra.mxu0 %v366
    %2869 = vmatpush.msra.mxu0 %v362
    %2870 = vmatpush.msra.mxu0 %v358
    %2871 = vmatpush.msra.mxu0 %v354
    %2872 = vmatpush.msra.mxu0 %v350
    %2873 = vmatpush.msra.mxu0 %v346
    %2874 = vmatpush.msra.mxu0 %v342
    %2875 = vmatpush.msra.mxu0 %v338
    %2876 = vmatpush.msra.mxu0 %v334
    %2877 = vmatpush.msra.mxu0 %v330
    %2878 = vmatpush.msra.mxu0 %v326
    %2879 = vmatpush.msra.mxu0 %v322
    %2880 = vmatpush.msra.mxu0 %v318
    %2881 = vmatpush.msra.mxu0 %v314
    %2882 = vmatpush.msra.mxu0 %v310
    %2883 = vmatmul.f32.gmra.mxu0 %v2620
    %v2884 = vpop.f32.mrf.mxu0
    %v2885 = vadd.f32 0.0, %v2884
    %2886 = vdwg.mxu0
    %2887 = vmatpush.msra.mxu0 %v371
    %2888 = vmatpush.msra.mxu0 %v367
    %2889 = vmatpush.msra.mxu0 %v363
    %2890 = vmatpush.msra.mxu0 %v359
    %2891 = vmatpush.msra.mxu0 %v355
    %2892 = vmatpush.msra.mxu0 %v351
    %2893 = vmatpush.msra.mxu0 %v347
    %2894 = vmatpush.msra.mxu0 %v343
    %2895 = vmatpush.msra.mxu0 %v339
    %2896 = vmatpush.msra.mxu0 %v335
    %2897 = vmatpush.msra.mxu0 %v331
    %2898 = vmatpush.msra.mxu0 %v327
    %2899 = vmatpush.msra.mxu0 %v323
    %2900 = vmatpush.msra.mxu0 %v319
    %2901 = vmatpush.msra.mxu0 %v315
    %2902 = vmatpush.msra.mxu0 %v311
    %2903 = vmatmul.f32.gmra.mxu0 %v2620
    %v2904 = vpop.f32.mrf.mxu0
    %v2905 = vadd.f32 0.0, %v2904
    %2906 = vdwg.mxu0
    %2907 = vmatpush.msra.mxu0 %v372
    %2908 = vmatpush.msra.mxu0 %v368
    %2909 = vmatpush.msra.mxu0 %v364
    %2910 = vmatpush.msra.mxu0 %v360
    %2911 = vmatpush.msra.mxu0 %v356
    %2912 = vmatpush.msra.mxu0 %v352
    %2913 = vmatpush.msra.mxu0 %v348
    %2914 = vmatpush.msra.mxu0 %v344
    %2915 = vmatpush.msra.mxu0 %v340
    %2916 = vmatpush.msra.mxu0 %v336
    %2917 = vmatpush.msra.mxu0 %v332
    %2918 = vmatpush.msra.mxu0 %v328
    %2919 = vmatpush.msra.mxu0 %v324
    %2920 = vmatpush.msra.mxu0 %v320
    %2921 = vmatpush.msra.mxu0 %v316
    %2922 = vmatpush.msra.mxu0 %v312
    %2923 = vmatmul.f32.gmra.mxu0 %v2620
    %v2924 = vpop.f32.mrf.mxu0
    %v2925 = vadd.f32 0.0, %v2924
    %2926 = vdwg.mxu0
    %v2931 = vrot.slane %v2885, 7
    %v2932 = vrot.slane %v2905, 6
    %v2933 = vrot.slane %v2925, 5
    %v2934 = vsel %vm594, %v2865, %v2931
    %v2935 = vsel %vm596, %v2932, %v2933
    %v2936 = vsel %vm598, %v2934, %v2935
    %v2938 = vadd.f32 %v2846, %v2936
    %v2939 = vxor.u32 %v2938, 2147483648
    %v2940 = vmul.f32 %v2939, 1.442695
    %v2941 = vpow.pop %v2940
    %v2942 = vadd.f32 %v2941, 1.0
    %v2943 = vrcp.pop %v2942
    %v2944 = vmul.f32 %v2942, %v2943
    %v2945 = vsub.f32 1.0, %v2944
    %v2946 = vmul.f32 %v2943, %v2945
    %v2947 = vadd.f32 %v2943, %v2946
    %vm2948 = vweird.f32 %v2942
    %vm2949 = vweird.f32 %v2943
    %vm2950 = vmor %vm2948, %vm2949
    %v2951 = vsel %vm2950, %v2943, %v2947
    %v2952 = vand.u32 2147483647, %v2942
    %vm2953 = vcmp.eq.f32.partialorder %v2952, 8.507059e+37
    %v2954 = vand.u32 %v2942, 2147483648
    %v2955 = vor.u32 1.1754944e-38, %v2954
    %v2956 = vsel %vm2953, %v2955, %v2951
    %v2957 = vmul.f32 1.0, %v2956
    %v2959 = vrot.slane %v2938, 1
    %v2961 = vxor.u32 %v2959, 2147483648
    %v2962 = vmul.f32 %v2961, 1.442695
    %v2963 = vpow.pop %v2962
    %v2964 = vadd.f32 %v2963, 1.0
    %v2965 = vrcp.pop %v2964
    %v2966 = vmul.f32 %v2964, %v2965
    %v2967 = vsub.f32 1.0, %v2966
    %v2968 = vmul.f32 %v2965, %v2967
    %v2969 = vadd.f32 %v2965, %v2968
    %vm2970 = vweird.f32 %v2964
    %vm2971 = vweird.f32 %v2965
    %vm2972 = vmor %vm2970, %vm2971
    %v2973 = vsel %vm2972, %v2965, %v2969
    %v2974 = vand.u32 2147483647, %v2964
    %vm2975 = vcmp.eq.f32.partialorder %v2974, 8.507059e+37
    %v2976 = vand.u32 %v2964, 2147483648
    %v2977 = vor.u32 1.1754944e-38, %v2976
    %v2978 = vsel %vm2975, %v2977, %v2973
    %v2979 = vmul.f32 1.0, %v2978
    %v2980 = vrot.slane %v2938, 2
    %v2982 = vtanh.pop %v2980
    %v2983 = vrot.slane %v2938, 3
    %v2985 = vxor.u32 %v2983, 2147483648
    %v2986 = vmul.f32 %v2985, 1.442695
    %v2987 = vpow.pop %v2986
    %v2988 = vadd.f32 %v2987, 1.0
    %v2989 = vrcp.pop %v2988
    %v2990 = vmul.f32 %v2988, %v2989
    %v2991 = vsub.f32 1.0, %v2990
    %v2992 = vmul.f32 %v2989, %v2991
    %v2993 = vadd.f32 %v2989, %v2992
    %vm2994 = vweird.f32 %v2988
    %vm2995 = vweird.f32 %v2989
    %vm2996 = vmor %vm2994, %vm2995
    %v2997 = vsel %vm2996, %v2989, %v2993
    %v2998 = vand.u32 2147483647, %v2988
    %vm2999 = vcmp.eq.f32.partialorder %v2998, 8.507059e+37
    %v3000 = vand.u32 %v2988, 2147483648
    %v3001 = vor.u32 1.1754944e-38, %v3000
    %v3002 = vsel %vm2999, %v3001, %v2997
    %v3003 = vmul.f32 1.0, %v3002
    %v3004 = vmul.f32 %v2979, %v2618
    %v3005 = vmul.f32 %v2957, %v2982
    %v3006 = vadd.f32 %v3004, %v3005
    %v3007 = vtanh.pop %v3006
    %v3008 = vmul.f32 %v3003, %v3007
    %3009 = vmatpush.msra.mxu0 %v433
    %3010 = vmatpush.msra.mxu0 %v429
    %3011 = vmatpush.msra.mxu0 %v425
    %3012 = vmatpush.msra.mxu0 %v421
    %3013 = vmatpush.msra.mxu0 %v417
    %3014 = vmatpush.msra.mxu0 %v413
    %3015 = vmatpush.msra.mxu0 %v409
    %3016 = vmatpush.msra.mxu0 %v405
    %3017 = vmatpush.msra.mxu0 %v401
    %3018 = vmatpush.msra.mxu0 %v397
    %3019 = vmatpush.msra.mxu0 %v393
    %3020 = vmatpush.msra.mxu0 %v389
    %3021 = vmatpush.msra.mxu0 %v385
    %3022 = vmatpush.msra.mxu0 %v381
    %3023 = vmatpush.msra.mxu0 %v377
    %3024 = vmatpush.msra.mxu0 %v373
    %3025 = vmatmul.f32.gmra.mxu0 %v3008
    %v3026 = vpop.f32.mrf.mxu0
    %v3027 = vadd.f32 %v673, %v3026
    %3028 = vdwg.mxu0
    %3029 = vmatpush.msra.mxu0 %v497
    %3030 = vmatpush.msra.mxu0 %v493
    %3031 = vmatpush.msra.mxu0 %v489
    %3032 = vmatpush.msra.mxu0 %v485
    %3033 = vmatpush.msra.mxu0 %v481
    %3034 = vmatpush.msra.mxu0 %v477
    %3035 = vmatpush.msra.mxu0 %v473
    %3036 = vmatpush.msra.mxu0 %v469
    %3037 = vmatpush.msra.mxu0 %v465
    %3038 = vmatpush.msra.mxu0 %v461
    %3039 = vmatpush.msra.mxu0 %v457
    %3040 = vmatpush.msra.mxu0 %v453
    %3041 = vmatpush.msra.mxu0 %v449
    %3042 = vmatpush.msra.mxu0 %v445
    %3043 = vmatpush.msra.mxu0 %v441
    %3044 = vmatpush.msra.mxu0 %v437
    %3045 = vmatmul.f32.gmra.mxu0 %v2843
    %v3046 = vpop.f32.mrf.mxu0
    %v3047 = vadd.f32 %v3027, %v3046
    %3048 = vdwg.mxu0
    %3049 = vmatpush.msra.mxu0 %v434
    %3050 = vmatpush.msra.mxu0 %v430
    %3051 = vmatpush.msra.mxu0 %v426
    %3052 = vmatpush.msra.mxu0 %v422
    %3053 = vmatpush.msra.mxu0 %v418
    %3054 = vmatpush.msra.mxu0 %v414
    %3055 = vmatpush.msra.mxu0 %v410
    %3056 = vmatpush.msra.mxu0 %v406
    %3057 = vmatpush.msra.mxu0 %v402
    %3058 = vmatpush.msra.mxu0 %v398
    %3059 = vmatpush.msra.mxu0 %v394
    %3060 = vmatpush.msra.mxu0 %v390
    %3061 = vmatpush.msra.mxu0 %v386
    %3062 = vmatpush.msra.mxu0 %v382
    %3063 = vmatpush.msra.mxu0 %v378
    %3064 = vmatpush.msra.mxu0 %v374
    %3065 = vmatmul.f32.gmra.mxu0 %v3008
    %v3066 = vpop.f32.mrf.mxu0
    %v3067 = vadd.f32 %v674, %v3066
    %3068 = vdwg.mxu0
    %3069 = vmatpush.msra.mxu0 %v498
    %3070 = vmatpush.msra.mxu0 %v494
    %3071 = vmatpush.msra.mxu0 %v490
    %3072 = vmatpush.msra.mxu0 %v486
    %3073 = vmatpush.msra.mxu0 %v482
    %3074 = vmatpush.msra.mxu0 %v478
    %3075 = vmatpush.msra.mxu0 %v474
    %3076 = vmatpush.msra.mxu0 %v470
    %3077 = vmatpush.msra.mxu0 %v466
    %3078 = vmatpush.msra.mxu0 %v462
    %3079 = vmatpush.msra.mxu0 %v458
    %3080 = vmatpush.msra.mxu0 %v454
    %3081 = vmatpush.msra.mxu0 %v450
    %3082 = vmatpush.msra.mxu0 %v446
    %3083 = vmatpush.msra.mxu0 %v442
    %3084 = vmatpush.msra.mxu0 %v438
    %3085 = vmatmul.f32.gmra.mxu0 %v2843
    %v3086 = vpop.f32.mrf.mxu0
    %v3087 = vadd.f32 %v3067, %v3086
    %3088 = vdwg.mxu0
    %3089 = vmatpush.msra.mxu0 %v435
    %3090 = vmatpush.msra.mxu0 %v431
    %3091 = vmatpush.msra.mxu0 %v427
    %3092 = vmatpush.msra.mxu0 %v423
    %3093 = vmatpush.msra.mxu0 %v419
    %3094 = vmatpush.msra.mxu0 %v415
    %3095 = vmatpush.msra.mxu0 %v411
    %3096 = vmatpush.msra.mxu0 %v407
    %3097 = vmatpush.msra.mxu0 %v403
    %3098 = vmatpush.msra.mxu0 %v399
    %3099 = vmatpush.msra.mxu0 %v395
    %3100 = vmatpush.msra.mxu0 %v391
    %3101 = vmatpush.msra.mxu0 %v387
    %3102 = vmatpush.msra.mxu0 %v383
    %3103 = vmatpush.msra.mxu0 %v379
    %3104 = vmatpush.msra.mxu0 %v375
    %3105 = vmatmul.f32.gmra.mxu0 %v3008
    %v3106 = vpop.f32.mrf.mxu0
    %v3107 = vadd.f32 %v675, %v3106
    %3108 = vdwg.mxu0
    %3109 = vmatpush.msra.mxu0 %v499
    %3110 = vmatpush.msra.mxu0 %v495
    %3111 = vmatpush.msra.mxu0 %v491
    %3112 = vmatpush.msra.mxu0 %v487
    %3113 = vmatpush.msra.mxu0 %v483
    %3114 = vmatpush.msra.mxu0 %v479
    %3115 = vmatpush.msra.mxu0 %v475
    %3116 = vmatpush.msra.mxu0 %v471
    %3117 = vmatpush.msra.mxu0 %v467
    %3118 = vmatpush.msra.mxu0 %v463
    %3119 = vmatpush.msra.mxu0 %v459
    %3120 = vmatpush.msra.mxu0 %v455
    %3121 = vmatpush.msra.mxu0 %v451
    %3122 = vmatpush.msra.mxu0 %v447
    %3123 = vmatpush.msra.mxu0 %v443
    %3124 = vmatpush.msra.mxu0 %v439
    %3125 = vmatmul.f32.gmra.mxu0 %v2843
    %v3126 = vpop.f32.mrf.mxu0
    %v3127 = vadd.f32 %v3107, %v3126
    %3128 = vdwg.mxu0
    %3129 = vmatpush.msra.mxu0 %v436
    %3130 = vmatpush.msra.mxu0 %v432
    %3131 = vmatpush.msra.mxu0 %v428
    %3132 = vmatpush.msra.mxu0 %v424
    %3133 = vmatpush.msra.mxu0 %v420
    %3134 = vmatpush.msra.mxu0 %v416
    %3135 = vmatpush.msra.mxu0 %v412
    %3136 = vmatpush.msra.mxu0 %v408
    %3137 = vmatpush.msra.mxu0 %v404
    %3138 = vmatpush.msra.mxu0 %v400
    %3139 = vmatpush.msra.mxu0 %v396
    %3140 = vmatpush.msra.mxu0 %v392
    %3141 = vmatpush.msra.mxu0 %v388
    %3142 = vmatpush.msra.mxu0 %v384
    %3143 = vmatpush.msra.mxu0 %v380
    %3144 = vmatpush.msra.mxu0 %v376
    %3145 = vmatmul.f32.gmra.mxu0 %v3008
    %v3146 = vpop.f32.mrf.mxu0
    %v3147 = vadd.f32 %v676, %v3146
    %3148 = vdwg.mxu0
    %3149 = vmatpush.msra.mxu0 %v500
    %3150 = vmatpush.msra.mxu0 %v496
    %3151 = vmatpush.msra.mxu0 %v492
    %3152 = vmatpush.msra.mxu0 %v488
    %3153 = vmatpush.msra.mxu0 %v484
    %3154 = vmatpush.msra.mxu0 %v480
    %3155 = vmatpush.msra.mxu0 %v476
    %3156 = vmatpush.msra.mxu0 %v472
    %3157 = vmatpush.msra.mxu0 %v468
    %3158 = vmatpush.msra.mxu0 %v464
    %3159 = vmatpush.msra.mxu0 %v460
    %3160 = vmatpush.msra.mxu0 %v456
    %3161 = vmatpush.msra.mxu0 %v452
    %3162 = vmatpush.msra.mxu0 %v448
    %3163 = vmatpush.msra.mxu0 %v444
    %3164 = vmatpush.msra.mxu0 %v440
    %3165 = vmatmul.f32.gmra.mxu0 %v2843
    %v3166 = vpop.f32.mrf.mxu0
    %v3167 = vadd.f32 %v3147, %v3166
    %3168 = vdwg.mxu0
    %v3169 = vxor.u32 %v3047, 2147483648
    %v3170 = vmul.f32 %v3169, 1.442695
    %v3171 = vpow.pop %v3170
    %v3172 = vadd.f32 %v3171, 1.0
    %v3173 = vrcp.pop %v3172
    %v3174 = vmul.f32 %v3172, %v3173
    %v3175 = vsub.f32 1.0, %v3174
    %v3176 = vmul.f32 %v3173, %v3175
    %v3177 = vadd.f32 %v3173, %v3176
    %vm3178 = vweird.f32 %v3172
    %vm3179 = vweird.f32 %v3173
    %vm3180 = vmor %vm3178, %vm3179
    %v3181 = vsel %vm3180, %v3173, %v3177
    %v3182 = vand.u32 2147483647, %v3172
    %vm3183 = vcmp.eq.f32.partialorder %v3182, 8.507059e+37
    %v3184 = vand.u32 %v3172, 2147483648
    %v3185 = vor.u32 1.1754944e-38, %v3184
    %v3186 = vsel %vm3183, %v3185, %v3181
    %v3187 = vmul.f32 1.0, %v3186
    %v3188 = vxor.u32 %v3087, 2147483648
    %v3189 = vmul.f32 %v3188, 1.442695
    %v3190 = vpow.pop %v3189
    %v3191 = vadd.f32 %v3190, 1.0
    %v3192 = vrcp.pop %v3191
    %v3193 = vmul.f32 %v3191, %v3192
    %v3194 = vsub.f32 1.0, %v3193
    %v3195 = vmul.f32 %v3192, %v3194
    %v3196 = vadd.f32 %v3192, %v3195
    %vm3197 = vweird.f32 %v3191
    %vm3198 = vweird.f32 %v3192
    %vm3199 = vmor %vm3197, %vm3198
    %v3200 = vsel %vm3199, %v3192, %v3196
    %v3201 = vand.u32 2147483647, %v3191
    %vm3202 = vcmp.eq.f32.partialorder %v3201, 8.507059e+37
    %v3203 = vand.u32 %v3191, 2147483648
    %v3204 = vor.u32 1.1754944e-38, %v3203
    %v3205 = vsel %vm3202, %v3204, %v3200
    %v3206 = vmul.f32 1.0, %v3205
    %v3207 = vtanh.pop %v3127
    %v3208 = vxor.u32 %v3167, 2147483648
    %v3209 = vmul.f32 %v3208, 1.442695
    %v3210 = vpow.pop %v3209
    %v3211 = vadd.f32 %v3210, 1.0
    %v3212 = vrcp.pop %v3211
    %v3213 = vmul.f32 %v3211, %v3212
    %v3214 = vsub.f32 1.0, %v3213
    %v3215 = vmul.f32 %v3212, %v3214
    %v3216 = vadd.f32 %v3212, %v3215
    %vm3217 = vweird.f32 %v3211
    %vm3218 = vweird.f32 %v3212
    %vm3219 = vmor %vm3217, %vm3218
    %v3220 = vsel %vm3219, %v3212, %v3216
    %v3221 = vand.u32 2147483647, %v3211
    %vm3222 = vcmp.eq.f32.partialorder %v3221, 8.507059e+37
    %v3223 = vand.u32 %v3211, 2147483648
    %v3224 = vor.u32 1.1754944e-38, %v3223
    %v3225 = vsel %vm3222, %v3224, %v3220
    %v3226 = vmul.f32 1.0, %v3225
    %v3227 = vmul.f32 %v3206, %v2841
    %v3228 = vmul.f32 %v3187, %v3207
    %v3229 = vadd.f32 %v3227, %v3228
    %v3230 = vtanh.pop %v3229
    %v3231 = vmul.f32 %v3226, %v3230
    %3232 = vst [vmem:[#allocation3 + $0x6] sm:$0x1] %v3231
    %s3233 = scalar_lea.vmem [#allocation2], 7
    %v3234 = vld [vmem:[%s3233] ss:$8 sm:$0xf]
    %3235 = vmatpush.msra.mxu0 %v369
    %3236 = vmatpush.msra.mxu0 %v365
    %3237 = vmatpush.msra.mxu0 %v361
    %3238 = vmatpush.msra.mxu0 %v357
    %3239 = vmatpush.msra.mxu0 %v353
    %3240 = vmatpush.msra.mxu0 %v349
    %3241 = vmatpush.msra.mxu0 %v345
    %3242 = vmatpush.msra.mxu0 %v341
    %3243 = vmatpush.msra.mxu0 %v337
    %3244 = vmatpush.msra.mxu0 %v333
    %3245 = vmatpush.msra.mxu0 %v329
    %3246 = vmatpush.msra.mxu0 %v325
    %3247 = vmatpush.msra.mxu0 %v321
    %3248 = vmatpush.msra.mxu0 %v317
    %3249 = vmatpush.msra.mxu0 %v313
    %3250 = vmatpush.msra.mxu0 %v309
    %3251 = vmatmul.f32.gmra.mxu0 %v3008
    %v3252 = vpop.f32.mrf.mxu0
    %v3253 = vadd.f32 0.0, %v3252
    %3254 = vdwg.mxu0
    %3255 = vmatpush.msra.mxu0 %v370
    %3256 = vmatpush.msra.mxu0 %v366
    %3257 = vmatpush.msra.mxu0 %v362
    %3258 = vmatpush.msra.mxu0 %v358
    %3259 = vmatpush.msra.mxu0 %v354
    %3260 = vmatpush.msra.mxu0 %v350
    %3261 = vmatpush.msra.mxu0 %v346
    %3262 = vmatpush.msra.mxu0 %v342
    %3263 = vmatpush.msra.mxu0 %v338
    %3264 = vmatpush.msra.mxu0 %v334
    %3265 = vmatpush.msra.mxu0 %v330
    %3266 = vmatpush.msra.mxu0 %v326
    %3267 = vmatpush.msra.mxu0 %v322
    %3268 = vmatpush.msra.mxu0 %v318
    %3269 = vmatpush.msra.mxu0 %v314
    %3270 = vmatpush.msra.mxu0 %v310
    %3271 = vmatmul.f32.gmra.mxu0 %v3008
    %v3272 = vpop.f32.mrf.mxu0
    %v3273 = vadd.f32 0.0, %v3272
    %3274 = vdwg.mxu0
    %3275 = vmatpush.msra.mxu0 %v371
    %3276 = vmatpush.msra.mxu0 %v367
    %3277 = vmatpush.msra.mxu0 %v363
    %3278 = vmatpush.msra.mxu0 %v359
    %3279 = vmatpush.msra.mxu0 %v355
    %3280 = vmatpush.msra.mxu0 %v351
    %3281 = vmatpush.msra.mxu0 %v347
    %3282 = vmatpush.msra.mxu0 %v343
    %3283 = vmatpush.msra.mxu0 %v339
    %3284 = vmatpush.msra.mxu0 %v335
    %3285 = vmatpush.msra.mxu0 %v331
    %3286 = vmatpush.msra.mxu0 %v327
    %3287 = vmatpush.msra.mxu0 %v323
    %3288 = vmatpush.msra.mxu0 %v319
    %3289 = vmatpush.msra.mxu0 %v315
    %3290 = vmatpush.msra.mxu0 %v311
    %3291 = vmatmul.f32.gmra.mxu0 %v3008
    %v3292 = vpop.f32.mrf.mxu0
    %v3293 = vadd.f32 0.0, %v3292
    %3294 = vdwg.mxu0
    %3295 = vmatpush.msra.mxu0 %v372
    %3296 = vmatpush.msra.mxu0 %v368
    %3297 = vmatpush.msra.mxu0 %v364
    %3298 = vmatpush.msra.mxu0 %v360
    %3299 = vmatpush.msra.mxu0 %v356
    %3300 = vmatpush.msra.mxu0 %v352
    %3301 = vmatpush.msra.mxu0 %v348
    %3302 = vmatpush.msra.mxu0 %v344
    %3303 = vmatpush.msra.mxu0 %v340
    %3304 = vmatpush.msra.mxu0 %v336
    %3305 = vmatpush.msra.mxu0 %v332
    %3306 = vmatpush.msra.mxu0 %v328
    %3307 = vmatpush.msra.mxu0 %v324
    %3308 = vmatpush.msra.mxu0 %v320
    %3309 = vmatpush.msra.mxu0 %v316
    %3310 = vmatpush.msra.mxu0 %v312
    %3311 = vmatmul.f32.gmra.mxu0 %v3008
    %v3312 = vpop.f32.mrf.mxu0
    %v3313 = vadd.f32 0.0, %v3312
    %3314 = vdwg.mxu0
    %v3319 = vrot.slane %v3273, 7
    %v3320 = vrot.slane %v3293, 6
    %v3321 = vrot.slane %v3313, 5
    %v3322 = vsel %vm594, %v3253, %v3319
    %v3323 = vsel %vm596, %v3320, %v3321
    %v3324 = vsel %vm598, %v3322, %v3323
    %v3326 = vadd.f32 %v3234, %v3324
    %v3327 = vxor.u32 %v3326, 2147483648
    %v3328 = vmul.f32 %v3327, 1.442695
    %v3329 = vpow.pop %v3328
    %v3330 = vadd.f32 %v3329, 1.0
    %v3331 = vrcp.pop %v3330
    %v3332 = vmul.f32 %v3330, %v3331
    %v3333 = vsub.f32 1.0, %v3332
    %v3334 = vmul.f32 %v3331, %v3333
    %v3335 = vadd.f32 %v3331, %v3334
    %vm3336 = vweird.f32 %v3330
    %vm3337 = vweird.f32 %v3331
    %vm3338 = vmor %vm3336, %vm3337
    %v3339 = vsel %vm3338, %v3331, %v3335
    %v3340 = vand.u32 2147483647, %v3330
    %vm3341 = vcmp.eq.f32.partialorder %v3340, 8.507059e+37
    %v3342 = vand.u32 %v3330, 2147483648
    %v3343 = vor.u32 1.1754944e-38, %v3342
    %v3344 = vsel %vm3341, %v3343, %v3339
    %v3345 = vmul.f32 1.0, %v3344
    %v3347 = vrot.slane %v3326, 1
    %v3349 = vxor.u32 %v3347, 2147483648
    %v3350 = vmul.f32 %v3349, 1.442695
    %v3351 = vpow.pop %v3350
    %v3352 = vadd.f32 %v3351, 1.0
    %v3353 = vrcp.pop %v3352
    %v3354 = vmul.f32 %v3352, %v3353
    %v3355 = vsub.f32 1.0, %v3354
    %v3356 = vmul.f32 %v3353, %v3355
    %v3357 = vadd.f32 %v3353, %v3356
    %vm3358 = vweird.f32 %v3352
    %vm3359 = vweird.f32 %v3353
    %vm3360 = vmor %vm3358, %vm3359
    %v3361 = vsel %vm3360, %v3353, %v3357
    %v3362 = vand.u32 2147483647, %v3352
    %vm3363 = vcmp.eq.f32.partialorder %v3362, 8.507059e+37
    %v3364 = vand.u32 %v3352, 2147483648
    %v3365 = vor.u32 1.1754944e-38, %v3364
    %v3366 = vsel %vm3363, %v3365, %v3361
    %v3367 = vmul.f32 1.0, %v3366
    %v3368 = vrot.slane %v3326, 2
    %v3370 = vtanh.pop %v3368
    %v3371 = vrot.slane %v3326, 3
    %v3373 = vxor.u32 %v3371, 2147483648
    %v3374 = vmul.f32 %v3373, 1.442695
    %v3375 = vpow.pop %v3374
    %v3376 = vadd.f32 %v3375, 1.0
    %v3377 = vrcp.pop %v3376
    %v3378 = vmul.f32 %v3376, %v3377
    %v3379 = vsub.f32 1.0, %v3378
    %v3380 = vmul.f32 %v3377, %v3379
    %v3381 = vadd.f32 %v3377, %v3380
    %vm3382 = vweird.f32 %v3376
    %vm3383 = vweird.f32 %v3377
    %vm3384 = vmor %vm3382, %vm3383
    %v3385 = vsel %vm3384, %v3377, %v3381
    %v3386 = vand.u32 2147483647, %v3376
    %vm3387 = vcmp.eq.f32.partialorder %v3386, 8.507059e+37
    %v3388 = vand.u32 %v3376, 2147483648
    %v3389 = vor.u32 1.1754944e-38, %v3388
    %v3390 = vsel %vm3387, %v3389, %v3385
    %v3391 = vmul.f32 1.0, %v3390
    %v3392 = vmul.f32 %v3367, %v3006
    %v3393 = vmul.f32 %v3345, %v3370
    %v3394 = vadd.f32 %v3392, %v3393
    %v3395 = vtanh.pop %v3394
    %v3396 = vmul.f32 %v3391, %v3395
    %3397 = vmatpush.msra.mxu0 %v433
    %3398 = vmatpush.msra.mxu0 %v429
    %3399 = vmatpush.msra.mxu0 %v425
    %3400 = vmatpush.msra.mxu0 %v421
    %3401 = vmatpush.msra.mxu0 %v417
    %3402 = vmatpush.msra.mxu0 %v413
    %3403 = vmatpush.msra.mxu0 %v409
    %3404 = vmatpush.msra.mxu0 %v405
    %3405 = vmatpush.msra.mxu0 %v401
    %3406 = vmatpush.msra.mxu0 %v397
    %3407 = vmatpush.msra.mxu0 %v393
    %3408 = vmatpush.msra.mxu0 %v389
    %3409 = vmatpush.msra.mxu0 %v385
    %3410 = vmatpush.msra.mxu0 %v381
    %3411 = vmatpush.msra.mxu0 %v377
    %3412 = vmatpush.msra.mxu0 %v373
    %3413 = vmatmul.f32.gmra.mxu0 %v3396
    %v3414 = vpop.f32.mrf.mxu0
    %v3415 = vadd.f32 %v673, %v3414
    %3416 = vdwg.mxu0
    %3417 = vmatpush.msra.mxu0 %v497
    %3418 = vmatpush.msra.mxu0 %v493
    %3419 = vmatpush.msra.mxu0 %v489
    %3420 = vmatpush.msra.mxu0 %v485
    %3421 = vmatpush.msra.mxu0 %v481
    %3422 = vmatpush.msra.mxu0 %v477
    %3423 = vmatpush.msra.mxu0 %v473
    %3424 = vmatpush.msra.mxu0 %v469
    %3425 = vmatpush.msra.mxu0 %v465
    %3426 = vmatpush.msra.mxu0 %v461
    %3427 = vmatpush.msra.mxu0 %v457
    %3428 = vmatpush.msra.mxu0 %v453
    %3429 = vmatpush.msra.mxu0 %v449
    %3430 = vmatpush.msra.mxu0 %v445
    %3431 = vmatpush.msra.mxu0 %v441
    %3432 = vmatpush.msra.mxu0 %v437
    %3433 = vmatmul.f32.gmra.mxu0 %v3231
    %v3434 = vpop.f32.mrf.mxu0
    %v3435 = vadd.f32 %v3415, %v3434
    %3436 = vdwg.mxu0
    %3437 = vmatpush.msra.mxu0 %v434
    %3438 = vmatpush.msra.mxu0 %v430
    %3439 = vmatpush.msra.mxu0 %v426
    %3440 = vmatpush.msra.mxu0 %v422
    %3441 = vmatpush.msra.mxu0 %v418
    %3442 = vmatpush.msra.mxu0 %v414
    %3443 = vmatpush.msra.mxu0 %v410
    %3444 = vmatpush.msra.mxu0 %v406
    %3445 = vmatpush.msra.mxu0 %v402
    %3446 = vmatpush.msra.mxu0 %v398
    %3447 = vmatpush.msra.mxu0 %v394
    %3448 = vmatpush.msra.mxu0 %v390
    %3449 = vmatpush.msra.mxu0 %v386
    %3450 = vmatpush.msra.mxu0 %v382
    %3451 = vmatpush.msra.mxu0 %v378
    %3452 = vmatpush.msra.mxu0 %v374
    %3453 = vmatmul.f32.gmra.mxu0 %v3396
    %v3454 = vpop.f32.mrf.mxu0
    %v3455 = vadd.f32 %v674, %v3454
    %3456 = vdwg.mxu0
    %3457 = vmatpush.msra.mxu0 %v498
    %3458 = vmatpush.msra.mxu0 %v494
    %3459 = vmatpush.msra.mxu0 %v490
    %3460 = vmatpush.msra.mxu0 %v486
    %3461 = vmatpush.msra.mxu0 %v482
    %3462 = vmatpush.msra.mxu0 %v478
    %3463 = vmatpush.msra.mxu0 %v474
    %3464 = vmatpush.msra.mxu0 %v470
    %3465 = vmatpush.msra.mxu0 %v466
    %3466 = vmatpush.msra.mxu0 %v462
    %3467 = vmatpush.msra.mxu0 %v458
    %3468 = vmatpush.msra.mxu0 %v454
    %3469 = vmatpush.msra.mxu0 %v450
    %3470 = vmatpush.msra.mxu0 %v446
    %3471 = vmatpush.msra.mxu0 %v442
    %3472 = vmatpush.msra.mxu0 %v438
    %3473 = vmatmul.f32.gmra.mxu0 %v3231
    %v3474 = vpop.f32.mrf.mxu0
    %v3475 = vadd.f32 %v3455, %v3474
    %3476 = vdwg.mxu0
    %3477 = vmatpush.msra.mxu0 %v435
    %3478 = vmatpush.msra.mxu0 %v431
    %3479 = vmatpush.msra.mxu0 %v427
    %3480 = vmatpush.msra.mxu0 %v423
    %3481 = vmatpush.msra.mxu0 %v419
    %3482 = vmatpush.msra.mxu0 %v415
    %3483 = vmatpush.msra.mxu0 %v411
    %3484 = vmatpush.msra.mxu0 %v407
    %3485 = vmatpush.msra.mxu0 %v403
    %3486 = vmatpush.msra.mxu0 %v399
    %3487 = vmatpush.msra.mxu0 %v395
    %3488 = vmatpush.msra.mxu0 %v391
    %3489 = vmatpush.msra.mxu0 %v387
    %3490 = vmatpush.msra.mxu0 %v383
    %3491 = vmatpush.msra.mxu0 %v379
    %3492 = vmatpush.msra.mxu0 %v375
    %3493 = vmatmul.f32.gmra.mxu0 %v3396
    %v3494 = vpop.f32.mrf.mxu0
    %v3495 = vadd.f32 %v675, %v3494
    %3496 = vdwg.mxu0
    %3497 = vmatpush.msra.mxu0 %v499
    %3498 = vmatpush.msra.mxu0 %v495
    %3499 = vmatpush.msra.mxu0 %v491
    %3500 = vmatpush.msra.mxu0 %v487
    %3501 = vmatpush.msra.mxu0 %v483
    %3502 = vmatpush.msra.mxu0 %v479
    %3503 = vmatpush.msra.mxu0 %v475
    %3504 = vmatpush.msra.mxu0 %v471
    %3505 = vmatpush.msra.mxu0 %v467
    %3506 = vmatpush.msra.mxu0 %v463
    %3507 = vmatpush.msra.mxu0 %v459
    %3508 = vmatpush.msra.mxu0 %v455
    %3509 = vmatpush.msra.mxu0 %v451
    %3510 = vmatpush.msra.mxu0 %v447
    %3511 = vmatpush.msra.mxu0 %v443
    %3512 = vmatpush.msra.mxu0 %v439
    %3513 = vmatmul.f32.gmra.mxu0 %v3231
    %v3514 = vpop.f32.mrf.mxu0
    %v3515 = vadd.f32 %v3495, %v3514
    %3516 = vdwg.mxu0
    %3517 = vmatpush.msra.mxu0 %v436
    %3518 = vmatpush.msra.mxu0 %v432
    %3519 = vmatpush.msra.mxu0 %v428
    %3520 = vmatpush.msra.mxu0 %v424
    %3521 = vmatpush.msra.mxu0 %v420
    %3522 = vmatpush.msra.mxu0 %v416
    %3523 = vmatpush.msra.mxu0 %v412
    %3524 = vmatpush.msra.mxu0 %v408
    %3525 = vmatpush.msra.mxu0 %v404
    %3526 = vmatpush.msra.mxu0 %v400
    %3527 = vmatpush.msra.mxu0 %v396
    %3528 = vmatpush.msra.mxu0 %v392
    %3529 = vmatpush.msra.mxu0 %v388
    %3530 = vmatpush.msra.mxu0 %v384
    %3531 = vmatpush.msra.mxu0 %v380
    %3532 = vmatpush.msra.mxu0 %v376
    %3533 = vmatmul.f32.gmra.mxu0 %v3396
    %v3534 = vpop.f32.mrf.mxu0
    %v3535 = vadd.f32 %v676, %v3534
    %3536 = vdwg.mxu0
    %3537 = vmatpush.msra.mxu0 %v500
    %3538 = vmatpush.msra.mxu0 %v496
    %3539 = vmatpush.msra.mxu0 %v492
    %3540 = vmatpush.msra.mxu0 %v488
    %3541 = vmatpush.msra.mxu0 %v484
    %3542 = vmatpush.msra.mxu0 %v480
    %3543 = vmatpush.msra.mxu0 %v476
    %3544 = vmatpush.msra.mxu0 %v472
    %3545 = vmatpush.msra.mxu0 %v468
    %3546 = vmatpush.msra.mxu0 %v464
    %3547 = vmatpush.msra.mxu0 %v460
    %3548 = vmatpush.msra.mxu0 %v456
    %3549 = vmatpush.msra.mxu0 %v452
    %3550 = vmatpush.msra.mxu0 %v448
    %3551 = vmatpush.msra.mxu0 %v444
    %3552 = vmatpush.msra.mxu0 %v440
    %3553 = vmatmul.f32.gmra.mxu0 %v3231
    %v3554 = vpop.f32.mrf.mxu0
    %v3555 = vadd.f32 %v3535, %v3554
    %3556 = vdwg.mxu0
    %v3557 = vxor.u32 %v3435, 2147483648
    %v3558 = vmul.f32 %v3557, 1.442695
    %v3559 = vpow.pop %v3558
    %v3560 = vadd.f32 %v3559, 1.0
    %v3561 = vrcp.pop %v3560
    %v3562 = vmul.f32 %v3560, %v3561
    %v3563 = vsub.f32 1.0, %v3562
    %v3564 = vmul.f32 %v3561, %v3563
    %v3565 = vadd.f32 %v3561, %v3564
    %vm3566 = vweird.f32 %v3560
    %vm3567 = vweird.f32 %v3561
    %vm3568 = vmor %vm3566, %vm3567
    %v3569 = vsel %vm3568, %v3561, %v3565
    %v3570 = vand.u32 2147483647, %v3560
    %vm3571 = vcmp.eq.f32.partialorder %v3570, 8.507059e+37
    %v3572 = vand.u32 %v3560, 2147483648
    %v3573 = vor.u32 1.1754944e-38, %v3572
    %v3574 = vsel %vm3571, %v3573, %v3569
    %v3575 = vmul.f32 1.0, %v3574
    %v3576 = vxor.u32 %v3475, 2147483648
    %v3577 = vmul.f32 %v3576, 1.442695
    %v3578 = vpow.pop %v3577
    %v3579 = vadd.f32 %v3578, 1.0
    %v3580 = vrcp.pop %v3579
    %v3581 = vmul.f32 %v3579, %v3580
    %v3582 = vsub.f32 1.0, %v3581
    %v3583 = vmul.f32 %v3580, %v3582
    %v3584 = vadd.f32 %v3580, %v3583
    %vm3585 = vweird.f32 %v3579
    %vm3586 = vweird.f32 %v3580
    %vm3587 = vmor %vm3585, %vm3586
    %v3588 = vsel %vm3587, %v3580, %v3584
    %v3589 = vand.u32 2147483647, %v3579
    %vm3590 = vcmp.eq.f32.partialorder %v3589, 8.507059e+37
    %v3591 = vand.u32 %v3579, 2147483648
    %v3592 = vor.u32 1.1754944e-38, %v3591
    %v3593 = vsel %vm3590, %v3592, %v3588
    %v3594 = vmul.f32 1.0, %v3593
    %v3595 = vtanh.pop %v3515
    %v3596 = vxor.u32 %v3555, 2147483648
    %v3597 = vmul.f32 %v3596, 1.442695
    %v3598 = vpow.pop %v3597
    %v3599 = vadd.f32 %v3598, 1.0
    %v3600 = vrcp.pop %v3599
    %v3601 = vmul.f32 %v3599, %v3600
    %v3602 = vsub.f32 1.0, %v3601
    %v3603 = vmul.f32 %v3600, %v3602
    %v3604 = vadd.f32 %v3600, %v3603
    %vm3605 = vweird.f32 %v3599
    %vm3606 = vweird.f32 %v3600
    %vm3607 = vmor %vm3605, %vm3606
    %v3608 = vsel %vm3607, %v3600, %v3604
    %v3609 = vand.u32 2147483647, %v3599
    %vm3610 = vcmp.eq.f32.partialorder %v3609, 8.507059e+37
    %v3611 = vand.u32 %v3599, 2147483648
    %v3612 = vor.u32 1.1754944e-38, %v3611
    %v3613 = vsel %vm3610, %v3612, %v3608
    %v3614 = vmul.f32 1.0, %v3613
    %v3615 = vmul.f32 %v3594, %v3229
    %v3616 = vmul.f32 %v3575, %v3595
    %v3617 = vadd.f32 %v3615, %v3616
    %v3618 = vtanh.pop %v3617
    %v3619 = vmul.f32 %v3614, %v3618
    %3620 = vst [vmem:[#allocation3 + $0x7] sm:$0x1] %v3619
    %3621 = vst [vmem:[#allocation19] sm:$0x1] %v3396
    %3622 = vst [vmem:[#allocation21] sm:$0x1] %v3394
    %3623 = vst [vmem:[#allocation19 + $0x1] sm:$0x1] %v3619
    %3624 = vst [vmem:[#allocation21 + $0x1] sm:$0x1] %v3617
    %v3625 = vld [vmem:[#allocation3] sm:$0xff]
    %v3626 = vld [vmem:[#allocation16] sm:$0xff]
    %v3627 = vld [vmem:[#allocation16 + $0x8] sm:$0xff]
    %v3628 = vld [vmem:[#allocation16 + $0x10] sm:$0xff]
    %v3629 = vld [vmem:[#allocation16 + $0x18] sm:$0xff]
    %v3630 = vld [vmem:[#allocation16 + $0x20] sm:$0xff]
    %v3631 = vld [vmem:[#allocation16 + $0x28] sm:$0xff]
    %v3632 = vld [vmem:[#allocation16 + $0x30] sm:$0xff]
    %v3633 = vld [vmem:[#allocation16 + $0x38] sm:$0xff]
    %v3634 = vld [vmem:[#allocation16 + $0x40] sm:$0xff]
    %v3635 = vld [vmem:[#allocation16 + $0x48] sm:$0xff]
    %v3636 = vld [vmem:[#allocation16 + $0x50] sm:$0xff]
    %v3637 = vld [vmem:[#allocation16 + $0x58] sm:$0xff]
    %v3638 = vld [vmem:[#allocation16 + $0x60] sm:$0xff]
    %v3639 = vld [vmem:[#allocation16 + $0x68] sm:$0xff]
    %v3640 = vld [vmem:[#allocation16 + $0x70] sm:$0xff]
    %v3641 = vld [vmem:[#allocation16 + $0x78] sm:$0xff]
    %v3642 = vld [vmem:[%s9] sm:$0x1]
    %v3644 = vperm.slane %v3642, 0
    %3646 = vmatpush.msra.mxu0 %v3641
    %3647 = vmatpush.msra.mxu0 %v3640
    %3648 = vmatpush.msra.mxu0 %v3639
    %3649 = vmatpush.msra.mxu0 %v3638
    %3650 = vmatpush.msra.mxu0 %v3637
    %3651 = vmatpush.msra.mxu0 %v3636
    %3652 = vmatpush.msra.mxu0 %v3635
    %3653 = vmatpush.msra.mxu0 %v3634
    %3654 = vmatpush.msra.mxu0 %v3633
    %3655 = vmatpush.msra.mxu0 %v3632
    %3656 = vmatpush.msra.mxu0 %v3631
    %3657 = vmatpush.msra.mxu0 %v3630
    %3658 = vmatpush.msra.mxu0 %v3629
    %3659 = vmatpush.msra.mxu0 %v3628
    %3660 = vmatpush.msra.mxu0 %v3627
    %3661 = vmatpush.msra.mxu0 %v3626
    %3662 = vmatmul.f32.gmra.mxu0 %v3625
    %v3663 = vpop.f32.mrf.mxu0
    %v3664 = vadd.f32 %v3644, %v3663
    %3665 = vdwg.mxu0
    %3666 = vmax.xlane.f32.xlu0 %v3664
    %v3667 = vpop.xlane.xlu0 %3666
    %v3668 = vsub.f32 %v3664, %v3667
    %v3669 = vmul.f32 %v3668, 1.442695
    %v3670 = vpow.pop %v3669
    %3671 = vadd.xlane.f32.xlu0 %v3670
    %v3672 = vpop.xlane.xlu0 %3671
    %v3673 = vlog2.pop %v3672
    %v3674 = vmul.f32 %v3673, 0.6931472
    %v3675 = vsub.f32 %v3668, %v3674
    %3676 = vst [vmem:[#allocation18] sm:$0xff] %v3675
    // Predicated region
    $region74: #{tpu_custom_call.1} parent=1 // pred_check
      _
    $region75: #{tpu_custom_call.1} parent=1 // pred_check_branch
      %3678 = sbr.rel (0) target = $region77
    $region76: #{tpu_custom_call.1} parent=1 // pred_region
      %3680 = vsyncadd [#allocation6], 0
      %s3682 = sshll.u32 [#allocation18], 4
      %s3683 = int_to_ptr.vmem [resolvable:$true] %s3682
      %s3684 = sshll.u32 %s10, 4
      %s3685 = int_to_ptr.hbm [resolvable:$true] %s3684
      %3687 = dma.vmem_to_hbm [thread:$0]  %s3683, 128, %s3685, [#allocation6]
    $region77: #{tpu_custom_call.1} parent=1 // pred_fallthru
      _
    // Predicated region
    $region78: #{tpu_custom_call.1} parent=1 // pred_check
      _
    $region79: #{tpu_custom_call.1} parent=1 // pred_check_branch
      %3689 = sbr.rel (0) target = $region81
    $region80: #{tpu_custom_call.1} parent=1 // pred_region
      %3691 = vsyncadd [#allocation20], 0
      %s3693 = sshll.u32 [#allocation19], 4
      %s3694 = int_to_ptr.vmem [resolvable:$true] %s3693
      %s3695 = sshll.u32 %s11, 4
      %s3696 = int_to_ptr.hbm [resolvable:$true] %s3695
      %3698 = dma.vmem_to_hbm [thread:$0]  %s3694, 32, %s3696, [#allocation20]
    $region81: #{tpu_custom_call.1} parent=1 // pred_fallthru
      _
    // Predicated region
    $region82: #{tpu_custom_call.1} parent=1 // pred_check
      _
    $region83: #{tpu_custom_call.1} parent=1 // pred_check_branch
      %3700 = sbr.rel (0) target = $region85
    $region84: #{tpu_custom_call.1} parent=1 // pred_region
      %3702 = vsyncadd [#allocation20], 0
      %s3704 = sshll.u32 [#allocation21], 4
      %s3705 = int_to_ptr.vmem [resolvable:$true] %s3704
      %s3706 = sshll.u32 %s12, 4
      %s3707 = int_to_ptr.hbm [resolvable:$true] %s3706
      %3709 = dma.vmem_to_hbm [thread:$0]  %s3705, 32, %s3707, [#allocation20]
    $region85: #{tpu_custom_call.1} parent=1 // pred_fallthru
      _
    // Predicated region
    $region86: #{tpu_custom_call.1} parent=1 // pred_check
      _
    $region87: #{tpu_custom_call.1} parent=1 // pred_check_branch
      %3711 = sbr.rel (0) target = $region89
    $region88: #{tpu_custom_call.1} parent=1 // pred_region
      %3713 = dma.done [#allocation6], 128
    $region89: #{tpu_custom_call.1} parent=1 // pred_fallthru
      _
    // Predicated region
    $region90: #{tpu_custom_call.1} parent=1 // pred_check
      _
    $region91: #{tpu_custom_call.1} parent=1 // pred_check_branch
      %3715 = sbr.rel (0) target = $region93
    $region92: #{tpu_custom_call.1} parent=1 // pred_region
      %3717 = dma.done [#allocation20], 32
    $region93: #{tpu_custom_call.1} parent=1 // pred_fallthru
      _
    // Predicated region
    $region94: #{tpu_custom_call.1} parent=1 // pred_check
      _
    $region95: #{tpu_custom_call.1} parent=1 // pred_check_branch
      %3719 = sbr.rel (0) target = $region97
    $region96: #{tpu_custom_call.1} parent=1 // pred_region
      %3721 = dma.done [#allocation20], 32
    $region97: #{tpu_custom_call.1} parent=1 // pred_fallthru
      _
    %3722 = vsyncpa [#allocation5], 1
    %3723 = vsyncpa [#allocation8], 1
    %3724 = vsyncpa [#allocation11], 1
    %3725 = vsyncpa [#allocation14], 1
    %3726 = vsyncpa [#allocation17], 1
    %3727 = vsyncpa [#allocation6], 1
    %3728 = vsyncpa [#allocation20], 1

</llo_original>
